<compile_context>
chip_gen: v5e
topology: v5e:2x2
jax: 0.10.0
libtpu: 0.0.40
codegen_flags: <defaults>
</compile_context>

<pallas_src>
import functools

import jax
import jax.numpy as jnp
from jax.experimental import pallas as pl
from jax.experimental.pallas import tpu as pltpu

LANE = 128      # hidden size padded to a multiple of the 128-lane vreg width
SUBLANE = 8     # per-shard batch rows padded to a multiple of 8 sublanes (16 for bf16)


def _round_up(x, m):
    return (x + m - 1) // m * m


def _ceil_div(a, b):
    return -(-a // b)


def _pick_tc(T, tc_max=128):
    """Chunk length: whole sequence if it fits, else a chunk near tc_max that minimizes
    padded (wasted, serial) recurrence steps in the last chunk."""
    if T <= tc_max:
        return T
    best, best_waste = tc_max, (-T) % tc_max
    for cand in range(tc_max, tc_max // 2, -1):
        waste = (-T) % cand
        if waste < best_waste:
            best, best_waste = cand, waste
        if best_waste == 0:
            break
    return best


def _default_vmem_limit():
    """Per-generation VMEM budget: ~48 MiB on v7x (64 MiB physical), ~110 MiB on v5e/v6e."""
    try:
        cap = int(pltpu.get_tpu_info().vmem_capacity_bytes)
    except Exception:
        cap = 64 * 1024 * 1024
    return int(min(max(cap - 16 * 1024 * 1024, 32 * 1024 * 1024), 110 * 1024 * 1024))


# ----------------------------------------------------------------------------
# One LSTM layer, one (batch-shard, time-chunk) grid step: recurrence only.
# Gate order matches PyTorch nn.LSTM: [i, f, g, o].
# ----------------------------------------------------------------------------
def _lstm_chunk_kernel(gx_ref, whh_ref, hseq_ref, h_scr, c_scr, *, tc, bp, hp, unroll):
    # Recurrent state persists in VMEM scratch across the time-chunk axis.  Correctness
    # REQUIRES C to be the trailing, sequentially traversed ("arbitrary") grid axis with
    # the batch-shard axis first ("parallel"); do not reorder the grid.
    @pl.when(pl.program_id(1) == 0)
    def _():
        h_scr[...] = jnp.zeros(h_scr.shape, h_scr.dtype)
        c_scr[...] = jnp.zeros(c_scr.shape, c_scr.dtype)

    w_dtype = whh_ref.dtype

    def step(t, carry):
        h, c = carry
        # Alignment proof for the dynamic sublane slices on the serial path.
        row0 = pl.multiple_of(t * bp, bp)
        gates = gx_ref[pl.ds(row0, bp), :].astype(jnp.float32) + jnp.dot(
            h.astype(w_dtype), whh_ref[...], preferred_element_type=jnp.float32)
        # sigmoid(x) = 0.5*tanh(0.5*x) + 0.5 : one EUP tanh covers the contiguous (i, f)
        # block, one covers o; no logistic divide/reciprocal on the serial critical path.
        if_g = 0.5 * jnp.tanh(0.5 * gates[:, 0:2 * hp]) + 0.5
        i_g = if_g[:, :hp]
        f_g = if_g[:, hp:]
        g_g = jnp.tanh(gates[:, 2 * hp:3 * hp])
        o_g = 0.5 * jnp.tanh(0.5 * gates[:, 3 * hp:4 * hp]) + 0.5
        c = f_g * c + i_g * g_g
        h = o_g * jnp.tanh(c)
        # Direct lane-dense (bp, hp) store into the output block (hp % 128 == 0);
        # no intermediate chunk buffer / end-of-chunk copy.
        hseq_ref[pl.ds(row0, bp), :] = h.astype(hseq_ref.dtype)
        return h, c

    h, c = jax.lax.fori_loop(0, tc, step, (h_scr[...], c_scr[...]), unroll=unroll)
    h_scr[...] = h
    c_scr[...] = c


def lstm_layer_pallas(gx_ch, whh, *, tc, bp, hp, out_dtype, unroll, vmem_limit_bytes):
    """gx_ch: (S, C, tc*bp, 4*hp) precomputed gate pre-activations; returns (S, C, tc*bp, hp)."""
    S, C, R, G = gx_ch.shape
    assert G == 4 * hp and R == tc * bp
    kernel = functools.partial(_lstm_chunk_kernel, tc=tc, bp=bp, hp=hp, unroll=unroll)

    # Grid-invariant weights: single-buffer at large H to halve their VMEM footprint
    # (matters on v7x's 64 MiB); negligible at small H, so keep the default there.
    if hp >= 512:
        whh_spec = pl.BlockSpec((hp, 4 * hp), lambda s, c: (0, 0),
                                pipeline_mode=pl.Buffered(1))
    else:
        whh_spec = pl.BlockSpec((hp, 4 * hp), lambda s, c: (0, 0))

    return pl.pallas_call(
        kernel,
        out_shape=jax.ShapeDtypeStruct((S, C, R, hp), out_dtype),
        grid=(S, C),
        in_specs=[
            pl.BlockSpec((pl.Squeezed(), pl.Squeezed(), R, 4 * hp),
                         lambda s, c: (s, c, 0, 0)),
            whh_spec,
        ],
        out_specs=pl.BlockSpec((pl.Squeezed(), pl.Squeezed(), R, hp),
                               lambda s, c: (s, c, 0, 0)),
        scratch_shapes=[
            pltpu.VMEM((bp, hp), jnp.float32),   # h state (persists across time chunks)
            pltpu.VMEM((bp, hp), jnp.float32),   # c state (kept f32 even in bf16 mode)
        ],
        compiler_params=pltpu.CompilerParams(
            # batch shards are independent (2 TCs on v7x); time chunks are a recurrence.
            dimension_semantics=("parallel", "arbitrary"),
            vmem_limit_bytes=vmem_limit_bytes,
        ),
    )(gx_ch, whh)


# ----------------------------------------------------------------------------
# Parameter init (PyTorch shapes, uniform(-k, k)) and kernel-layout preparation.
# ----------------------------------------------------------------------------
def init_params(key, n_in, n_neurons, n_hidden):
    H = n_neurons
    k = 1.0 / jnp.sqrt(jnp.float32(H))
    layers = []
    for layer in range(n_hidden):
        d_in = n_in if layer == 0 else H
        key, k1, k2, k3, k4 = jax.random.split(key, 5)
        layers.append(dict(
            w_ih=jax.random.uniform(k1, (4 * H, d_in), jnp.float32, -k, k),
            w_hh=jax.random.uniform(k2, (4 * H, H), jnp.float32, -k, k),
            b_ih=jax.random.uniform(k3, (4 * H,), jnp.float32, -k, k),
            b_hh=jax.random.uniform(k4, (4 * H,), jnp.float32, -k, k),
        ))
    key, k5, k6 = jax.random.split(key, 3)
    w_lin = jax.random.uniform(k5, (1, H), jnp.float32, -k, k)
    b_lin = jax.random.uniform(k6, (1,), jnp.float32, -k, k)
    return dict(layers=layers, w_lin=w_lin, b_lin=b_lin)


def _pad_gate_cols(w, h, hp):
    """(..., 4*h) -> (..., 4*hp): zero-pad each of the 4 gate blocks to hp lanes."""
    parts = jnp.split(w, 4, axis=-1)
    pad = [(0, 0)] * (w.ndim - 1) + [(0, hp - h)]
    return jnp.concatenate([jnp.pad(p, pad) for p in parts], axis=-1)


def prepare_kernel_params(params, dtype=jnp.float32):
    """Transpose + zero-pad PyTorch-shaped params to the padded kernel layout."""
    H = params["w_lin"].shape[1]
    hp = _round_up(H, LANE)
    layers = []
    for li, L in enumerate(params["layers"]):
        wih_t = _pad_gate_cols(L["w_ih"].T, H, hp)            # (d_in, 4*hp)
        if li > 0:                                            # input features = H -> pad rows
            wih_t = jnp.pad(wih_t, ((0, hp - H), (0, 0)))
        whh_t = _pad_gate_cols(L["w_hh"].T, H, hp)
        whh_t = jnp.pad(whh_t, ((0, hp - H), (0, 0)))         # (hp, 4*hp)
        b = _pad_gate_cols((L["b_ih"] + L["b_hh"])[None, :], H, hp)
        layers.append(dict(wih=wih_t.astype(dtype),           # MXU inputs: f32 or bf16
                           whh=whh_t.astype(dtype),
                           b=b.astype(jnp.float32)))          # bias folded into f32 gx
    return dict(layers=layers,
                w_lin_t=params["w_lin"].T.astype(jnp.float32),
                b_lin=params["b_lin"].astype(jnp.float32))


# ----------------------------------------------------------------------------
# Full forward pass, matching torchpcLSTM.forward (eval semantics).
# TODO(synk): nn.LSTM inter-layer dropout (training mode only) is omitted.
# ----------------------------------------------------------------------------
def pc_lstm_forward(xb, kparams, *, n_out, tc=None, batch_shards=None,
                    dtype=jnp.float32, vmem_limit_bytes=None):
    B, T, d_in = xb.shape
    H = kparams["w_lin_t"].shape[0]
    hp = kparams["layers"][0]["whh"].shape[0]

    if tc is None:
        tc = _pick_tc(T)
    if batch_shards is None:
        # v7x megacore: use both TensorCores once each shard keeps >= SUBLANE real rows;
        # otherwise keep one shard and grow bp (fill MXU rows before adding shards).
        batch_shards = 2 if B >= 2 * SUBLANE else 1
    S = batch_shards

    # Sub-32-bit activations pack rows along sublanes: align bp to the packed native tile
    # so per-step dynamic loads/stores stay tile-aligned (8 rows for f32, 16 for bf16).
    itemsize = jnp.dtype(dtype).itemsize
    row_align = SUBLANE * max(4 // itemsize, 1)
    bp = _round_up(max(_ceil_div(B, S), 1), row_align)
    btot = S * bp
    Tp = _round_up(T, tc)
    C = Tp // tc
    R = tc * bp

    if vmem_limit_bytes is None:
        vmem_limit_bytes = _default_vmem_limit()

    # Full unroll only while the per-step working set is small; partial unroll once bp
    # grows keeps LLO scheduling visibility without vreg spills / code blow-up.
    unroll = True if bp <= 16 else 8

    prec = (jax.lax.Precision.HIGHEST if dtype == jnp.float32
            else jax.lax.Precision.DEFAULT)

    # Layer-0 input -> time-major, padded, chunked (S, C, tc*bp, d_in).
    x = jnp.transpose(xb, (1, 0, 2)).astype(dtype)            # (T, B, d_in)
    x = jnp.pad(x, ((0, Tp - T), (0, btot - B), (0, 0)))
    x = x.reshape(C, tc, S, bp, d_in)
    x = jnp.transpose(x, (2, 0, 1, 3, 4)).reshape(S, C, R, d_in)

    for L in kparams["layers"]:
        # Hoist x @ W_ih (+ bias) fully off the serial recurrence: one large, well-tiled
        # XLA matmul per layer; the Pallas kernel streams gx chunk-by-chunk so its DMA
        # hides under the previous chunk's recurrence.  gx streamed in `dtype` (bf16 in
        # the fast path) to limit HBM traffic; gate math is re-done in f32 in-kernel.
        gx = (jnp.dot(x, L["wih"], precision=prec,
                      preferred_element_type=jnp.float32) + L["b"]).astype(dtype)
        x = lstm_layer_pallas(gx, L["whh"], tc=tc, bp=bp, hp=hp,
                              out_dtype=dtype, unroll=unroll,
                              vmem_limit_bytes=vmem_limit_bytes)

    # Leave the chunked layout only for the chunk(s) overlapping the last n_out real
    # timesteps (avoids materializing/transposing the whole (Tp, btot, hp) sequence).
    c_start = max((T - n_out) // tc, 0)
    C_keep = C - c_start
    h_seq = x[:, c_start:].reshape(S, C_keep, tc, bp, hp)
    h_seq = jnp.transpose(h_seq, (1, 2, 0, 3, 4)).reshape(C_keep * tc, btot, hp)
    t_end = T - c_start * tc
    y = h_seq[t_end - n_out:t_end, :B, :H].astype(jnp.float32)   # (n_out, B, H)
    y = jnp.transpose(y, (1, 0, 2))                              # (B, n_out, H)

    # Final (H -> 1) projection: intentionally left to XLA — a 1-wide Pallas output
    # block would be a fully masked store and call overhead would dominate.
    return jnp.dot(y, kparams["w_lin_t"],
                   precision=jax.lax.Precision.HIGHEST) + kparams["b_lin"]


# ----------------------------------------------------------------------------
# Pure-JAX reference (lax.scan LSTM, f32) for correctness checking.
# ----------------------------------------------------------------------------
def reference_forward(xb, params, n_out):
    prec = jax.lax.Precision.HIGHEST
    x = jnp.transpose(xb, (1, 0, 2)).astype(jnp.float32)      # (T, B, D)
    for L in params["layers"]:
        H = L["w_hh"].shape[1]
        wih_t, whh_t = L["w_ih"].T, L["w_hh"].T
        b = (L["b_ih"] + L["b_hh"])[None, :]
        Bsz = x.shape[1]

        def step(carry, x_t, wih_t=wih_t, whh_t=whh_t, b=b, H=H):
            h, c = carry
            g = (jnp.dot(x_t, wih_t, precision=prec)
                 + jnp.dot(h, whh_t, precision=prec) + b)
            i = jax.nn.sigmoid(g[:, 0 * H:1 * H])
            f = jax.nn.sigmoid(g[:, 1 * H:2 * H])
            gg = jnp.tanh(g[:, 2 * H:3 * H])
            o = jax.nn.sigmoid(g[:, 3 * H:4 * H])
            c = f * c + i * gg
            h = o * jnp.tanh(c)
            return (h, c), h

        init = (jnp.zeros((Bsz, H), jnp.float32), jnp.zeros((Bsz, H), jnp.float32))
        _, x = jax.lax.scan(step, init, x)
    y = jnp.transpose(x, (1, 0, 2))[:, -n_out:, :]
    return jnp.dot(y, params["w_lin"].T, precision=prec) + params["b_lin"]


if __name__ == "__main__":
    # Module hyperparameters (small, consistent with the PyTorch module).
    n_in, n_out, n_hidden, n_neurons, dropout = 4, 3, 2, 32, 0.0
    B, T = 2, 8

    key = jax.random.PRNGKey(0)
    kx, kp = jax.random.split(key)
    xb = jax.random.normal(kx, (B, T, n_in), jnp.float32)
    params = init_params(kp, n_in, n_neurons, n_hidden)
    ref = reference_forward(xb, params, n_out)

    # f32 run (sigmoid via the tanh identity in-kernel -> a few ULPs vs jax.nn.sigmoid).
    kparams_f32 = prepare_kernel_params(params, dtype=jnp.float32)
    fwd_f32 = jax.jit(functools.partial(pc_lstm_forward, n_out=n_out))
    out = jax.block_until_ready(fwd_f32(xb, kparams_f32))
    assert out.shape == (B, n_out, 1)
    assert jnp.allclose(out, ref, atol=5e-5, rtol=5e-5), \
        float(jnp.max(jnp.abs(out - ref)))

    # bf16 weights/activations/gx stream (f32 gate math + cell state): v6e/v7x fast path.
    kparams_bf16 = prepare_kernel_params(params, dtype=jnp.bfloat16)
    fwd_bf16 = jax.jit(functools.partial(pc_lstm_forward, n_out=n_out,
                                         dtype=jnp.bfloat16))
    out_bf16 = jax.block_until_ready(fwd_bf16(xb, kparams_bf16))
    assert out_bf16.shape == (B, n_out, 1)
    assert jnp.allclose(out_bf16, ref, atol=1e-1, rtol=1e-1), \
        float(jnp.max(jnp.abs(out_bf16 - ref)))

    # Larger config: exercises batch sharding (S=2), bp>16 (partial unroll), multiple
    # time chunks with a padded tail, and the trailing-chunk output slicing.
    B2, T2 = 40, 20
    xb2 = jax.random.normal(jax.random.PRNGKey(1), (B2, T2, n_in), jnp.float32)
    ref2 = reference_forward(xb2, params, n_out)
    fwd2 = jax.jit(functools.partial(pc_lstm_forward, n_out=n_out, tc=8))
    out2 = jax.block_until_ready(fwd2(xb2, kparams_f32))
    assert out2.shape == (B2, n_out, 1)
    assert jnp.allclose(out2, ref2, atol=1e-4, rtol=1e-4), \
        float(jnp.max(jnp.abs(out2 - ref2)))

    print("KERNEL_OK")
</pallas_src>

<mosaic_0001>
module attributes {stable_mosaic.version = 11 : i64} {
  func.func @_lstm_chunk_kernel(%arg0: i32, %arg1: i32, %arg2: memref<1x1x64x512xf32, #tpu.memory_space<vmem>>, %arg3: memref<128x512xf32, #tpu.memory_space<vmem>>, %arg4: memref<1x1x64x128xf32, #tpu.memory_space<vmem>>, %arg5: memref<8x128xf32, #tpu.memory_space<vmem>>, %arg6: memref<8x128xf32, #tpu.memory_space<vmem>>) attributes {dimension_semantics = [#tpu.dimension_semantics<parallel>, #tpu.dimension_semantics<arbitrary>], iteration_bounds = array<i64: 1, 1>, scalar_prefetch = 0 : i64, scratch_operands = 2 : i64, tpu.core_type = #tpu.core_type<tc>, window_params = [{transform_indices = @transform_0, window_bounds = array<i64: 1, 1, 64, 512>}, {pipeline_mode = #tpu.pipeline_mode<synchronous>, transform_indices = @transform_1, window_bounds = array<i64: 128, 512>}, {transform_indices = @transform_2, window_bounds = array<i64: 1, 1, 64, 128>}]} {
    %c0_i32 = arith.constant 0 : i32
    %0 = arith.cmpi eq, %arg1, %c0_i32 : i32
    %1 = arith.extui %0 : i1 to i32
    %c0_i32_0 = arith.constant 0 : i32
    %2 = arith.cmpi ne, %1, %c0_i32_0 : i32
    scf.if %2 {
      %cst_136 = arith.constant 0.000000e+00 : f32
      %303 = vector.broadcast %cst_136 : f32 to vector<8x128xf32>
      %c0_137 = arith.constant 0 : index
      %c0_138 = arith.constant 0 : index
      %304 = vector.load %arg5[%c0_137, %c0_138] : memref<8x128xf32, #tpu.memory_space<vmem>>, vector<8x128xf32>
      tpu.vector_store %arg5[%c0_137, %c0_138], %303 {strides = array<i32>} : memref<8x128xf32, #tpu.memory_space<vmem>>, vector<8x128xf32>,
      %cst_139 = arith.constant 0.000000e+00 : f32
      %305 = vector.broadcast %cst_139 : f32 to vector<8x128xf32>
      %c0_140 = arith.constant 0 : index
      %c0_141 = arith.constant 0 : index
      %306 = vector.load %arg6[%c0_140, %c0_141] : memref<8x128xf32, #tpu.memory_space<vmem>>, vector<8x128xf32>
      tpu.vector_store %arg6[%c0_140, %c0_141], %305 {strides = array<i32>} : memref<8x128xf32, #tpu.memory_space<vmem>>, vector<8x128xf32>,
    } else {
    }
    %c0 = arith.constant 0 : index
    %c0_1 = arith.constant 0 : index
    %3 = vector.load %arg5[%c0, %c0_1] : memref<8x128xf32, #tpu.memory_space<vmem>>, vector<8x128xf32>
    %c0_2 = arith.constant 0 : index
    %c0_3 = arith.constant 0 : index
    %4 = vector.load %arg6[%c0_2, %c0_3] : memref<8x128xf32, #tpu.memory_space<vmem>>, vector<8x128xf32>
    %c0_i32_4 = arith.constant 0 : i32
    %c8_i32 = arith.constant 8 : i32
    %5 = arith.muli %c0_i32_4, %c8_i32 : i32
    %6 = tpu.assume_multiple %5, 8 : i32
    %c0_5 = arith.constant 0 : index
    %c0_6 = arith.constant 0 : index
    %7 = arith.index_cast %6 : i32 to index
    %c0_7 = arith.constant 0 : index
    %8 = vector.load %arg2[%c0_5, %c0_6, %7, %c0_7] : memref<1x1x64x512xf32, #tpu.memory_space<vmem>>, vector<1x1x8x512xf32>
    %9 = vector.shape_cast %8 : vector<1x1x8x512xf32> to vector<8x512xf32>
    %c0_8 = arith.constant 0 : index
    %c0_9 = arith.constant 0 : index
    %10 = vector.load %arg3[%c0_8, %c0_9] : memref<128x512xf32, #tpu.memory_space<vmem>>, vector<128x512xf32>
    %cst = arith.constant dense<0.000000e+00> : vector<8x512xf32>
    %11 = tpu.matmul %3, %10, %cst {dimension_numbers = #tpu.dot_dimension_numbers<[1], [0], [0], [1], [0, 0, 1, 1], [], []>} : vector<8x128xf32>, vector<128x512xf32>, vector<8x512xf32> -> vector<8x512xf32>
    %12 = arith.addf %9, %11 : vector<8x512xf32>
    %13 = vector.extract_strided_slice %12 {offsets = [0, 0], sizes = [8, 256], strides = [1, 1]} : vector<8x512xf32> to vector<8x256xf32>
    %cst_10 = arith.constant 5.000000e-01 : f32
    %14 = vector.broadcast %cst_10 : f32 to vector<8x256xf32>
    %15 = arith.mulf %14, %13 : vector<8x256xf32>
    %16 = math.tanh %15 : vector<8x256xf32>
    %cst_11 = arith.constant 5.000000e-01 : f32
    %17 = vector.broadcast %cst_11 : f32 to vector<8x256xf32>
    %18 = arith.mulf %17, %16 : vector<8x256xf32>
    %cst_12 = arith.constant 5.000000e-01 : f32
    %19 = vector.broadcast %cst_12 : f32 to vector<8x256xf32>
    %20 = arith.addf %18, %19 : vector<8x256xf32>
    %21 = vector.extract_strided_slice %20 {offsets = [0, 0], sizes = [8, 128], strides = [1, 1]} : vector<8x256xf32> to vector<8x128xf32>
    %22 = vector.extract_strided_slice %20 {offsets = [0, 128], sizes = [8, 128], strides = [1, 1]} : vector<8x256xf32> to vector<8x128xf32>
    %23 = vector.extract_strided_slice %12 {offsets = [0, 256], sizes = [8, 128], strides = [1, 1]} : vector<8x512xf32> to vector<8x128xf32>
    %24 = math.tanh %23 : vector<8x128xf32>
    %25 = vector.extract_strided_slice %12 {offsets = [0, 384], sizes = [8, 128], strides = [1, 1]} : vector<8x512xf32> to vector<8x128xf32>
    %cst_13 = arith.constant 5.000000e-01 : f32
    %26 = vector.broadcast %cst_13 : f32 to vector<8x128xf32>
    %27 = arith.mulf %26, %25 : vector<8x128xf32>
    %28 = math.tanh %27 : vector<8x128xf32>
    %cst_14 = arith.constant 5.000000e-01 : f32
    %29 = vector.broadcast %cst_14 : f32 to vector<8x128xf32>
    %30 = arith.mulf %29, %28 : vector<8x128xf32>
    %cst_15 = arith.constant 5.000000e-01 : f32
    %31 = vector.broadcast %cst_15 : f32 to vector<8x128xf32>
    %32 = arith.addf %30, %31 : vector<8x128xf32>
    %33 = arith.mulf %22, %4 : vector<8x128xf32>
    %34 = arith.mulf %21, %24 : vector<8x128xf32>
    %35 = arith.addf %33, %34 : vector<8x128xf32>
    %36 = math.tanh %35 : vector<8x128xf32>
    %37 = arith.mulf %32, %36 : vector<8x128xf32>
    %c0_16 = arith.constant 0 : index
    %c0_17 = arith.constant 0 : index
    %38 = arith.index_cast %6 : i32 to index
    %c0_18 = arith.constant 0 : index
    %39 = vector.load %arg4[%c0_16, %c0_17, %38, %c0_18] : memref<1x1x64x128xf32, #tpu.memory_space<vmem>>, vector<1x1x8x128xf32>
    %40 = vector.shape_cast %39 : vector<1x1x8x128xf32> to vector<8x128xf32>
    %41 = vector.shape_cast %37 : vector<8x128xf32> to vector<1x1x8x128xf32>
    tpu.vector_store %arg4[%c0_16, %c0_17, %38, %c0_18], %41 {strides = array<i32>} : memref<1x1x64x128xf32, #tpu.memory_space<vmem>>, vector<1x1x8x128xf32>,
    %c1_i32 = arith.constant 1 : i32
    %c8_i32_19 = arith.constant 8 : i32
    %42 = arith.muli %c1_i32, %c8_i32_19 : i32
    %43 = tpu.assume_multiple %42, 8 : i32
    %c0_20 = arith.constant 0 : index
    %c0_21 = arith.constant 0 : index
    %44 = arith.index_cast %43 : i32 to index
    %c0_22 = arith.constant 0 : index
    %45 = vector.load %arg2[%c0_20, %c0_21, %44, %c0_22] : memref<1x1x64x512xf32, #tpu.memory_space<vmem>>, vector<1x1x8x512xf32>
    %46 = vector.shape_cast %45 : vector<1x1x8x512xf32> to vector<8x512xf32>
    %c0_23 = arith.constant 0 : index
    %c0_24 = arith.constant 0 : index
    %47 = vector.load %arg3[%c0_23, %c0_24] : memref<128x512xf32, #tpu.memory_space<vmem>>, vector<128x512xf32>
    %cst_25 = arith.constant dense<0.000000e+00> : vector<8x512xf32>
    %48 = tpu.matmul %37, %47, %cst_25 {dimension_numbers = #tpu.dot_dimension_numbers<[1], [0], [0], [1], [0, 0, 1, 1], [], []>} : vector<8x128xf32>, vector<128x512xf32>, vector<8x512xf32> -> vector<8x512xf32>
    %49 = arith.addf %46, %48 : vector<8x512xf32>
    %50 = vector.extract_strided_slice %49 {offsets = [0, 0], sizes = [8, 256], strides = [1, 1]} : vector<8x512xf32> to vector<8x256xf32>
    %cst_26 = arith.constant 5.000000e-01 : f32
    %51 = vector.broadcast %cst_26 : f32 to vector<8x256xf32>
    %52 = arith.mulf %51, %50 : vector<8x256xf32>
    %53 = math.tanh %52 : vector<8x256xf32>
    %cst_27 = arith.constant 5.000000e-01 : f32
    %54 = vector.broadcast %cst_27 : f32 to vector<8x256xf32>
    %55 = arith.mulf %54, %53 : vector<8x256xf32>
    %cst_28 = arith.constant 5.000000e-01 : f32
    %56 = vector.broadcast %cst_28 : f32 to vector<8x256xf32>
    %57 = arith.addf %55, %56 : vector<8x256xf32>
    %58 = vector.extract_strided_slice %57 {offsets = [0, 0], sizes = [8, 128], strides = [1, 1]} : vector<8x256xf32> to vector<8x128xf32>
    %59 = vector.extract_strided_slice %57 {offsets = [0, 128], sizes = [8, 128], strides = [1, 1]} : vector<8x256xf32> to vector<8x128xf32>
    %60 = vector.extract_strided_slice %49 {offsets = [0, 256], sizes = [8, 128], strides = [1, 1]} : vector<8x512xf32> to vector<8x128xf32>
    %61 = math.tanh %60 : vector<8x128xf32>
    %62 = vector.extract_strided_slice %49 {offsets = [0, 384], sizes = [8, 128], strides = [1, 1]} : vector<8x512xf32> to vector<8x128xf32>
    %cst_29 = arith.constant 5.000000e-01 : f32
    %63 = vector.broadcast %cst_29 : f32 to vector<8x128xf32>
    %64 = arith.mulf %63, %62 : vector<8x128xf32>
    %65 = math.tanh %64 : vector<8x128xf32>
    %cst_30 = arith.constant 5.000000e-01 : f32
    %66 = vector.broadcast %cst_30 : f32 to vector<8x128xf32>
    %67 = arith.mulf %66, %65 : vector<8x128xf32>
    %cst_31 = arith.constant 5.000000e-01 : f32
    %68 = vector.broadcast %cst_31 : f32 to vector<8x128xf32>
    %69 = arith.addf %67, %68 : vector<8x128xf32>
    %70 = arith.mulf %59, %35 : vector<8x128xf32>
    %71 = arith.mulf %58, %61 : vector<8x128xf32>
    %72 = arith.addf %70, %71 : vector<8x128xf32>
    %73 = math.tanh %72 : vector<8x128xf32>
    %74 = arith.mulf %69, %73 : vector<8x128xf32>
    %c0_32 = arith.constant 0 : index
    %c0_33 = arith.constant 0 : index
    %75 = arith.index_cast %43 : i32 to index
    %c0_34 = arith.constant 0 : index
    %76 = vector.load %arg4[%c0_32, %c0_33, %75, %c0_34] : memref<1x1x64x128xf32, #tpu.memory_space<vmem>>, vector<1x1x8x128xf32>
    %77 = vector.shape_cast %76 : vector<1x1x8x128xf32> to vector<8x128xf32>
    %78 = vector.shape_cast %74 : vector<8x128xf32> to vector<1x1x8x128xf32>
    tpu.vector_store %arg4[%c0_32, %c0_33, %75, %c0_34], %78 {strides = array<i32>} : memref<1x1x64x128xf32, #tpu.memory_space<vmem>>, vector<1x1x8x128xf32>,
    %c2_i32 = arith.constant 2 : i32
    %c8_i32_35 = arith.constant 8 : i32
    %79 = arith.muli %c2_i32, %c8_i32_35 : i32
    %80 = tpu.assume_multiple %79, 8 : i32
    %c0_36 = arith.constant 0 : index
    %c0_37 = arith.constant 0 : index
    %81 = arith.index_cast %80 : i32 to index
    %c0_38 = arith.constant 0 : index
    %82 = vector.load %arg2[%c0_36, %c0_37, %81, %c0_38] : memref<1x1x64x512xf32, #tpu.memory_space<vmem>>, vector<1x1x8x512xf32>
    %83 = vector.shape_cast %82 : vector<1x1x8x512xf32> to vector<8x512xf32>
    %c0_39 = arith.constant 0 : index
    %c0_40 = arith.constant 0 : index
    %84 = vector.load %arg3[%c0_39, %c0_40] : memref<128x512xf32, #tpu.memory_space<vmem>>, vector<128x512xf32>
    %cst_41 = arith.constant dense<0.000000e+00> : vector<8x512xf32>
    %85 = tpu.matmul %74, %84, %cst_41 {dimension_numbers = #tpu.dot_dimension_numbers<[1], [0], [0], [1], [0, 0, 1, 1], [], []>} : vector<8x128xf32>, vector<128x512xf32>, vector<8x512xf32> -> vector<8x512xf32>
    %86 = arith.addf %83, %85 : vector<8x512xf32>
    %87 = vector.extract_strided_slice %86 {offsets = [0, 0], sizes = [8, 256], strides = [1, 1]} : vector<8x512xf32> to vector<8x256xf32>
    %cst_42 = arith.constant 5.000000e-01 : f32
    %88 = vector.broadcast %cst_42 : f32 to vector<8x256xf32>
    %89 = arith.mulf %88, %87 : vector<8x256xf32>
    %90 = math.tanh %89 : vector<8x256xf32>
    %cst_43 = arith.constant 5.000000e-01 : f32
    %91 = vector.broadcast %cst_43 : f32 to vector<8x256xf32>
    %92 = arith.mulf %91, %90 : vector<8x256xf32>
    %cst_44 = arith.constant 5.000000e-01 : f32
    %93 = vector.broadcast %cst_44 : f32 to vector<8x256xf32>
    %94 = arith.addf %92, %93 : vector<8x256xf32>
    %95 = vector.extract_strided_slice %94 {offsets = [0, 0], sizes = [8, 128], strides = [1, 1]} : vector<8x256xf32> to vector<8x128xf32>
    %96 = vector.extract_strided_slice %94 {offsets = [0, 128], sizes = [8, 128], strides = [1, 1]} : vector<8x256xf32> to vector<8x128xf32>
    %97 = vector.extract_strided_slice %86 {offsets = [0, 256], sizes = [8, 128], strides = [1, 1]} : vector<8x512xf32> to vector<8x128xf32>
    %98 = math.tanh %97 : vector<8x128xf32>
    %99 = vector.extract_strided_slice %86 {offsets = [0, 384], sizes = [8, 128], strides = [1, 1]} : vector<8x512xf32> to vector<8x128xf32>
    %cst_45 = arith.constant 5.000000e-01 : f32
    %100 = vector.broadcast %cst_45 : f32 to vector<8x128xf32>
    %101 = arith.mulf %100, %99 : vector<8x128xf32>
    %102 = math.tanh %101 : vector<8x128xf32>
    %cst_46 = arith.constant 5.000000e-01 : f32
    %103 = vector.broadcast %cst_46 : f32 to vector<8x128xf32>
    %104 = arith.mulf %103, %102 : vector<8x128xf32>
    %cst_47 = arith.constant 5.000000e-01 : f32
    %105 = vector.broadcast %cst_47 : f32 to vector<8x128xf32>
    %106 = arith.addf %104, %105 : vector<8x128xf32>
    %107 = arith.mulf %96, %72 : vector<8x128xf32>
    %108 = arith.mulf %95, %98 : vector<8x128xf32>
    %109 = arith.addf %107, %108 : vector<8x128xf32>
    %110 = math.tanh %109 : vector<8x128xf32>
    %111 = arith.mulf %106, %110 : vector<8x128xf32>
    %c0_48 = arith.constant 0 : index
    %c0_49 = arith.constant 0 : index
    %112 = arith.index_cast %80 : i32 to index
    %c0_50 = arith.constant 0 : index
    %113 = vector.load %arg4[%c0_48, %c0_49, %112, %c0_50] : memref<1x1x64x128xf32, #tpu.memory_space<vmem>>, vector<1x1x8x128xf32>
    %114 = vector.shape_cast %113 : vector<1x1x8x128xf32> to vector<8x128xf32>
    %115 = vector.shape_cast %111 : vector<8x128xf32> to vector<1x1x8x128xf32>
    tpu.vector_store %arg4[%c0_48, %c0_49, %112, %c0_50], %115 {strides = array<i32>} : memref<1x1x64x128xf32, #tpu.memory_space<vmem>>, vector<1x1x8x128xf32>,
    %c3_i32 = arith.constant 3 : i32
    %c8_i32_51 = arith.constant 8 : i32
    %116 = arith.muli %c3_i32, %c8_i32_51 : i32
    %117 = tpu.assume_multiple %116, 8 : i32
    %c0_52 = arith.constant 0 : index
    %c0_53 = arith.constant 0 : index
    %118 = arith.index_cast %117 : i32 to index
    %c0_54 = arith.constant 0 : index
    %119 = vector.load %arg2[%c0_52, %c0_53, %118, %c0_54] : memref<1x1x64x512xf32, #tpu.memory_space<vmem>>, vector<1x1x8x512xf32>
    %120 = vector.shape_cast %119 : vector<1x1x8x512xf32> to vector<8x512xf32>
    %c0_55 = arith.constant 0 : index
    %c0_56 = arith.constant 0 : index
    %121 = vector.load %arg3[%c0_55, %c0_56] : memref<128x512xf32, #tpu.memory_space<vmem>>, vector<128x512xf32>
    %cst_57 = arith.constant dense<0.000000e+00> : vector<8x512xf32>
    %122 = tpu.matmul %111, %121, %cst_57 {dimension_numbers = #tpu.dot_dimension_numbers<[1], [0], [0], [1], [0, 0, 1, 1], [], []>} : vector<8x128xf32>, vector<128x512xf32>, vector<8x512xf32> -> vector<8x512xf32>
    %123 = arith.addf %120, %122 : vector<8x512xf32>
    %124 = vector.extract_strided_slice %123 {offsets = [0, 0], sizes = [8, 256], strides = [1, 1]} : vector<8x512xf32> to vector<8x256xf32>
    %cst_58 = arith.constant 5.000000e-01 : f32
    %125 = vector.broadcast %cst_58 : f32 to vector<8x256xf32>
    %126 = arith.mulf %125, %124 : vector<8x256xf32>
    %127 = math.tanh %126 : vector<8x256xf32>
    %cst_59 = arith.constant 5.000000e-01 : f32
    %128 = vector.broadcast %cst_59 : f32 to vector<8x256xf32>
    %129 = arith.mulf %128, %127 : vector<8x256xf32>
    %cst_60 = arith.constant 5.000000e-01 : f32
    %130 = vector.broadcast %cst_60 : f32 to vector<8x256xf32>
    %131 = arith.addf %129, %130 : vector<8x256xf32>
    %132 = vector.extract_strided_slice %131 {offsets = [0, 0], sizes = [8, 128], strides = [1, 1]} : vector<8x256xf32> to vector<8x128xf32>
    %133 = vector.extract_strided_slice %131 {offsets = [0, 128], sizes = [8, 128], strides = [1, 1]} : vector<8x256xf32> to vector<8x128xf32>
    %134 = vector.extract_strided_slice %123 {offsets = [0, 256], sizes = [8, 128], strides = [1, 1]} : vector<8x512xf32> to vector<8x128xf32>
    %135 = math.tanh %134 : vector<8x128xf32>
    %136 = vector.extract_strided_slice %123 {offsets = [0, 384], sizes = [8, 128], strides = [1, 1]} : vector<8x512xf32> to vector<8x128xf32>
    %cst_61 = arith.constant 5.000000e-01 : f32
    %137 = vector.broadcast %cst_61 : f32 to vector<8x128xf32>
    %138 = arith.mulf %137, %136 : vector<8x128xf32>
    %139 = math.tanh %138 : vector<8x128xf32>
    %cst_62 = arith.constant 5.000000e-01 : f32
    %140 = vector.broadcast %cst_62 : f32 to vector<8x128xf32>
    %141 = arith.mulf %140, %139 : vector<8x128xf32>
    %cst_63 = arith.constant 5.000000e-01 : f32
    %142 = vector.broadcast %cst_63 : f32 to vector<8x128xf32>
    %143 = arith.addf %141, %142 : vector<8x128xf32>
    %144 = arith.mulf %133, %109 : vector<8x128xf32>
    %145 = arith.mulf %132, %135 : vector<8x128xf32>
    %146 = arith.addf %144, %145 : vector<8x128xf32>
    %147 = math.tanh %146 : vector<8x128xf32>
    %148 = arith.mulf %143, %147 : vector<8x128xf32>
    %c0_64 = arith.constant 0 : index
    %c0_65 = arith.constant 0 : index
    %149 = arith.index_cast %117 : i32 to index
    %c0_66 = arith.constant 0 : index
    %150 = vector.load %arg4[%c0_64, %c0_65, %149, %c0_66] : memref<1x1x64x128xf32, #tpu.memory_space<vmem>>, vector<1x1x8x128xf32>
    %151 = vector.shape_cast %150 : vector<1x1x8x128xf32> to vector<8x128xf32>
    %152 = vector.shape_cast %148 : vector<8x128xf32> to vector<1x1x8x128xf32>
    tpu.vector_store %arg4[%c0_64, %c0_65, %149, %c0_66], %152 {strides = array<i32>} : memref<1x1x64x128xf32, #tpu.memory_space<vmem>>, vector<1x1x8x128xf32>,
    %c4_i32 = arith.constant 4 : i32
    %c8_i32_67 = arith.constant 8 : i32
    %153 = arith.muli %c4_i32, %c8_i32_67 : i32
    %154 = tpu.assume_multiple %153, 8 : i32
    %c0_68 = arith.constant 0 : index
    %c0_69 = arith.constant 0 : index
    %155 = arith.index_cast %154 : i32 to index
    %c0_70 = arith.constant 0 : index
    %156 = vector.load %arg2[%c0_68, %c0_69, %155, %c0_70] : memref<1x1x64x512xf32, #tpu.memory_space<vmem>>, vector<1x1x8x512xf32>
    %157 = vector.shape_cast %156 : vector<1x1x8x512xf32> to vector<8x512xf32>
    %c0_71 = arith.constant 0 : index
    %c0_72 = arith.constant 0 : index
    %158 = vector.load %arg3[%c0_71, %c0_72] : memref<128x512xf32, #tpu.memory_space<vmem>>, vector<128x512xf32>
    %cst_73 = arith.constant dense<0.000000e+00> : vector<8x512xf32>
    %159 = tpu.matmul %148, %158, %cst_73 {dimension_numbers = #tpu.dot_dimension_numbers<[1], [0], [0], [1], [0, 0, 1, 1], [], []>} : vector<8x128xf32>, vector<128x512xf32>, vector<8x512xf32> -> vector<8x512xf32>
    %160 = arith.addf %157, %159 : vector<8x512xf32>
    %161 = vector.extract_strided_slice %160 {offsets = [0, 0], sizes = [8, 256], strides = [1, 1]} : vector<8x512xf32> to vector<8x256xf32>
    %cst_74 = arith.constant 5.000000e-01 : f32
    %162 = vector.broadcast %cst_74 : f32 to vector<8x256xf32>
    %163 = arith.mulf %162, %161 : vector<8x256xf32>
    %164 = math.tanh %163 : vector<8x256xf32>
    %cst_75 = arith.constant 5.000000e-01 : f32
    %165 = vector.broadcast %cst_75 : f32 to vector<8x256xf32>
    %166 = arith.mulf %165, %164 : vector<8x256xf32>
    %cst_76 = arith.constant 5.000000e-01 : f32
    %167 = vector.broadcast %cst_76 : f32 to vector<8x256xf32>
    %168 = arith.addf %166, %167 : vector<8x256xf32>
    %169 = vector.extract_strided_slice %168 {offsets = [0, 0], sizes = [8, 128], strides = [1, 1]} : vector<8x256xf32> to vector<8x128xf32>
    %170 = vector.extract_strided_slice %168 {offsets = [0, 128], sizes = [8, 128], strides = [1, 1]} : vector<8x256xf32> to vector<8x128xf32>
    %171 = vector.extract_strided_slice %160 {offsets = [0, 256], sizes = [8, 128], strides = [1, 1]} : vector<8x512xf32> to vector<8x128xf32>
    %172 = math.tanh %171 : vector<8x128xf32>
    %173 = vector.extract_strided_slice %160 {offsets = [0, 384], sizes = [8, 128], strides = [1, 1]} : vector<8x512xf32> to vector<8x128xf32>
    %cst_77 = arith.constant 5.000000e-01 : f32
    %174 = vector.broadcast %cst_77 : f32 to vector<8x128xf32>
    %175 = arith.mulf %174, %173 : vector<8x128xf32>
    %176 = math.tanh %175 : vector<8x128xf32>
    %cst_78 = arith.constant 5.000000e-01 : f32
    %177 = vector.broadcast %cst_78 : f32 to vector<8x128xf32>
    %178 = arith.mulf %177, %176 : vector<8x128xf32>
    %cst_79 = arith.constant 5.000000e-01 : f32
    %179 = vector.broadcast %cst_79 : f32 to vector<8x128xf32>
    %180 = arith.addf %178, %179 : vector<8x128xf32>
    %181 = arith.mulf %170, %146 : vector<8x128xf32>
    %182 = arith.mulf %169, %172 : vector<8x128xf32>
    %183 = arith.addf %181, %182 : vector<8x128xf32>
    %184 = math.tanh %183 : vector<8x128xf32>
    %185 = arith.mulf %180, %184 : vector<8x128xf32>
    %c0_80 = arith.constant 0 : index
    %c0_81 = arith.constant 0 : index
    %186 = arith.index_cast %154 : i32 to index
    %c0_82 = arith.constant 0 : index
    %187 = vector.load %arg4[%c0_80, %c0_81, %186, %c0_82] : memref<1x1x64x128xf32, #tpu.memory_space<vmem>>, vector<1x1x8x128xf32>
    %188 = vector.shape_cast %187 : vector<1x1x8x128xf32> to vector<8x128xf32>
    %189 = vector.shape_cast %185 : vector<8x128xf32> to vector<1x1x8x128xf32>
    tpu.vector_store %arg4[%c0_80, %c0_81, %186, %c0_82], %189 {strides = array<i32>} : memref<1x1x64x128xf32, #tpu.memory_space<vmem>>, vector<1x1x8x128xf32>,
    %c5_i32 = arith.constant 5 : i32
    %c8_i32_83 = arith.constant 8 : i32
    %190 = arith.muli %c5_i32, %c8_i32_83 : i32
    %191 = tpu.assume_multiple %190, 8 : i32
    %c0_84 = arith.constant 0 : index
    %c0_85 = arith.constant 0 : index
    %192 = arith.index_cast %191 : i32 to index
    %c0_86 = arith.constant 0 : index
    %193 = vector.load %arg2[%c0_84, %c0_85, %192, %c0_86] : memref<1x1x64x512xf32, #tpu.memory_space<vmem>>, vector<1x1x8x512xf32>
    %194 = vector.shape_cast %193 : vector<1x1x8x512xf32> to vector<8x512xf32>
    %c0_87 = arith.constant 0 : index
    %c0_88 = arith.constant 0 : index
    %195 = vector.load %arg3[%c0_87, %c0_88] : memref<128x512xf32, #tpu.memory_space<vmem>>, vector<128x512xf32>
    %cst_89 = arith.constant dense<0.000000e+00> : vector<8x512xf32>
    %196 = tpu.matmul %185, %195, %cst_89 {dimension_numbers = #tpu.dot_dimension_numbers<[1], [0], [0], [1], [0, 0, 1, 1], [], []>} : vector<8x128xf32>, vector<128x512xf32>, vector<8x512xf32> -> vector<8x512xf32>
    %197 = arith.addf %194, %196 : vector<8x512xf32>
    %198 = vector.extract_strided_slice %197 {offsets = [0, 0], sizes = [8, 256], strides = [1, 1]} : vector<8x512xf32> to vector<8x256xf32>
    %cst_90 = arith.constant 5.000000e-01 : f32
    %199 = vector.broadcast %cst_90 : f32 to vector<8x256xf32>
    %200 = arith.mulf %199, %198 : vector<8x256xf32>
    %201 = math.tanh %200 : vector<8x256xf32>
    %cst_91 = arith.constant 5.000000e-01 : f32
    %202 = vector.broadcast %cst_91 : f32 to vector<8x256xf32>
    %203 = arith.mulf %202, %201 : vector<8x256xf32>
    %cst_92 = arith.constant 5.000000e-01 : f32
    %204 = vector.broadcast %cst_92 : f32 to vector<8x256xf32>
    %205 = arith.addf %203, %204 : vector<8x256xf32>
    %206 = vector.extract_strided_slice %205 {offsets = [0, 0], sizes = [8, 128], strides = [1, 1]} : vector<8x256xf32> to vector<8x128xf32>
    %207 = vector.extract_strided_slice %205 {offsets = [0, 128], sizes = [8, 128], strides = [1, 1]} : vector<8x256xf32> to vector<8x128xf32>
    %208 = vector.extract_strided_slice %197 {offsets = [0, 256], sizes = [8, 128], strides = [1, 1]} : vector<8x512xf32> to vector<8x128xf32>
    %209 = math.tanh %208 : vector<8x128xf32>
    %210 = vector.extract_strided_slice %197 {offsets = [0, 384], sizes = [8, 128], strides = [1, 1]} : vector<8x512xf32> to vector<8x128xf32>
    %cst_93 = arith.constant 5.000000e-01 : f32
    %211 = vector.broadcast %cst_93 : f32 to vector<8x128xf32>
    %212 = arith.mulf %211, %210 : vector<8x128xf32>
    %213 = math.tanh %212 : vector<8x128xf32>
    %cst_94 = arith.constant 5.000000e-01 : f32
    %214 = vector.broadcast %cst_94 : f32 to vector<8x128xf32>
    %215 = arith.mulf %214, %213 : vector<8x128xf32>
    %cst_95 = arith.constant 5.000000e-01 : f32
    %216 = vector.broadcast %cst_95 : f32 to vector<8x128xf32>
    %217 = arith.addf %215, %216 : vector<8x128xf32>
    %218 = arith.mulf %207, %183 : vector<8x128xf32>
    %219 = arith.mulf %206, %209 : vector<8x128xf32>
    %220 = arith.addf %218, %219 : vector<8x128xf32>
    %221 = math.tanh %220 : vector<8x128xf32>
    %222 = arith.mulf %217, %221 : vector<8x128xf32>
    %c0_96 = arith.constant 0 : index
    %c0_97 = arith.constant 0 : index
    %223 = arith.index_cast %191 : i32 to index
    %c0_98 = arith.constant 0 : index
    %224 = vector.load %arg4[%c0_96, %c0_97, %223, %c0_98] : memref<1x1x64x128xf32, #tpu.memory_space<vmem>>, vector<1x1x8x128xf32>
    %225 = vector.shape_cast %224 : vector<1x1x8x128xf32> to vector<8x128xf32>
    %226 = vector.shape_cast %222 : vector<8x128xf32> to vector<1x1x8x128xf32>
    tpu.vector_store %arg4[%c0_96, %c0_97, %223, %c0_98], %226 {strides = array<i32>} : memref<1x1x64x128xf32, #tpu.memory_space<vmem>>, vector<1x1x8x128xf32>,
    %c6_i32 = arith.constant 6 : i32
    %c8_i32_99 = arith.constant 8 : i32
    %227 = arith.muli %c6_i32, %c8_i32_99 : i32
    %228 = tpu.assume_multiple %227, 8 : i32
    %c0_100 = arith.constant 0 : index
    %c0_101 = arith.constant 0 : index
    %229 = arith.index_cast %228 : i32 to index
    %c0_102 = arith.constant 0 : index
    %230 = vector.load %arg2[%c0_100, %c0_101, %229, %c0_102] : memref<1x1x64x512xf32, #tpu.memory_space<vmem>>, vector<1x1x8x512xf32>
    %231 = vector.shape_cast %230 : vector<1x1x8x512xf32> to vector<8x512xf32>
    %c0_103 = arith.constant 0 : index
    %c0_104 = arith.constant 0 : index
    %232 = vector.load %arg3[%c0_103, %c0_104] : memref<128x512xf32, #tpu.memory_space<vmem>>, vector<128x512xf32>
    %cst_105 = arith.constant dense<0.000000e+00> : vector<8x512xf32>
    %233 = tpu.matmul %222, %232, %cst_105 {dimension_numbers = #tpu.dot_dimension_numbers<[1], [0], [0], [1], [0, 0, 1, 1], [], []>} : vector<8x128xf32>, vector<128x512xf32>, vector<8x512xf32> -> vector<8x512xf32>
    %234 = arith.addf %231, %233 : vector<8x512xf32>
    %235 = vector.extract_strided_slice %234 {offsets = [0, 0], sizes = [8, 256], strides = [1, 1]} : vector<8x512xf32> to vector<8x256xf32>
    %cst_106 = arith.constant 5.000000e-01 : f32
    %236 = vector.broadcast %cst_106 : f32 to vector<8x256xf32>
    %237 = arith.mulf %236, %235 : vector<8x256xf32>
    %238 = math.tanh %237 : vector<8x256xf32>
    %cst_107 = arith.constant 5.000000e-01 : f32
    %239 = vector.broadcast %cst_107 : f32 to vector<8x256xf32>
    %240 = arith.mulf %239, %238 : vector<8x256xf32>
    %cst_108 = arith.constant 5.000000e-01 : f32
    %241 = vector.broadcast %cst_108 : f32 to vector<8x256xf32>
    %242 = arith.addf %240, %241 : vector<8x256xf32>
    %243 = vector.extract_strided_slice %242 {offsets = [0, 0], sizes = [8, 128], strides = [1, 1]} : vector<8x256xf32> to vector<8x128xf32>
    %244 = vector.extract_strided_slice %242 {offsets = [0, 128], sizes = [8, 128], strides = [1, 1]} : vector<8x256xf32> to vector<8x128xf32>
    %245 = vector.extract_strided_slice %234 {offsets = [0, 256], sizes = [8, 128], strides = [1, 1]} : vector<8x512xf32> to vector<8x128xf32>
    %246 = math.tanh %245 : vector<8x128xf32>
    %247 = vector.extract_strided_slice %234 {offsets = [0, 384], sizes = [8, 128], strides = [1, 1]} : vector<8x512xf32> to vector<8x128xf32>
    %cst_109 = arith.constant 5.000000e-01 : f32
    %248 = vector.broadcast %cst_109 : f32 to vector<8x128xf32>
    %249 = arith.mulf %248, %247 : vector<8x128xf32>
    %250 = math.tanh %249 : vector<8x128xf32>
    %cst_110 = arith.constant 5.000000e-01 : f32
    %251 = vector.broadcast %cst_110 : f32 to vector<8x128xf32>
    %252 = arith.mulf %251, %250 : vector<8x128xf32>
    %cst_111 = arith.constant 5.000000e-01 : f32
    %253 = vector.broadcast %cst_111 : f32 to vector<8x128xf32>
    %254 = arith.addf %252, %253 : vector<8x128xf32>
    %255 = arith.mulf %244, %220 : vector<8x128xf32>
    %256 = arith.mulf %243, %246 : vector<8x128xf32>
    %257 = arith.addf %255, %256 : vector<8x128xf32>
    %258 = math.tanh %257 : vector<8x128xf32>
    %259 = arith.mulf %254, %258 : vector<8x128xf32>
    %c0_112 = arith.constant 0 : index
    %c0_113 = arith.constant 0 : index
    %260 = arith.index_cast %228 : i32 to index
    %c0_114 = arith.constant 0 : index
    %261 = vector.load %arg4[%c0_112, %c0_113, %260, %c0_114] : memref<1x1x64x128xf32, #tpu.memory_space<vmem>>, vector<1x1x8x128xf32>
    %262 = vector.shape_cast %261 : vector<1x1x8x128xf32> to vector<8x128xf32>
    %263 = vector.shape_cast %259 : vector<8x128xf32> to vector<1x1x8x128xf32>
    tpu.vector_store %arg4[%c0_112, %c0_113, %260, %c0_114], %263 {strides = array<i32>} : memref<1x1x64x128xf32, #tpu.memory_space<vmem>>, vector<1x1x8x128xf32>,
    %c7_i32 = arith.constant 7 : i32
    %c8_i32_115 = arith.constant 8 : i32
    %264 = arith.muli %c7_i32, %c8_i32_115 : i32
    %265 = tpu.assume_multiple %264, 8 : i32
    %c0_116 = arith.constant 0 : index
    %c0_117 = arith.constant 0 : index
    %266 = arith.index_cast %265 : i32 to index
    %c0_118 = arith.constant 0 : index
    %267 = vector.load %arg2[%c0_116, %c0_117, %266, %c0_118] : memref<1x1x64x512xf32, #tpu.memory_space<vmem>>, vector<1x1x8x512xf32>
    %268 = vector.shape_cast %267 : vector<1x1x8x512xf32> to vector<8x512xf32>
    %c0_119 = arith.constant 0 : index
    %c0_120 = arith.constant 0 : index
    %269 = vector.load %arg3[%c0_119, %c0_120] : memref<128x512xf32, #tpu.memory_space<vmem>>, vector<128x512xf32>
    %cst_121 = arith.constant dense<0.000000e+00> : vector<8x512xf32>
    %270 = tpu.matmul %259, %269, %cst_121 {dimension_numbers = #tpu.dot_dimension_numbers<[1], [0], [0], [1], [0, 0, 1, 1], [], []>} : vector<8x128xf32>, vector<128x512xf32>, vector<8x512xf32> -> vector<8x512xf32>
    %271 = arith.addf %268, %270 : vector<8x512xf32>
    %272 = vector.extract_strided_slice %271 {offsets = [0, 0], sizes = [8, 256], strides = [1, 1]} : vector<8x512xf32> to vector<8x256xf32>
    %cst_122 = arith.constant 5.000000e-01 : f32
    %273 = vector.broadcast %cst_122 : f32 to vector<8x256xf32>
    %274 = arith.mulf %273, %272 : vector<8x256xf32>
    %275 = math.tanh %274 : vector<8x256xf32>
    %cst_123 = arith.constant 5.000000e-01 : f32
    %276 = vector.broadcast %cst_123 : f32 to vector<8x256xf32>
    %277 = arith.mulf %276, %275 : vector<8x256xf32>
    %cst_124 = arith.constant 5.000000e-01 : f32
    %278 = vector.broadcast %cst_124 : f32 to vector<8x256xf32>
    %279 = arith.addf %277, %278 : vector<8x256xf32>
    %280 = vector.extract_strided_slice %279 {offsets = [0, 0], sizes = [8, 128], strides = [1, 1]} : vector<8x256xf32> to vector<8x128xf32>
    %281 = vector.extract_strided_slice %279 {offsets = [0, 128], sizes = [8, 128], strides = [1, 1]} : vector<8x256xf32> to vector<8x128xf32>
    %282 = vector.extract_strided_slice %271 {offsets = [0, 256], sizes = [8, 128], strides = [1, 1]} : vector<8x512xf32> to vector<8x128xf32>
    %283 = math.tanh %282 : vector<8x128xf32>
    %284 = vector.extract_strided_slice %271 {offsets = [0, 384], sizes = [8, 128], strides = [1, 1]} : vector<8x512xf32> to vector<8x128xf32>
    %cst_125 = arith.constant 5.000000e-01 : f32
    %285 = vector.broadcast %cst_125 : f32 to vector<8x128xf32>
    %286 = arith.mulf %285, %284 : vector<8x128xf32>
    %287 = math.tanh %286 : vector<8x128xf32>
    %cst_126 = arith.constant 5.000000e-01 : f32
    %288 = vector.broadcast %cst_126 : f32 to vector<8x128xf32>
    %289 = arith.mulf %288, %287 : vector<8x128xf32>
    %cst_127 = arith.constant 5.000000e-01 : f32
    %290 = vector.broadcast %cst_127 : f32 to vector<8x128xf32>
    %291 = arith.addf %289, %290 : vector<8x128xf32>
    %292 = arith.mulf %281, %257 : vector<8x128xf32>
    %293 = arith.mulf %280, %283 : vector<8x128xf32>
    %294 = arith.addf %292, %293 : vector<8x128xf32>
    %295 = math.tanh %294 : vector<8x128xf32>
    %296 = arith.mulf %291, %295 : vector<8x128xf32>
    %c0_128 = arith.constant 0 : index
    %c0_129 = arith.constant 0 : index
    %297 = arith.index_cast %265 : i32 to index
    %c0_130 = arith.constant 0 : index
    %298 = vector.load %arg4[%c0_128, %c0_129, %297, %c0_130] : memref<1x1x64x128xf32, #tpu.memory_space<vmem>>, vector<1x1x8x128xf32>
    %299 = vector.shape_cast %298 : vector<1x1x8x128xf32> to vector<8x128xf32>
    %300 = vector.shape_cast %296 : vector<8x128xf32> to vector<1x1x8x128xf32>
    tpu.vector_store %arg4[%c0_128, %c0_129, %297, %c0_130], %300 {strides = array<i32>} : memref<1x1x64x128xf32, #tpu.memory_space<vmem>>, vector<1x1x8x128xf32>,
    %c8_i32_131 = arith.constant 8 : i32
    %c0_132 = arith.constant 0 : index
    %c0_133 = arith.constant 0 : index
    %301 = vector.load %arg5[%c0_132, %c0_133] : memref<8x128xf32, #tpu.memory_space<vmem>>, vector<8x128xf32>
    tpu.vector_store %arg5[%c0_132, %c0_133], %296 {strides = array<i32>} : memref<8x128xf32, #tpu.memory_space<vmem>>, vector<8x128xf32>,
    %c0_134 = arith.constant 0 : index
    %c0_135 = arith.constant 0 : index
    %302 = vector.load %arg6[%c0_134, %c0_135] : memref<8x128xf32, #tpu.memory_space<vmem>>, vector<8x128xf32>
    tpu.vector_store %arg6[%c0_134, %c0_135], %294 {strides = array<i32>} : memref<8x128xf32, #tpu.memory_space<vmem>>, vector<8x128xf32>,
    return
  }
  func.func @transform_0(%arg0: i32, %arg1: i32) -> (i32, i32, i32, i32) {
    %c0_i32 = arith.constant 0 : i32
    %c0_i32_0 = arith.constant 0 : i32
    %c0_i32_1 = arith.constant 0 : i32
    return %arg0, %arg1, %c0_i32, %c0_i32_0 : i32, i32, i32, i32
  }
  func.func @transform_1(%arg0: i32, %arg1: i32) -> (i32, i32) {
    %c0_i32 = arith.constant 0 : i32
    %c0_i32_0 = arith.constant 0 : i32
    %c0_i32_1 = arith.constant 0 : i32
    return %c0_i32, %c0_i32_0 : i32, i32
  }
  func.func @transform_2(%arg0: i32, %arg1: i32) -> (i32, i32, i32, i32) {
    %c0_i32 = arith.constant 0 : i32
    %c0_i32_0 = arith.constant 0 : i32
    %c0_i32_1 = arith.constant 0 : i32
    return %arg0, %arg1, %c0_i32, %c0_i32_0 : i32, i32, i32, i32
  }
}

module attributes {stable_mosaic.version = 11 : i64} {
  func.func @_lstm_chunk_kernel(%arg0: i32, %arg1: i32, %arg2: memref<1x1x64x512xf32, #tpu.memory_space<vmem>>, %arg3: memref<128x512xf32, #tpu.memory_space<vmem>>, %arg4: memref<1x1x64x128xf32, #tpu.memory_space<vmem>>, %arg5: memref<8x128xf32, #tpu.memory_space<vmem>>, %arg6: memref<8x128xf32, #tpu.memory_space<vmem>>) attributes {dimension_semantics = [#tpu.dimension_semantics<parallel>, #tpu.dimension_semantics<arbitrary>], iteration_bounds = array<i64: 1, 1>, scalar_prefetch = 0 : i64, scratch_operands = 2 : i64, tpu.core_type = #tpu.core_type<tc>, window_params = [{transform_indices = @transform_0, window_bounds = array<i64: 1, 1, 64, 512>}, {pipeline_mode = #tpu.pipeline_mode<synchronous>, transform_indices = @transform_1, window_bounds = array<i64: 128, 512>}, {transform_indices = @transform_2, window_bounds = array<i64: 1, 1, 64, 128>}]} {
    %c0_i32 = arith.constant 0 : i32
    %0 = arith.cmpi eq, %arg1, %c0_i32 : i32
    %1 = arith.extui %0 : i1 to i32
    %c0_i32_0 = arith.constant 0 : i32
    %2 = arith.cmpi ne, %1, %c0_i32_0 : i32
    scf.if %2 {
      %cst_136 = arith.constant 0.000000e+00 : f32
      %303 = vector.broadcast %cst_136 : f32 to vector<8x128xf32>
      %c0_137 = arith.constant 0 : index
      %c0_138 = arith.constant 0 : index
      %304 = vector.load %arg5[%c0_137, %c0_138] : memref<8x128xf32, #tpu.memory_space<vmem>>, vector<8x128xf32>
      tpu.vector_store %arg5[%c0_137, %c0_138], %303 {strides = array<i32>} : memref<8x128xf32, #tpu.memory_space<vmem>>, vector<8x128xf32>,
      %cst_139 = arith.constant 0.000000e+00 : f32
      %305 = vector.broadcast %cst_139 : f32 to vector<8x128xf32>
      %c0_140 = arith.constant 0 : index
      %c0_141 = arith.constant 0 : index
      %306 = vector.load %arg6[%c0_140, %c0_141] : memref<8x128xf32, #tpu.memory_space<vmem>>, vector<8x128xf32>
      tpu.vector_store %arg6[%c0_140, %c0_141], %305 {strides = array<i32>} : memref<8x128xf32, #tpu.memory_space<vmem>>, vector<8x128xf32>,
    } else {
    }
    %c0 = arith.constant 0 : index
    %c0_1 = arith.constant 0 : index
    %3 = vector.load %arg5[%c0, %c0_1] : memref<8x128xf32, #tpu.memory_space<vmem>>, vector<8x128xf32>
    %c0_2 = arith.constant 0 : index
    %c0_3 = arith.constant 0 : index
    %4 = vector.load %arg6[%c0_2, %c0_3] : memref<8x128xf32, #tpu.memory_space<vmem>>, vector<8x128xf32>
    %c0_i32_4 = arith.constant 0 : i32
    %c8_i32 = arith.constant 8 : i32
    %5 = arith.muli %c0_i32_4, %c8_i32 : i32
    %6 = tpu.assume_multiple %5, 8 : i32
    %c0_5 = arith.constant 0 : index
    %c0_6 = arith.constant 0 : index
    %7 = arith.index_cast %6 : i32 to index
    %c0_7 = arith.constant 0 : index
    %8 = vector.load %arg2[%c0_5, %c0_6, %7, %c0_7] : memref<1x1x64x512xf32, #tpu.memory_space<vmem>>, vector<1x1x8x512xf32>
    %9 = vector.shape_cast %8 : vector<1x1x8x512xf32> to vector<8x512xf32>
    %c0_8 = arith.constant 0 : index
    %c0_9 = arith.constant 0 : index
    %10 = vector.load %arg3[%c0_8, %c0_9] : memref<128x512xf32, #tpu.memory_space<vmem>>, vector<128x512xf32>
    %cst = arith.constant dense<0.000000e+00> : vector<8x512xf32>
    %11 = tpu.matmul %3, %10, %cst {dimension_numbers = #tpu.dot_dimension_numbers<[1], [0], [0], [1], [0, 0, 1, 1], [], []>} : vector<8x128xf32>, vector<128x512xf32>, vector<8x512xf32> -> vector<8x512xf32>
    %12 = arith.addf %9, %11 : vector<8x512xf32>
    %13 = vector.extract_strided_slice %12 {offsets = [0, 0], sizes = [8, 256], strides = [1, 1]} : vector<8x512xf32> to vector<8x256xf32>
    %cst_10 = arith.constant 5.000000e-01 : f32
    %14 = vector.broadcast %cst_10 : f32 to vector<8x256xf32>
    %15 = arith.mulf %14, %13 : vector<8x256xf32>
    %16 = math.tanh %15 : vector<8x256xf32>
    %cst_11 = arith.constant 5.000000e-01 : f32
    %17 = vector.broadcast %cst_11 : f32 to vector<8x256xf32>
    %18 = arith.mulf %17, %16 : vector<8x256xf32>
    %cst_12 = arith.constant 5.000000e-01 : f32
    %19 = vector.broadcast %cst_12 : f32 to vector<8x256xf32>
    %20 = arith.addf %18, %19 : vector<8x256xf32>
    %21 = vector.extract_strided_slice %20 {offsets = [0, 0], sizes = [8, 128], strides = [1, 1]} : vector<8x256xf32> to vector<8x128xf32>
    %22 = vector.extract_strided_slice %20 {offsets = [0, 128], sizes = [8, 128], strides = [1, 1]} : vector<8x256xf32> to vector<8x128xf32>
    %23 = vector.extract_strided_slice %12 {offsets = [0, 256], sizes = [8, 128], strides = [1, 1]} : vector<8x512xf32> to vector<8x128xf32>
    %24 = math.tanh %23 : vector<8x128xf32>
    %25 = vector.extract_strided_slice %12 {offsets = [0, 384], sizes = [8, 128], strides = [1, 1]} : vector<8x512xf32> to vector<8x128xf32>
    %cst_13 = arith.constant 5.000000e-01 : f32
    %26 = vector.broadcast %cst_13 : f32 to vector<8x128xf32>
    %27 = arith.mulf %26, %25 : vector<8x128xf32>
    %28 = math.tanh %27 : vector<8x128xf32>
    %cst_14 = arith.constant 5.000000e-01 : f32
    %29 = vector.broadcast %cst_14 : f32 to vector<8x128xf32>
    %30 = arith.mulf %29, %28 : vector<8x128xf32>
    %cst_15 = arith.constant 5.000000e-01 : f32
    %31 = vector.broadcast %cst_15 : f32 to vector<8x128xf32>
    %32 = arith.addf %30, %31 : vector<8x128xf32>
    %33 = arith.mulf %22, %4 : vector<8x128xf32>
    %34 = arith.mulf %21, %24 : vector<8x128xf32>
    %35 = arith.addf %33, %34 : vector<8x128xf32>
    %36 = math.tanh %35 : vector<8x128xf32>
    %37 = arith.mulf %32, %36 : vector<8x128xf32>
    %c0_16 = arith.constant 0 : index
    %c0_17 = arith.constant 0 : index
    %38 = arith.index_cast %6 : i32 to index
    %c0_18 = arith.constant 0 : index
    %39 = vector.load %arg4[%c0_16, %c0_17, %38, %c0_18] : memref<1x1x64x128xf32, #tpu.memory_space<vmem>>, vector<1x1x8x128xf32>
    %40 = vector.shape_cast %39 : vector<1x1x8x128xf32> to vector<8x128xf32>
    %41 = vector.shape_cast %37 : vector<8x128xf32> to vector<1x1x8x128xf32>
    tpu.vector_store %arg4[%c0_16, %c0_17, %38, %c0_18], %41 {strides = array<i32>} : memref<1x1x64x128xf32, #tpu.memory_space<vmem>>, vector<1x1x8x128xf32>,
    %c1_i32 = arith.constant 1 : i32
    %c8_i32_19 = arith.constant 8 : i32
    %42 = arith.muli %c1_i32, %c8_i32_19 : i32
    %43 = tpu.assume_multiple %42, 8 : i32
    %c0_20 = arith.constant 0 : index
    %c0_21 = arith.constant 0 : index
    %44 = arith.index_cast %43 : i32 to index
    %c0_22 = arith.constant 0 : index
    %45 = vector.load %arg2[%c0_20, %c0_21, %44, %c0_22] : memref<1x1x64x512xf32, #tpu.memory_space<vmem>>, vector<1x1x8x512xf32>
    %46 = vector.shape_cast %45 : vector<1x1x8x512xf32> to vector<8x512xf32>
    %c0_23 = arith.constant 0 : index
    %c0_24 = arith.constant 0 : index
    %47 = vector.load %arg3[%c0_23, %c0_24] : memref<128x512xf32, #tpu.memory_space<vmem>>, vector<128x512xf32>
    %cst_25 = arith.constant dense<0.000000e+00> : vector<8x512xf32>
    %48 = tpu.matmul %37, %47, %cst_25 {dimension_numbers = #tpu.dot_dimension_numbers<[1], [0], [0], [1], [0, 0, 1, 1], [], []>} : vector<8x128xf32>, vector<128x512xf32>, vector<8x512xf32> -> vector<8x512xf32>
    %49 = arith.addf %46, %48 : vector<8x512xf32>
    %50 = vector.extract_strided_slice %49 {offsets = [0, 0], sizes = [8, 256], strides = [1, 1]} : vector<8x512xf32> to vector<8x256xf32>
    %cst_26 = arith.constant 5.000000e-01 : f32
    %51 = vector.broadcast %cst_26 : f32 to vector<8x256xf32>
    %52 = arith.mulf %51, %50 : vector<8x256xf32>
    %53 = math.tanh %52 : vector<8x256xf32>
    %cst_27 = arith.constant 5.000000e-01 : f32
    %54 = vector.broadcast %cst_27 : f32 to vector<8x256xf32>
    %55 = arith.mulf %54, %53 : vector<8x256xf32>
    %cst_28 = arith.constant 5.000000e-01 : f32
    %56 = vector.broadcast %cst_28 : f32 to vector<8x256xf32>
    %57 = arith.addf %55, %56 : vector<8x256xf32>
    %58 = vector.extract_strided_slice %57 {offsets = [0, 0], sizes = [8, 128], strides = [1, 1]} : vector<8x256xf32> to vector<8x128xf32>
    %59 = vector.extract_strided_slice %57 {offsets = [0, 128], sizes = [8, 128], strides = [1, 1]} : vector<8x256xf32> to vector<8x128xf32>
    %60 = vector.extract_strided_slice %49 {offsets = [0, 256], sizes = [8, 128], strides = [1, 1]} : vector<8x512xf32> to vector<8x128xf32>
    %61 = math.tanh %60 : vector<8x128xf32>
    %62 = vector.extract_strided_slice %49 {offsets = [0, 384], sizes = [8, 128], strides = [1, 1]} : vector<8x512xf32> to vector<8x128xf32>
    %cst_29 = arith.constant 5.000000e-01 : f32
    %63 = vector.broadcast %cst_29 : f32 to vector<8x128xf32>
    %64 = arith.mulf %63, %62 : vector<8x128xf32>
    %65 = math.tanh %64 : vector<8x128xf32>
    %cst_30 = arith.constant 5.000000e-01 : f32
    %66 = vector.broadcast %cst_30 : f32 to vector<8x128xf32>
    %67 = arith.mulf %66, %65 : vector<8x128xf32>
    %cst_31 = arith.constant 5.000000e-01 : f32
    %68 = vector.broadcast %cst_31 : f32 to vector<8x128xf32>
    %69 = arith.addf %67, %68 : vector<8x128xf32>
    %70 = arith.mulf %59, %35 : vector<8x128xf32>
    %71 = arith.mulf %58, %61 : vector<8x128xf32>
    %72 = arith.addf %70, %71 : vector<8x128xf32>
    %73 = math.tanh %72 : vector<8x128xf32>
    %74 = arith.mulf %69, %73 : vector<8x128xf32>
    %c0_32 = arith.constant 0 : index
    %c0_33 = arith.constant 0 : index
    %75 = arith.index_cast %43 : i32 to index
    %c0_34 = arith.constant 0 : index
    %76 = vector.load %arg4[%c0_32, %c0_33, %75, %c0_34] : memref<1x1x64x128xf32, #tpu.memory_space<vmem>>, vector<1x1x8x128xf32>
    %77 = vector.shape_cast %76 : vector<1x1x8x128xf32> to vector<8x128xf32>
    %78 = vector.shape_cast %74 : vector<8x128xf32> to vector<1x1x8x128xf32>
    tpu.vector_store %arg4[%c0_32, %c0_33, %75, %c0_34], %78 {strides = array<i32>} : memref<1x1x64x128xf32, #tpu.memory_space<vmem>>, vector<1x1x8x128xf32>,
    %c2_i32 = arith.constant 2 : i32
    %c8_i32_35 = arith.constant 8 : i32
    %79 = arith.muli %c2_i32, %c8_i32_35 : i32
    %80 = tpu.assume_multiple %79, 8 : i32
    %c0_36 = arith.constant 0 : index
    %c0_37 = arith.constant 0 : index
    %81 = arith.index_cast %80 : i32 to index
    %c0_38 = arith.constant 0 : index
    %82 = vector.load %arg2[%c0_36, %c0_37, %81, %c0_38] : memref<1x1x64x512xf32, #tpu.memory_space<vmem>>, vector<1x1x8x512xf32>
    %83 = vector.shape_cast %82 : vector<1x1x8x512xf32> to vector<8x512xf32>
    %c0_39 = arith.constant 0 : index
    %c0_40 = arith.constant 0 : index
    %84 = vector.load %arg3[%c0_39, %c0_40] : memref<128x512xf32, #tpu.memory_space<vmem>>, vector<128x512xf32>
    %cst_41 = arith.constant dense<0.000000e+00> : vector<8x512xf32>
    %85 = tpu.matmul %74, %84, %cst_41 {dimension_numbers = #tpu.dot_dimension_numbers<[1], [0], [0], [1], [0, 0, 1, 1], [], []>} : vector<8x128xf32>, vector<128x512xf32>, vector<8x512xf32> -> vector<8x512xf32>
    %86 = arith.addf %83, %85 : vector<8x512xf32>
    %87 = vector.extract_strided_slice %86 {offsets = [0, 0], sizes = [8, 256], strides = [1, 1]} : vector<8x512xf32> to vector<8x256xf32>
    %cst_42 = arith.constant 5.000000e-01 : f32
    %88 = vector.broadcast %cst_42 : f32 to vector<8x256xf32>
    %89 = arith.mulf %88, %87 : vector<8x256xf32>
    %90 = math.tanh %89 : vector<8x256xf32>
    %cst_43 = arith.constant 5.000000e-01 : f32
    %91 = vector.broadcast %cst_43 : f32 to vector<8x256xf32>
    %92 = arith.mulf %91, %90 : vector<8x256xf32>
    %cst_44 = arith.constant 5.000000e-01 : f32
    %93 = vector.broadcast %cst_44 : f32 to vector<8x256xf32>
    %94 = arith.addf %92, %93 : vector<8x256xf32>
    %95 = vector.extract_strided_slice %94 {offsets = [0, 0], sizes = [8, 128], strides = [1, 1]} : vector<8x256xf32> to vector<8x128xf32>
    %96 = vector.extract_strided_slice %94 {offsets = [0, 128], sizes = [8, 128], strides = [1, 1]} : vector<8x256xf32> to vector<8x128xf32>
    %97 = vector.extract_strided_slice %86 {offsets = [0, 256], sizes = [8, 128], strides = [1, 1]} : vector<8x512xf32> to vector<8x128xf32>
    %98 = math.tanh %97 : vector<8x128xf32>
    %99 = vector.extract_strided_slice %86 {offsets = [0, 384], sizes = [8, 128], strides = [1, 1]} : vector<8x512xf32> to vector<8x128xf32>
    %cst_45 = arith.constant 5.000000e-01 : f32
    %100 = vector.broadcast %cst_45 : f32 to vector<8x128xf32>
    %101 = arith.mulf %100, %99 : vector<8x128xf32>
    %102 = math.tanh %101 : vector<8x128xf32>
    %cst_46 = arith.constant 5.000000e-01 : f32
    %103 = vector.broadcast %cst_46 : f32 to vector<8x128xf32>
    %104 = arith.mulf %103, %102 : vector<8x128xf32>
    %cst_47 = arith.constant 5.000000e-01 : f32
    %105 = vector.broadcast %cst_47 : f32 to vector<8x128xf32>
    %106 = arith.addf %104, %105 : vector<8x128xf32>
    %107 = arith.mulf %96, %72 : vector<8x128xf32>
    %108 = arith.mulf %95, %98 : vector<8x128xf32>
    %109 = arith.addf %107, %108 : vector<8x128xf32>
    %110 = math.tanh %109 : vector<8x128xf32>
    %111 = arith.mulf %106, %110 : vector<8x128xf32>
    %c0_48 = arith.constant 0 : index
    %c0_49 = arith.constant 0 : index
    %112 = arith.index_cast %80 : i32 to index
    %c0_50 = arith.constant 0 : index
    %113 = vector.load %arg4[%c0_48, %c0_49, %112, %c0_50] : memref<1x1x64x128xf32, #tpu.memory_space<vmem>>, vector<1x1x8x128xf32>
    %114 = vector.shape_cast %113 : vector<1x1x8x128xf32> to vector<8x128xf32>
    %115 = vector.shape_cast %111 : vector<8x128xf32> to vector<1x1x8x128xf32>
    tpu.vector_store %arg4[%c0_48, %c0_49, %112, %c0_50], %115 {strides = array<i32>} : memref<1x1x64x128xf32, #tpu.memory_space<vmem>>, vector<1x1x8x128xf32>,
    %c3_i32 = arith.constant 3 : i32
    %c8_i32_51 = arith.constant 8 : i32
    %116 = arith.muli %c3_i32, %c8_i32_51 : i32
    %117 = tpu.assume_multiple %116, 8 : i32
    %c0_52 = arith.constant 0 : index
    %c0_53 = arith.constant 0 : index
    %118 = arith.index_cast %117 : i32 to index
    %c0_54 = arith.constant 0 : index
    %119 = vector.load %arg2[%c0_52, %c0_53, %118, %c0_54] : memref<1x1x64x512xf32, #tpu.memory_space<vmem>>, vector<1x1x8x512xf32>
    %120 = vector.shape_cast %119 : vector<1x1x8x512xf32> to vector<8x512xf32>
    %c0_55 = arith.constant 0 : index
    %c0_56 = arith.constant 0 : index
    %121 = vector.load %arg3[%c0_55, %c0_56] : memref<128x512xf32, #tpu.memory_space<vmem>>, vector<128x512xf32>
    %cst_57 = arith.constant dense<0.000000e+00> : vector<8x512xf32>
    %122 = tpu.matmul %111, %121, %cst_57 {dimension_numbers = #tpu.dot_dimension_numbers<[1], [0], [0], [1], [0, 0, 1, 1], [], []>} : vector<8x128xf32>, vector<128x512xf32>, vector<8x512xf32> -> vector<8x512xf32>
    %123 = arith.addf %120, %122 : vector<8x512xf32>
    %124 = vector.extract_strided_slice %123 {offsets = [0, 0], sizes = [8, 256], strides = [1, 1]} : vector<8x512xf32> to vector<8x256xf32>
    %cst_58 = arith.constant 5.000000e-01 : f32
    %125 = vector.broadcast %cst_58 : f32 to vector<8x256xf32>
    %126 = arith.mulf %125, %124 : vector<8x256xf32>
    %127 = math.tanh %126 : vector<8x256xf32>
    %cst_59 = arith.constant 5.000000e-01 : f32
    %128 = vector.broadcast %cst_59 : f32 to vector<8x256xf32>
    %129 = arith.mulf %128, %127 : vector<8x256xf32>
    %cst_60 = arith.constant 5.000000e-01 : f32
    %130 = vector.broadcast %cst_60 : f32 to vector<8x256xf32>
    %131 = arith.addf %129, %130 : vector<8x256xf32>
    %132 = vector.extract_strided_slice %131 {offsets = [0, 0], sizes = [8, 128], strides = [1, 1]} : vector<8x256xf32> to vector<8x128xf32>
    %133 = vector.extract_strided_slice %131 {offsets = [0, 128], sizes = [8, 128], strides = [1, 1]} : vector<8x256xf32> to vector<8x128xf32>
    %134 = vector.extract_strided_slice %123 {offsets = [0, 256], sizes = [8, 128], strides = [1, 1]} : vector<8x512xf32> to vector<8x128xf32>
    %135 = math.tanh %134 : vector<8x128xf32>
    %136 = vector.extract_strided_slice %123 {offsets = [0, 384], sizes = [8, 128], strides = [1, 1]} : vector<8x512xf32> to vector<8x128xf32>
    %cst_61 = arith.constant 5.000000e-01 : f32
    %137 = vector.broadcast %cst_61 : f32 to vector<8x128xf32>
    %138 = arith.mulf %137, %136 : vector<8x128xf32>
    %139 = math.tanh %138 : vector<8x128xf32>
    %cst_62 = arith.constant 5.000000e-01 : f32
    %140 = vector.broadcast %cst_62 : f32 to vector<8x128xf32>
    %141 = arith.mulf %140, %139 : vector<8x128xf32>
    %cst_63 = arith.constant 5.000000e-01 : f32
    %142 = vector.broadcast %cst_63 : f32 to vector<8x128xf32>
    %143 = arith.addf %141, %142 : vector<8x128xf32>
    %144 = arith.mulf %133, %109 : vector<8x128xf32>
    %145 = arith.mulf %132, %135 : vector<8x128xf32>
    %146 = arith.addf %144, %145 : vector<8x128xf32>
    %147 = math.tanh %146 : vector<8x128xf32>
    %148 = arith.mulf %143, %147 : vector<8x128xf32>
    %c0_64 = arith.constant 0 : index
    %c0_65 = arith.constant 0 : index
    %149 = arith.index_cast %117 : i32 to index
    %c0_66 = arith.constant 0 : index
    %150 = vector.load %arg4[%c0_64, %c0_65, %149, %c0_66] : memref<1x1x64x128xf32, #tpu.memory_space<vmem>>, vector<1x1x8x128xf32>
    %151 = vector.shape_cast %150 : vector<1x1x8x128xf32> to vector<8x128xf32>
    %152 = vector.shape_cast %148 : vector<8x128xf32> to vector<1x1x8x128xf32>
    tpu.vector_store %arg4[%c0_64, %c0_65, %149, %c0_66], %152 {strides = array<i32>} : memref<1x1x64x128xf32, #tpu.memory_space<vmem>>, vector<1x1x8x128xf32>,
    %c4_i32 = arith.constant 4 : i32
    %c8_i32_67 = arith.constant 8 : i32
    %153 = arith.muli %c4_i32, %c8_i32_67 : i32
    %154 = tpu.assume_multiple %153, 8 : i32
    %c0_68 = arith.constant 0 : index
    %c0_69 = arith.constant 0 : index
    %155 = arith.index_cast %154 : i32 to index
    %c0_70 = arith.constant 0 : index
    %156 = vector.load %arg2[%c0_68, %c0_69, %155, %c0_70] : memref<1x1x64x512xf32, #tpu.memory_space<vmem>>, vector<1x1x8x512xf32>
    %157 = vector.shape_cast %156 : vector<1x1x8x512xf32> to vector<8x512xf32>
    %c0_71 = arith.constant 0 : index
    %c0_72 = arith.constant 0 : index
    %158 = vector.load %arg3[%c0_71, %c0_72] : memref<128x512xf32, #tpu.memory_space<vmem>>, vector<128x512xf32>
    %cst_73 = arith.constant dense<0.000000e+00> : vector<8x512xf32>
    %159 = tpu.matmul %148, %158, %cst_73 {dimension_numbers = #tpu.dot_dimension_numbers<[1], [0], [0], [1], [0, 0, 1, 1], [], []>} : vector<8x128xf32>, vector<128x512xf32>, vector<8x512xf32> -> vector<8x512xf32>
    %160 = arith.addf %157, %159 : vector<8x512xf32>
    %161 = vector.extract_strided_slice %160 {offsets = [0, 0], sizes = [8, 256], strides = [1, 1]} : vector<8x512xf32> to vector<8x256xf32>
    %cst_74 = arith.constant 5.000000e-01 : f32
    %162 = vector.broadcast %cst_74 : f32 to vector<8x256xf32>
    %163 = arith.mulf %162, %161 : vector<8x256xf32>
    %164 = math.tanh %163 : vector<8x256xf32>
    %cst_75 = arith.constant 5.000000e-01 : f32
    %165 = vector.broadcast %cst_75 : f32 to vector<8x256xf32>
    %166 = arith.mulf %165, %164 : vector<8x256xf32>
    %cst_76 = arith.constant 5.000000e-01 : f32
    %167 = vector.broadcast %cst_76 : f32 to vector<8x256xf32>
    %168 = arith.addf %166, %167 : vector<8x256xf32>
    %169 = vector.extract_strided_slice %168 {offsets = [0, 0], sizes = [8, 128], strides = [1, 1]} : vector<8x256xf32> to vector<8x128xf32>
    %170 = vector.extract_strided_slice %168 {offsets = [0, 128], sizes = [8, 128], strides = [1, 1]} : vector<8x256xf32> to vector<8x128xf32>
    %171 = vector.extract_strided_slice %160 {offsets = [0, 256], sizes = [8, 128], strides = [1, 1]} : vector<8x512xf32> to vector<8x128xf32>
    %172 = math.tanh %171 : vector<8x128xf32>
    %173 = vector.extract_strided_slice %160 {offsets = [0, 384], sizes = [8, 128], strides = [1, 1]} : vector<8x512xf32> to vector<8x128xf32>
    %cst_77 = arith.constant 5.000000e-01 : f32
    %174 = vector.broadcast %cst_77 : f32 to vector<8x128xf32>
    %175 = arith.mulf %174, %173 : vector<8x128xf32>
    %176 = math.tanh %175 : vector<8x128xf32>
    %cst_78 = arith.constant 5.000000e-01 : f32
    %177 = vector.broadcast %cst_78 : f32 to vector<8x128xf32>
    %178 = arith.mulf %177, %176 : vector<8x128xf32>
    %cst_79 = arith.constant 5.000000e-01 : f32
    %179 = vector.broadcast %cst_79 : f32 to vector<8x128xf32>
    %180 = arith.addf %178, %179 : vector<8x128xf32>
    %181 = arith.mulf %170, %146 : vector<8x128xf32>
    %182 = arith.mulf %169, %172 : vector<8x128xf32>
    %183 = arith.addf %181, %182 : vector<8x128xf32>
    %184 = math.tanh %183 : vector<8x128xf32>
    %185 = arith.mulf %180, %184 : vector<8x128xf32>
    %c0_80 = arith.constant 0 : index
    %c0_81 = arith.constant 0 : index
    %186 = arith.index_cast %154 : i32 to index
    %c0_82 = arith.constant 0 : index
    %187 = vector.load %arg4[%c0_80, %c0_81, %186, %c0_82] : memref<1x1x64x128xf32, #tpu.memory_space<vmem>>, vector<1x1x8x128xf32>
    %188 = vector.shape_cast %187 : vector<1x1x8x128xf32> to vector<8x128xf32>
    %189 = vector.shape_cast %185 : vector<8x128xf32> to vector<1x1x8x128xf32>
    tpu.vector_store %arg4[%c0_80, %c0_81, %186, %c0_82], %189 {strides = array<i32>} : memref<1x1x64x128xf32, #tpu.memory_space<vmem>>, vector<1x1x8x128xf32>,
    %c5_i32 = arith.constant 5 : i32
    %c8_i32_83 = arith.constant 8 : i32
    %190 = arith.muli %c5_i32, %c8_i32_83 : i32
    %191 = tpu.assume_multiple %190, 8 : i32
    %c0_84 = arith.constant 0 : index
    %c0_85 = arith.constant 0 : index
    %192 = arith.index_cast %191 : i32 to index
    %c0_86 = arith.constant 0 : index
    %193 = vector.load %arg2[%c0_84, %c0_85, %192, %c0_86] : memref<1x1x64x512xf32, #tpu.memory_space<vmem>>, vector<1x1x8x512xf32>
    %194 = vector.shape_cast %193 : vector<1x1x8x512xf32> to vector<8x512xf32>
    %c0_87 = arith.constant 0 : index
    %c0_88 = arith.constant 0 : index
    %195 = vector.load %arg3[%c0_87, %c0_88] : memref<128x512xf32, #tpu.memory_space<vmem>>, vector<128x512xf32>
    %cst_89 = arith.constant dense<0.000000e+00> : vector<8x512xf32>
    %196 = tpu.matmul %185, %195, %cst_89 {dimension_numbers = #tpu.dot_dimension_numbers<[1], [0], [0], [1], [0, 0, 1, 1], [], []>} : vector<8x128xf32>, vector<128x512xf32>, vector<8x512xf32> -> vector<8x512xf32>
    %197 = arith.addf %194, %196 : vector<8x512xf32>
    %198 = vector.extract_strided_slice %197 {offsets = [0, 0], sizes = [8, 256], strides = [1, 1]} : vector<8x512xf32> to vector<8x256xf32>
    %cst_90 = arith.constant 5.000000e-01 : f32
    %199 = vector.broadcast %cst_90 : f32 to vector<8x256xf32>
    %200 = arith.mulf %199, %198 : vector<8x256xf32>
    %201 = math.tanh %200 : vector<8x256xf32>
    %cst_91 = arith.constant 5.000000e-01 : f32
    %202 = vector.broadcast %cst_91 : f32 to vector<8x256xf32>
    %203 = arith.mulf %202, %201 : vector<8x256xf32>
    %cst_92 = arith.constant 5.000000e-01 : f32
    %204 = vector.broadcast %cst_92 : f32 to vector<8x256xf32>
    %205 = arith.addf %203, %204 : vector<8x256xf32>
    %206 = vector.extract_strided_slice %205 {offsets = [0, 0], sizes = [8, 128], strides = [1, 1]} : vector<8x256xf32> to vector<8x128xf32>
    %207 = vector.extract_strided_slice %205 {offsets = [0, 128], sizes = [8, 128], strides = [1, 1]} : vector<8x256xf32> to vector<8x128xf32>
    %208 = vector.extract_strided_slice %197 {offsets = [0, 256], sizes = [8, 128], strides = [1, 1]} : vector<8x512xf32> to vector<8x128xf32>
    %209 = math.tanh %208 : vector<8x128xf32>
    %210 = vector.extract_strided_slice %197 {offsets = [0, 384], sizes = [8, 128], strides = [1, 1]} : vector<8x512xf32> to vector<8x128xf32>
    %cst_93 = arith.constant 5.000000e-01 : f32
    %211 = vector.broadcast %cst_93 : f32 to vector<8x128xf32>
    %212 = arith.mulf %211, %210 : vector<8x128xf32>
    %213 = math.tanh %212 : vector<8x128xf32>
    %cst_94 = arith.constant 5.000000e-01 : f32
    %214 = vector.broadcast %cst_94 : f32 to vector<8x128xf32>
    %215 = arith.mulf %214, %213 : vector<8x128xf32>
    %cst_95 = arith.constant 5.000000e-01 : f32
    %216 = vector.broadcast %cst_95 : f32 to vector<8x128xf32>
    %217 = arith.addf %215, %216 : vector<8x128xf32>
    %218 = arith.mulf %207, %183 : vector<8x128xf32>
    %219 = arith.mulf %206, %209 : vector<8x128xf32>
    %220 = arith.addf %218, %219 : vector<8x128xf32>
    %221 = math.tanh %220 : vector<8x128xf32>
    %222 = arith.mulf %217, %221 : vector<8x128xf32>
    %c0_96 = arith.constant 0 : index
    %c0_97 = arith.constant 0 : index
    %223 = arith.index_cast %191 : i32 to index
    %c0_98 = arith.constant 0 : index
    %224 = vector.load %arg4[%c0_96, %c0_97, %223, %c0_98] : memref<1x1x64x128xf32, #tpu.memory_space<vmem>>, vector<1x1x8x128xf32>
    %225 = vector.shape_cast %224 : vector<1x1x8x128xf32> to vector<8x128xf32>
    %226 = vector.shape_cast %222 : vector<8x128xf32> to vector<1x1x8x128xf32>
    tpu.vector_store %arg4[%c0_96, %c0_97, %223, %c0_98], %226 {strides = array<i32>} : memref<1x1x64x128xf32, #tpu.memory_space<vmem>>, vector<1x1x8x128xf32>,
    %c6_i32 = arith.constant 6 : i32
    %c8_i32_99 = arith.constant 8 : i32
    %227 = arith.muli %c6_i32, %c8_i32_99 : i32
    %228 = tpu.assume_multiple %227, 8 : i32
    %c0_100 = arith.constant 0 : index
    %c0_101 = arith.constant 0 : index
    %229 = arith.index_cast %228 : i32 to index
    %c0_102 = arith.constant 0 : index
    %230 = vector.load %arg2[%c0_100, %c0_101, %229, %c0_102] : memref<1x1x64x512xf32, #tpu.memory_space<vmem>>, vector<1x1x8x512xf32>
    %231 = vector.shape_cast %230 : vector<1x1x8x512xf32> to vector<8x512xf32>
    %c0_103 = arith.constant 0 : index
    %c0_104 = arith.constant 0 : index
    %232 = vector.load %arg3[%c0_103, %c0_104] : memref<128x512xf32, #tpu.memory_space<vmem>>, vector<128x512xf32>
    %cst_105 = arith.constant dense<0.000000e+00> : vector<8x512xf32>
    %233 = tpu.matmul %222, %232, %cst_105 {dimension_numbers = #tpu.dot_dimension_numbers<[1], [0], [0], [1], [0, 0, 1, 1], [], []>} : vector<8x128xf32>, vector<128x512xf32>, vector<8x512xf32> -> vector<8x512xf32>
    %234 = arith.addf %231, %233 : vector<8x512xf32>
    %235 = vector.extract_strided_slice %234 {offsets = [0, 0], sizes = [8, 256], strides = [1, 1]} : vector<8x512xf32> to vector<8x256xf32>
    %cst_106 = arith.constant 5.000000e-01 : f32
    %236 = vector.broadcast %cst_106 : f32 to vector<8x256xf32>
    %237 = arith.mulf %236, %235 : vector<8x256xf32>
    %238 = math.tanh %237 : vector<8x256xf32>
    %cst_107 = arith.constant 5.000000e-01 : f32
    %239 = vector.broadcast %cst_107 : f32 to vector<8x256xf32>
    %240 = arith.mulf %239, %238 : vector<8x256xf32>
    %cst_108 = arith.constant 5.000000e-01 : f32
    %241 = vector.broadcast %cst_108 : f32 to vector<8x256xf32>
    %242 = arith.addf %240, %241 : vector<8x256xf32>
    %243 = vector.extract_strided_slice %242 {offsets = [0, 0], sizes = [8, 128], strides = [1, 1]} : vector<8x256xf32> to vector<8x128xf32>
    %244 = vector.extract_strided_slice %242 {offsets = [0, 128], sizes = [8, 128], strides = [1, 1]} : vector<8x256xf32> to vector<8x128xf32>
    %245 = vector.extract_strided_slice %234 {offsets = [0, 256], sizes = [8, 128], strides = [1, 1]} : vector<8x512xf32> to vector<8x128xf32>
    %246 = math.tanh %245 : vector<8x128xf32>
    %247 = vector.extract_strided_slice %234 {offsets = [0, 384], sizes = [8, 128], strides = [1, 1]} : vector<8x512xf32> to vector<8x128xf32>
    %cst_109 = arith.constant 5.000000e-01 : f32
    %248 = vector.broadcast %cst_109 : f32 to vector<8x128xf32>
    %249 = arith.mulf %248, %247 : vector<8x128xf32>
    %250 = math.tanh %249 : vector<8x128xf32>
    %cst_110 = arith.constant 5.000000e-01 : f32
    %251 = vector.broadcast %cst_110 : f32 to vector<8x128xf32>
    %252 = arith.mulf %251, %250 : vector<8x128xf32>
    %cst_111 = arith.constant 5.000000e-01 : f32
    %253 = vector.broadcast %cst_111 : f32 to vector<8x128xf32>
    %254 = arith.addf %252, %253 : vector<8x128xf32>
    %255 = arith.mulf %244, %220 : vector<8x128xf32>
    %256 = arith.mulf %243, %246 : vector<8x128xf32>
    %257 = arith.addf %255, %256 : vector<8x128xf32>
    %258 = math.tanh %257 : vector<8x128xf32>
    %259 = arith.mulf %254, %258 : vector<8x128xf32>
    %c0_112 = arith.constant 0 : index
    %c0_113 = arith.constant 0 : index
    %260 = arith.index_cast %228 : i32 to index
    %c0_114 = arith.constant 0 : index
    %261 = vector.load %arg4[%c0_112, %c0_113, %260, %c0_114] : memref<1x1x64x128xf32, #tpu.memory_space<vmem>>, vector<1x1x8x128xf32>
    %262 = vector.shape_cast %261 : vector<1x1x8x128xf32> to vector<8x128xf32>
    %263 = vector.shape_cast %259 : vector<8x128xf32> to vector<1x1x8x128xf32>
    tpu.vector_store %arg4[%c0_112, %c0_113, %260, %c0_114], %263 {strides = array<i32>} : memref<1x1x64x128xf32, #tpu.memory_space<vmem>>, vector<1x1x8x128xf32>,
    %c7_i32 = arith.constant 7 : i32
    %c8_i32_115 = arith.constant 8 : i32
    %264 = arith.muli %c7_i32, %c8_i32_115 : i32
    %265 = tpu.assume_multiple %264, 8 : i32
    %c0_116 = arith.constant 0 : index
    %c0_117 = arith.constant 0 : index
    %266 = arith.index_cast %265 : i32 to index
    %c0_118 = arith.constant 0 : index
    %267 = vector.load %arg2[%c0_116, %c0_117, %266, %c0_118] : memref<1x1x64x512xf32, #tpu.memory_space<vmem>>, vector<1x1x8x512xf32>
    %268 = vector.shape_cast %267 : vector<1x1x8x512xf32> to vector<8x512xf32>
    %c0_119 = arith.constant 0 : index
    %c0_120 = arith.constant 0 : index
    %269 = vector.load %arg3[%c0_119, %c0_120] : memref<128x512xf32, #tpu.memory_space<vmem>>, vector<128x512xf32>
    %cst_121 = arith.constant dense<0.000000e+00> : vector<8x512xf32>
    %270 = tpu.matmul %259, %269, %cst_121 {dimension_numbers = #tpu.dot_dimension_numbers<[1], [0], [0], [1], [0, 0, 1, 1], [], []>} : vector<8x128xf32>, vector<128x512xf32>, vector<8x512xf32> -> vector<8x512xf32>
    %271 = arith.addf %268, %270 : vector<8x512xf32>
    %272 = vector.extract_strided_slice %271 {offsets = [0, 0], sizes = [8, 256], strides = [1, 1]} : vector<8x512xf32> to vector<8x256xf32>
    %cst_122 = arith.constant 5.000000e-01 : f32
    %273 = vector.broadcast %cst_122 : f32 to vector<8x256xf32>
    %274 = arith.mulf %273, %272 : vector<8x256xf32>
    %275 = math.tanh %274 : vector<8x256xf32>
    %cst_123 = arith.constant 5.000000e-01 : f32
    %276 = vector.broadcast %cst_123 : f32 to vector<8x256xf32>
    %277 = arith.mulf %276, %275 : vector<8x256xf32>
    %cst_124 = arith.constant 5.000000e-01 : f32
    %278 = vector.broadcast %cst_124 : f32 to vector<8x256xf32>
    %279 = arith.addf %277, %278 : vector<8x256xf32>
    %280 = vector.extract_strided_slice %279 {offsets = [0, 0], sizes = [8, 128], strides = [1, 1]} : vector<8x256xf32> to vector<8x128xf32>
    %281 = vector.extract_strided_slice %279 {offsets = [0, 128], sizes = [8, 128], strides = [1, 1]} : vector<8x256xf32> to vector<8x128xf32>
    %282 = vector.extract_strided_slice %271 {offsets = [0, 256], sizes = [8, 128], strides = [1, 1]} : vector<8x512xf32> to vector<8x128xf32>
    %283 = math.tanh %282 : vector<8x128xf32>
    %284 = vector.extract_strided_slice %271 {offsets = [0, 384], sizes = [8, 128], strides = [1, 1]} : vector<8x512xf32> to vector<8x128xf32>
    %cst_125 = arith.constant 5.000000e-01 : f32
    %285 = vector.broadcast %cst_125 : f32 to vector<8x128xf32>
    %286 = arith.mulf %285, %284 : vector<8x128xf32>
    %287 = math.tanh %286 : vector<8x128xf32>
    %cst_126 = arith.constant 5.000000e-01 : f32
    %288 = vector.broadcast %cst_126 : f32 to vector<8x128xf32>
    %289 = arith.mulf %288, %287 : vector<8x128xf32>
    %cst_127 = arith.constant 5.000000e-01 : f32
    %290 = vector.broadcast %cst_127 : f32 to vector<8x128xf32>
    %291 = arith.addf %289, %290 : vector<8x128xf32>
    %292 = arith.mulf %281, %257 : vector<8x128xf32>
    %293 = arith.mulf %280, %283 : vector<8x128xf32>
    %294 = arith.addf %292, %293 : vector<8x128xf32>
    %295 = math.tanh %294 : vector<8x128xf32>
    %296 = arith.mulf %291, %295 : vector<8x128xf32>
    %c0_128 = arith.constant 0 : index
    %c0_129 = arith.constant 0 : index
    %297 = arith.index_cast %265 : i32 to index
    %c0_130 = arith.constant 0 : index
    %298 = vector.load %arg4[%c0_128, %c0_129, %297, %c0_130] : memref<1x1x64x128xf32, #tpu.memory_space<vmem>>, vector<1x1x8x128xf32>
    %299 = vector.shape_cast %298 : vector<1x1x8x128xf32> to vector<8x128xf32>
    %300 = vector.shape_cast %296 : vector<8x128xf32> to vector<1x1x8x128xf32>
    tpu.vector_store %arg4[%c0_128, %c0_129, %297, %c0_130], %300 {strides = array<i32>} : memref<1x1x64x128xf32, #tpu.memory_space<vmem>>, vector<1x1x8x128xf32>,
    %c8_i32_131 = arith.constant 8 : i32
    %c0_132 = arith.constant 0 : index
    %c0_133 = arith.constant 0 : index
    %301 = vector.load %arg5[%c0_132, %c0_133] : memref<8x128xf32, #tpu.memory_space<vmem>>, vector<8x128xf32>
    tpu.vector_store %arg5[%c0_132, %c0_133], %296 {strides = array<i32>} : memref<8x128xf32, #tpu.memory_space<vmem>>, vector<8x128xf32>,
    %c0_134 = arith.constant 0 : index
    %c0_135 = arith.constant 0 : index
    %302 = vector.load %arg6[%c0_134, %c0_135] : memref<8x128xf32, #tpu.memory_space<vmem>>, vector<8x128xf32>
    tpu.vector_store %arg6[%c0_134, %c0_135], %294 {strides = array<i32>} : memref<8x128xf32, #tpu.memory_space<vmem>>, vector<8x128xf32>,
    return
  }
  func.func @transform_0(%arg0: i32, %arg1: i32) -> (i32, i32, i32, i32) {
    %c0_i32 = arith.constant 0 : i32
    %c0_i32_0 = arith.constant 0 : i32
    %c0_i32_1 = arith.constant 0 : i32
    return %arg0, %arg1, %c0_i32, %c0_i32_0 : i32, i32, i32, i32
  }
  func.func @transform_1(%arg0: i32, %arg1: i32) -> (i32, i32) {
    %c0_i32 = arith.constant 0 : i32
    %c0_i32_0 = arith.constant 0 : i32
    %c0_i32_1 = arith.constant 0 : i32
    return %c0_i32, %c0_i32_0 : i32, i32
  }
  func.func @transform_2(%arg0: i32, %arg1: i32) -> (i32, i32, i32, i32) {
    %c0_i32 = arith.constant 0 : i32
    %c0_i32_0 = arith.constant 0 : i32
    %c0_i32_1 = arith.constant 0 : i32
    return %arg0, %arg1, %c0_i32, %c0_i32_0 : i32, i32, i32, i32
  }
}

</mosaic_0001>

<llo_original>
// kernel: pc_lstm_forward.2
$region0: #{pc_lstm_forward.2}
  #allocation0 [shape = 'u32[]', space=smem, size = 0x4, offset = 0x4, fixed_abs, tag = 'smem constant byte address 0x4 - core index']
  #allocation1 [shape = 'u32[72,128]{1,0:T(1,128)}', space=vmem, size = 0x9000, scoped, tag = 'internal scratch']
  #allocation2 [shape = 'f32[8,128]{1,0:T(8,128)}', space=vmem, size = 0x1000, scoped, tag = 'scratch operand']
  #allocation3 [shape = 'f32[8,128]{1,0:T(8,128)}', space=vmem, size = 0x1000, scoped, tag = 'scratch operand']
  %s0 = inlined_call_operand.vmem [shape: f32[1,1,64,512], index: 0, kind: input, shape index: {}]
  %s1 = inlined_call_operand.hbm [shape: f32[128,512], index: 1, kind: input, shape index: {}]
  %s2 = inlined_call_operand.vmem [shape: f32[1,1,64,128], index: 2, kind: output, shape index: {}]
  %s3 = sld [smem:[#allocation0]]
  $region26: #{pc_lstm_forward.2} parent=0
    _
  %s5 = ssub.s32 1, %s3
  %s6 = scalar_select 0, %s5, %s3
  $region1: #{pc_lstm_forward.2} parent=0
    #allocation4 [shape = 'u8[262144]{0}', space=vmem, size = 0x40000, scoped, tag = 'input window, operand 1, single buffered']
    #allocation5 [shape = 's32[1]{0}', space=sflag, size = 0x4, scoped, tag = 'scoped memory for pc_lstm_forward.2']
    %7 = vsyncpa [#allocation5], 0
    // Predicated region
    $region2: #{pc_lstm_forward.2} parent=1 // pred_check
      _
    $region3: #{pc_lstm_forward.2} parent=1 // pred_check_branch
      %9 = sbr.rel (0) target = $region5
    $region4: #{pc_lstm_forward.2} parent=1 // pred_region
      _
    $region5: #{pc_lstm_forward.2} parent=1 // pred_fallthru
      _
    // Predicated region
    $region6: #{pc_lstm_forward.2} parent=1 // pred_check
      _
    $region7: #{pc_lstm_forward.2} parent=1 // pred_check_branch
      %11 = sbr.rel (0) target = $region9
    $region8: #{pc_lstm_forward.2} parent=1 // pred_region
      %13 = vsyncadd [#allocation5], 0
      %s14 = sshll.u32 %s1, 4
      %s15 = int_to_ptr.hbm [resolvable:$true] %s14
      %s16 = sshll.u32 [#allocation4], 4
      %s17 = int_to_ptr.vmem [resolvable:$true] %s16
      %22 = dma.hbm_to_vmem [thread:$0]  %s15, 8192, %s17, [#allocation5], 512, 512, 32
    $region9: #{pc_lstm_forward.2} parent=1 // pred_fallthru
      _
    // Predicated region
    $region10: #{pc_lstm_forward.2} parent=1 // pred_check
      _
    $region11: #{pc_lstm_forward.2} parent=1 // pred_check_branch
      %24 = sbr.rel (0) target = $region13
    $region12: #{pc_lstm_forward.2} parent=1 // pred_region
      %26 = dma.done [#allocation5], 8192
    $region13: #{pc_lstm_forward.2} parent=1 // pred_fallthru
      _
    %p27 = scmp.eq.s32.totalorder 0, 0
    // Predicated region
    $region14: #{pc_lstm_forward.2} parent=1 // pred_check
      %p28 = pneg %p27
    $region15: #{pc_lstm_forward.2} parent=1 // pred_check_branch
      %30 = sbr.rel (%p28) target = $region17
    $region16: #{pc_lstm_forward.2} parent=1 // pred_region
      %31 = vst [vmem:[#allocation2] sm:$0xff] 0.0
      %32 = vst [vmem:[#allocation3] sm:$0xff] 0.0
    $region17: #{pc_lstm_forward.2} parent=1 // pred_fallthru
      _
    %v33 = vld [vmem:[#allocation2] sm:$0xff]
    %v34 = vld [vmem:[#allocation3] sm:$0xff]
    %s35 = smul.u32 0, 4
    %s36 = smul.addr %s35, 8
    %s37 = scalar_lea.vmem %s0, %s36
    %v38 = vld [vmem:[%s37] sm:$0xff]
    %v39 = vld [vmem:[%s37 + $0x8] sm:$0xff]
    %v40 = vld [vmem:[%s37 + $0x10] sm:$0xff]
    %v41 = vld [vmem:[%s37 + $0x18] sm:$0xff]
    %v42 = vld [vmem:[#allocation4] sm:$0xff]
    %v43 = vld [vmem:[#allocation4 + $0x8] sm:$0xff]
    %v44 = vld [vmem:[#allocation4 + $0x10] sm:$0xff]
    %v45 = vld [vmem:[#allocation4 + $0x18] sm:$0xff]
    %v46 = vld [vmem:[#allocation4 + $0x20] sm:$0xff]
    %v47 = vld [vmem:[#allocation4 + $0x28] sm:$0xff]
    %v48 = vld [vmem:[#allocation4 + $0x30] sm:$0xff]
    %v49 = vld [vmem:[#allocation4 + $0x38] sm:$0xff]
    %v50 = vld [vmem:[#allocation4 + $0x40] sm:$0xff]
    %v51 = vld [vmem:[#allocation4 + $0x48] sm:$0xff]
    %v52 = vld [vmem:[#allocation4 + $0x50] sm:$0xff]
    %v53 = vld [vmem:[#allocation4 + $0x58] sm:$0xff]
    %v54 = vld [vmem:[#allocation4 + $0x60] sm:$0xff]
    %v55 = vld [vmem:[#allocation4 + $0x68] sm:$0xff]
    %v56 = vld [vmem:[#allocation4 + $0x70] sm:$0xff]
    %v57 = vld [vmem:[#allocation4 + $0x78] sm:$0xff]
    %v58 = vld [vmem:[#allocation4 + $0x80] sm:$0xff]
    %v59 = vld [vmem:[#allocation4 + $0x88] sm:$0xff]
    %v60 = vld [vmem:[#allocation4 + $0x90] sm:$0xff]
    %v61 = vld [vmem:[#allocation4 + $0x98] sm:$0xff]
    %v62 = vld [vmem:[#allocation4 + $0xa0] sm:$0xff]
    %v63 = vld [vmem:[#allocation4 + $0xa8] sm:$0xff]
    %v64 = vld [vmem:[#allocation4 + $0xb0] sm:$0xff]
    %v65 = vld [vmem:[#allocation4 + $0xb8] sm:$0xff]
    %v66 = vld [vmem:[#allocation4 + $0xc0] sm:$0xff]
    %v67 = vld [vmem:[#allocation4 + $0xc8] sm:$0xff]
    %v68 = vld [vmem:[#allocation4 + $0xd0] sm:$0xff]
    %v69 = vld [vmem:[#allocation4 + $0xd8] sm:$0xff]
    %v70 = vld [vmem:[#allocation4 + $0xe0] sm:$0xff]
    %v71 = vld [vmem:[#allocation4 + $0xe8] sm:$0xff]
    %v72 = vld [vmem:[#allocation4 + $0xf0] sm:$0xff]
    %v73 = vld [vmem:[#allocation4 + $0xf8] sm:$0xff]
    %v74 = vld [vmem:[#allocation4 + $0x100] sm:$0xff]
    %v75 = vld [vmem:[#allocation4 + $0x108] sm:$0xff]
    %v76 = vld [vmem:[#allocation4 + $0x110] sm:$0xff]
    %v77 = vld [vmem:[#allocation4 + $0x118] sm:$0xff]
    %v78 = vld [vmem:[#allocation4 + $0x120] sm:$0xff]
    %v79 = vld [vmem:[#allocation4 + $0x128] sm:$0xff]
    %v80 = vld [vmem:[#allocation4 + $0x130] sm:$0xff]
    %v81 = vld [vmem:[#allocation4 + $0x138] sm:$0xff]
    %v82 = vld [vmem:[#allocation4 + $0x140] sm:$0xff]
    %v83 = vld [vmem:[#allocation4 + $0x148] sm:$0xff]
    %v84 = vld [vmem:[#allocation4 + $0x150] sm:$0xff]
    %v85 = vld [vmem:[#allocation4 + $0x158] sm:$0xff]
    %v86 = vld [vmem:[#allocation4 + $0x160] sm:$0xff]
    %v87 = vld [vmem:[#allocation4 + $0x168] sm:$0xff]
    %v88 = vld [vmem:[#allocation4 + $0x170] sm:$0xff]
    %v89 = vld [vmem:[#allocation4 + $0x178] sm:$0xff]
    %v90 = vld [vmem:[#allocation4 + $0x180] sm:$0xff]
    %v91 = vld [vmem:[#allocation4 + $0x188] sm:$0xff]
    %v92 = vld [vmem:[#allocation4 + $0x190] sm:$0xff]
    %v93 = vld [vmem:[#allocation4 + $0x198] sm:$0xff]
    %v94 = vld [vmem:[#allocation4 + $0x1a0] sm:$0xff]
    %v95 = vld [vmem:[#allocation4 + $0x1a8] sm:$0xff]
    %v96 = vld [vmem:[#allocation4 + $0x1b0] sm:$0xff]
    %v97 = vld [vmem:[#allocation4 + $0x1b8] sm:$0xff]
    %v98 = vld [vmem:[#allocation4 + $0x1c0] sm:$0xff]
    %v99 = vld [vmem:[#allocation4 + $0x1c8] sm:$0xff]
    %v100 = vld [vmem:[#allocation4 + $0x1d0] sm:$0xff]
    %v101 = vld [vmem:[#allocation4 + $0x1d8] sm:$0xff]
    %v102 = vld [vmem:[#allocation4 + $0x1e0] sm:$0xff]
    %v103 = vld [vmem:[#allocation4 + $0x1e8] sm:$0xff]
    %v104 = vld [vmem:[#allocation4 + $0x1f0] sm:$0xff]
    %v105 = vld [vmem:[#allocation4 + $0x1f8] sm:$0xff]
    %106 = vmatpush.msra.mxu0 %v102
    %107 = vmatpush.msra.mxu0 %v98
    %108 = vmatpush.msra.mxu0 %v94
    %109 = vmatpush.msra.mxu0 %v90
    %110 = vmatpush.msra.mxu0 %v86
    %111 = vmatpush.msra.mxu0 %v82
    %112 = vmatpush.msra.mxu0 %v78
    %113 = vmatpush.msra.mxu0 %v74
    %114 = vmatpush.msra.mxu0 %v70
    %115 = vmatpush.msra.mxu0 %v66
    %116 = vmatpush.msra.mxu0 %v62
    %117 = vmatpush.msra.mxu0 %v58
    %118 = vmatpush.msra.mxu0 %v54
    %119 = vmatpush.msra.mxu0 %v50
    %120 = vmatpush.msra.mxu0 %v46
    %121 = vmatpush.msra.mxu0 %v42
    %122 = vmatmul.f32.gmra.mxu0 %v33
    %v123 = vpop.f32.mrf.mxu0
    %v124 = vadd.f32 0.0, %v123
    %125 = vdwg.mxu0
    %126 = vmatpush.msra.mxu0 %v103
    %127 = vmatpush.msra.mxu0 %v99
    %128 = vmatpush.msra.mxu0 %v95
    %129 = vmatpush.msra.mxu0 %v91
    %130 = vmatpush.msra.mxu0 %v87
    %131 = vmatpush.msra.mxu0 %v83
    %132 = vmatpush.msra.mxu0 %v79
    %133 = vmatpush.msra.mxu0 %v75
    %134 = vmatpush.msra.mxu0 %v71
    %135 = vmatpush.msra.mxu0 %v67
    %136 = vmatpush.msra.mxu0 %v63
    %137 = vmatpush.msra.mxu0 %v59
    %138 = vmatpush.msra.mxu0 %v55
    %139 = vmatpush.msra.mxu0 %v51
    %140 = vmatpush.msra.mxu0 %v47
    %141 = vmatpush.msra.mxu0 %v43
    %142 = vmatmul.f32.gmra.mxu0 %v33
    %v143 = vpop.f32.mrf.mxu0
    %v144 = vadd.f32 0.0, %v143
    %145 = vdwg.mxu0
    %146 = vmatpush.msra.mxu0 %v104
    %147 = vmatpush.msra.mxu0 %v100
    %148 = vmatpush.msra.mxu0 %v96
    %149 = vmatpush.msra.mxu0 %v92
    %150 = vmatpush.msra.mxu0 %v88
    %151 = vmatpush.msra.mxu0 %v84
    %152 = vmatpush.msra.mxu0 %v80
    %153 = vmatpush.msra.mxu0 %v76
    %154 = vmatpush.msra.mxu0 %v72
    %155 = vmatpush.msra.mxu0 %v68
    %156 = vmatpush.msra.mxu0 %v64
    %157 = vmatpush.msra.mxu0 %v60
    %158 = vmatpush.msra.mxu0 %v56
    %159 = vmatpush.msra.mxu0 %v52
    %160 = vmatpush.msra.mxu0 %v48
    %161 = vmatpush.msra.mxu0 %v44
    %162 = vmatmul.f32.gmra.mxu0 %v33
    %v163 = vpop.f32.mrf.mxu0
    %v164 = vadd.f32 0.0, %v163
    %165 = vdwg.mxu0
    %166 = vmatpush.msra.mxu0 %v105
    %167 = vmatpush.msra.mxu0 %v101
    %168 = vmatpush.msra.mxu0 %v97
    %169 = vmatpush.msra.mxu0 %v93
    %170 = vmatpush.msra.mxu0 %v89
    %171 = vmatpush.msra.mxu0 %v85
    %172 = vmatpush.msra.mxu0 %v81
    %173 = vmatpush.msra.mxu0 %v77
    %174 = vmatpush.msra.mxu0 %v73
    %175 = vmatpush.msra.mxu0 %v69
    %176 = vmatpush.msra.mxu0 %v65
    %177 = vmatpush.msra.mxu0 %v61
    %178 = vmatpush.msra.mxu0 %v57
    %179 = vmatpush.msra.mxu0 %v53
    %180 = vmatpush.msra.mxu0 %v49
    %181 = vmatpush.msra.mxu0 %v45
    %182 = vmatmul.f32.gmra.mxu0 %v33
    %v183 = vpop.f32.mrf.mxu0
    %v184 = vadd.f32 0.0, %v183
    %185 = vdwg.mxu0
    %v186 = vadd.f32 %v38, %v124
    %v187 = vadd.f32 %v39, %v144
    %v188 = vadd.f32 %v40, %v164
    %v189 = vadd.f32 %v41, %v184
    %v190 = vmul.f32 %v186, 0.5
    %v191 = vmul.f32 %v187, 0.5
    %v192 = vtanh.pop %v190
    %v193 = vtanh.pop %v191
    %v194 = vmul.f32 %v192, 0.5
    %v195 = vmul.f32 %v193, 0.5
    %v196 = vadd.f32 %v194, 0.5
    %v197 = vadd.f32 %v195, 0.5
    %v198 = vtanh.pop %v188
    %v199 = vmul.f32 %v189, 0.5
    %v200 = vtanh.pop %v199
    %v201 = vmul.f32 %v200, 0.5
    %v202 = vadd.f32 %v201, 0.5
    %v203 = vmul.f32 %v197, %v34
    %v204 = vmul.f32 %v196, %v198
    %v205 = vadd.f32 %v203, %v204
    %v206 = vtanh.pop %v205
    %v207 = vmul.f32 %v202, %v206
    %208 = vst [vmem:[%s2] sm:$0xff] %v207
    %s209 = smul.u32 1, 4
    %s210 = smul.addr %s209, 8
    %s211 = scalar_lea.vmem %s0, %s210
    %v212 = vld [vmem:[%s211] sm:$0xff]
    %v213 = vld [vmem:[%s211 + $0x8] sm:$0xff]
    %v214 = vld [vmem:[%s211 + $0x10] sm:$0xff]
    %v215 = vld [vmem:[%s211 + $0x18] sm:$0xff]
    %v216 = vld [vmem:[#allocation4] sm:$0xff]
    %v217 = vld [vmem:[#allocation4 + $0x8] sm:$0xff]
    %v218 = vld [vmem:[#allocation4 + $0x10] sm:$0xff]
    %v219 = vld [vmem:[#allocation4 + $0x18] sm:$0xff]
    %v220 = vld [vmem:[#allocation4 + $0x20] sm:$0xff]
    %v221 = vld [vmem:[#allocation4 + $0x28] sm:$0xff]
    %v222 = vld [vmem:[#allocation4 + $0x30] sm:$0xff]
    %v223 = vld [vmem:[#allocation4 + $0x38] sm:$0xff]
    %v224 = vld [vmem:[#allocation4 + $0x40] sm:$0xff]
    %v225 = vld [vmem:[#allocation4 + $0x48] sm:$0xff]
    %v226 = vld [vmem:[#allocation4 + $0x50] sm:$0xff]
    %v227 = vld [vmem:[#allocation4 + $0x58] sm:$0xff]
    %v228 = vld [vmem:[#allocation4 + $0x60] sm:$0xff]
    %v229 = vld [vmem:[#allocation4 + $0x68] sm:$0xff]
    %v230 = vld [vmem:[#allocation4 + $0x70] sm:$0xff]
    %v231 = vld [vmem:[#allocation4 + $0x78] sm:$0xff]
    %v232 = vld [vmem:[#allocation4 + $0x80] sm:$0xff]
    %v233 = vld [vmem:[#allocation4 + $0x88] sm:$0xff]
    %v234 = vld [vmem:[#allocation4 + $0x90] sm:$0xff]
    %v235 = vld [vmem:[#allocation4 + $0x98] sm:$0xff]
    %v236 = vld [vmem:[#allocation4 + $0xa0] sm:$0xff]
    %v237 = vld [vmem:[#allocation4 + $0xa8] sm:$0xff]
    %v238 = vld [vmem:[#allocation4 + $0xb0] sm:$0xff]
    %v239 = vld [vmem:[#allocation4 + $0xb8] sm:$0xff]
    %v240 = vld [vmem:[#allocation4 + $0xc0] sm:$0xff]
    %v241 = vld [vmem:[#allocation4 + $0xc8] sm:$0xff]
    %v242 = vld [vmem:[#allocation4 + $0xd0] sm:$0xff]
    %v243 = vld [vmem:[#allocation4 + $0xd8] sm:$0xff]
    %v244 = vld [vmem:[#allocation4 + $0xe0] sm:$0xff]
    %v245 = vld [vmem:[#allocation4 + $0xe8] sm:$0xff]
    %v246 = vld [vmem:[#allocation4 + $0xf0] sm:$0xff]
    %v247 = vld [vmem:[#allocation4 + $0xf8] sm:$0xff]
    %v248 = vld [vmem:[#allocation4 + $0x100] sm:$0xff]
    %v249 = vld [vmem:[#allocation4 + $0x108] sm:$0xff]
    %v250 = vld [vmem:[#allocation4 + $0x110] sm:$0xff]
    %v251 = vld [vmem:[#allocation4 + $0x118] sm:$0xff]
    %v252 = vld [vmem:[#allocation4 + $0x120] sm:$0xff]
    %v253 = vld [vmem:[#allocation4 + $0x128] sm:$0xff]
    %v254 = vld [vmem:[#allocation4 + $0x130] sm:$0xff]
    %v255 = vld [vmem:[#allocation4 + $0x138] sm:$0xff]
    %v256 = vld [vmem:[#allocation4 + $0x140] sm:$0xff]
    %v257 = vld [vmem:[#allocation4 + $0x148] sm:$0xff]
    %v258 = vld [vmem:[#allocation4 + $0x150] sm:$0xff]
    %v259 = vld [vmem:[#allocation4 + $0x158] sm:$0xff]
    %v260 = vld [vmem:[#allocation4 + $0x160] sm:$0xff]
    %v261 = vld [vmem:[#allocation4 + $0x168] sm:$0xff]
    %v262 = vld [vmem:[#allocation4 + $0x170] sm:$0xff]
    %v263 = vld [vmem:[#allocation4 + $0x178] sm:$0xff]
    %v264 = vld [vmem:[#allocation4 + $0x180] sm:$0xff]
    %v265 = vld [vmem:[#allocation4 + $0x188] sm:$0xff]
    %v266 = vld [vmem:[#allocation4 + $0x190] sm:$0xff]
    %v267 = vld [vmem:[#allocation4 + $0x198] sm:$0xff]
    %v268 = vld [vmem:[#allocation4 + $0x1a0] sm:$0xff]
    %v269 = vld [vmem:[#allocation4 + $0x1a8] sm:$0xff]
    %v270 = vld [vmem:[#allocation4 + $0x1b0] sm:$0xff]
    %v271 = vld [vmem:[#allocation4 + $0x1b8] sm:$0xff]
    %v272 = vld [vmem:[#allocation4 + $0x1c0] sm:$0xff]
    %v273 = vld [vmem:[#allocation4 + $0x1c8] sm:$0xff]
    %v274 = vld [vmem:[#allocation4 + $0x1d0] sm:$0xff]
    %v275 = vld [vmem:[#allocation4 + $0x1d8] sm:$0xff]
    %v276 = vld [vmem:[#allocation4 + $0x1e0] sm:$0xff]
    %v277 = vld [vmem:[#allocation4 + $0x1e8] sm:$0xff]
    %v278 = vld [vmem:[#allocation4 + $0x1f0] sm:$0xff]
    %v279 = vld [vmem:[#allocation4 + $0x1f8] sm:$0xff]
    %280 = vmatpush.msra.mxu0 %v276
    %281 = vmatpush.msra.mxu0 %v272
    %282 = vmatpush.msra.mxu0 %v268
    %283 = vmatpush.msra.mxu0 %v264
    %284 = vmatpush.msra.mxu0 %v260
    %285 = vmatpush.msra.mxu0 %v256
    %286 = vmatpush.msra.mxu0 %v252
    %287 = vmatpush.msra.mxu0 %v248
    %288 = vmatpush.msra.mxu0 %v244
    %289 = vmatpush.msra.mxu0 %v240
    %290 = vmatpush.msra.mxu0 %v236
    %291 = vmatpush.msra.mxu0 %v232
    %292 = vmatpush.msra.mxu0 %v228
    %293 = vmatpush.msra.mxu0 %v224
    %294 = vmatpush.msra.mxu0 %v220
    %295 = vmatpush.msra.mxu0 %v216
    %296 = vmatmul.f32.gmra.mxu0 %v207
    %v297 = vpop.f32.mrf.mxu0
    %v298 = vadd.f32 0.0, %v297
    %299 = vdwg.mxu0
    %300 = vmatpush.msra.mxu0 %v277
    %301 = vmatpush.msra.mxu0 %v273
    %302 = vmatpush.msra.mxu0 %v269
    %303 = vmatpush.msra.mxu0 %v265
    %304 = vmatpush.msra.mxu0 %v261
    %305 = vmatpush.msra.mxu0 %v257
    %306 = vmatpush.msra.mxu0 %v253
    %307 = vmatpush.msra.mxu0 %v249
    %308 = vmatpush.msra.mxu0 %v245
    %309 = vmatpush.msra.mxu0 %v241
    %310 = vmatpush.msra.mxu0 %v237
    %311 = vmatpush.msra.mxu0 %v233
    %312 = vmatpush.msra.mxu0 %v229
    %313 = vmatpush.msra.mxu0 %v225
    %314 = vmatpush.msra.mxu0 %v221
    %315 = vmatpush.msra.mxu0 %v217
    %316 = vmatmul.f32.gmra.mxu0 %v207
    %v317 = vpop.f32.mrf.mxu0
    %v318 = vadd.f32 0.0, %v317
    %319 = vdwg.mxu0
    %320 = vmatpush.msra.mxu0 %v278
    %321 = vmatpush.msra.mxu0 %v274
    %322 = vmatpush.msra.mxu0 %v270
    %323 = vmatpush.msra.mxu0 %v266
    %324 = vmatpush.msra.mxu0 %v262
    %325 = vmatpush.msra.mxu0 %v258
    %326 = vmatpush.msra.mxu0 %v254
    %327 = vmatpush.msra.mxu0 %v250
    %328 = vmatpush.msra.mxu0 %v246
    %329 = vmatpush.msra.mxu0 %v242
    %330 = vmatpush.msra.mxu0 %v238
    %331 = vmatpush.msra.mxu0 %v234
    %332 = vmatpush.msra.mxu0 %v230
    %333 = vmatpush.msra.mxu0 %v226
    %334 = vmatpush.msra.mxu0 %v222
    %335 = vmatpush.msra.mxu0 %v218
    %336 = vmatmul.f32.gmra.mxu0 %v207
    %v337 = vpop.f32.mrf.mxu0
    %v338 = vadd.f32 0.0, %v337
    %339 = vdwg.mxu0
    %340 = vmatpush.msra.mxu0 %v279
    %341 = vmatpush.msra.mxu0 %v275
    %342 = vmatpush.msra.mxu0 %v271
    %343 = vmatpush.msra.mxu0 %v267
    %344 = vmatpush.msra.mxu0 %v263
    %345 = vmatpush.msra.mxu0 %v259
    %346 = vmatpush.msra.mxu0 %v255
    %347 = vmatpush.msra.mxu0 %v251
    %348 = vmatpush.msra.mxu0 %v247
    %349 = vmatpush.msra.mxu0 %v243
    %350 = vmatpush.msra.mxu0 %v239
    %351 = vmatpush.msra.mxu0 %v235
    %352 = vmatpush.msra.mxu0 %v231
    %353 = vmatpush.msra.mxu0 %v227
    %354 = vmatpush.msra.mxu0 %v223
    %355 = vmatpush.msra.mxu0 %v219
    %356 = vmatmul.f32.gmra.mxu0 %v207
    %v357 = vpop.f32.mrf.mxu0
    %v358 = vadd.f32 0.0, %v357
    %359 = vdwg.mxu0
    %v360 = vadd.f32 %v212, %v298
    %v361 = vadd.f32 %v213, %v318
    %v362 = vadd.f32 %v214, %v338
    %v363 = vadd.f32 %v215, %v358
    %v364 = vmul.f32 %v360, 0.5
    %v365 = vmul.f32 %v361, 0.5
    %v366 = vtanh.pop %v364
    %v367 = vtanh.pop %v365
    %v368 = vmul.f32 %v366, 0.5
    %v369 = vmul.f32 %v367, 0.5
    %v370 = vadd.f32 %v368, 0.5
    %v371 = vadd.f32 %v369, 0.5
    %v372 = vtanh.pop %v362
    %v373 = vmul.f32 %v363, 0.5
    %v374 = vtanh.pop %v373
    %v375 = vmul.f32 %v374, 0.5
    %v376 = vadd.f32 %v375, 0.5
    %v377 = vmul.f32 %v371, %v205
    %v378 = vmul.f32 %v370, %v372
    %v379 = vadd.f32 %v377, %v378
    %v380 = vtanh.pop %v379
    %v381 = vmul.f32 %v376, %v380
    %s382 = scalar_lea.vmem %s2, 8
    %383 = vst [vmem:[%s382] sm:$0xff] %v381
    %s384 = smul.u32 2, 4
    %s385 = smul.addr %s384, 8
    %s386 = scalar_lea.vmem %s0, %s385
    %v387 = vld [vmem:[%s386] sm:$0xff]
    %v388 = vld [vmem:[%s386 + $0x8] sm:$0xff]
    %v389 = vld [vmem:[%s386 + $0x10] sm:$0xff]
    %v390 = vld [vmem:[%s386 + $0x18] sm:$0xff]
    %v391 = vld [vmem:[#allocation4] sm:$0xff]
    %v392 = vld [vmem:[#allocation4 + $0x8] sm:$0xff]
    %v393 = vld [vmem:[#allocation4 + $0x10] sm:$0xff]
    %v394 = vld [vmem:[#allocation4 + $0x18] sm:$0xff]
    %v395 = vld [vmem:[#allocation4 + $0x20] sm:$0xff]
    %v396 = vld [vmem:[#allocation4 + $0x28] sm:$0xff]
    %v397 = vld [vmem:[#allocation4 + $0x30] sm:$0xff]
    %v398 = vld [vmem:[#allocation4 + $0x38] sm:$0xff]
    %v399 = vld [vmem:[#allocation4 + $0x40] sm:$0xff]
    %v400 = vld [vmem:[#allocation4 + $0x48] sm:$0xff]
    %v401 = vld [vmem:[#allocation4 + $0x50] sm:$0xff]
    %v402 = vld [vmem:[#allocation4 + $0x58] sm:$0xff]
    %v403 = vld [vmem:[#allocation4 + $0x60] sm:$0xff]
    %v404 = vld [vmem:[#allocation4 + $0x68] sm:$0xff]
    %v405 = vld [vmem:[#allocation4 + $0x70] sm:$0xff]
    %v406 = vld [vmem:[#allocation4 + $0x78] sm:$0xff]
    %v407 = vld [vmem:[#allocation4 + $0x80] sm:$0xff]
    %v408 = vld [vmem:[#allocation4 + $0x88] sm:$0xff]
    %v409 = vld [vmem:[#allocation4 + $0x90] sm:$0xff]
    %v410 = vld [vmem:[#allocation4 + $0x98] sm:$0xff]
    %v411 = vld [vmem:[#allocation4 + $0xa0] sm:$0xff]
    %v412 = vld [vmem:[#allocation4 + $0xa8] sm:$0xff]
    %v413 = vld [vmem:[#allocation4 + $0xb0] sm:$0xff]
    %v414 = vld [vmem:[#allocation4 + $0xb8] sm:$0xff]
    %v415 = vld [vmem:[#allocation4 + $0xc0] sm:$0xff]
    %v416 = vld [vmem:[#allocation4 + $0xc8] sm:$0xff]
    %v417 = vld [vmem:[#allocation4 + $0xd0] sm:$0xff]
    %v418 = vld [vmem:[#allocation4 + $0xd8] sm:$0xff]
    %v419 = vld [vmem:[#allocation4 + $0xe0] sm:$0xff]
    %v420 = vld [vmem:[#allocation4 + $0xe8] sm:$0xff]
    %v421 = vld [vmem:[#allocation4 + $0xf0] sm:$0xff]
    %v422 = vld [vmem:[#allocation4 + $0xf8] sm:$0xff]
    %v423 = vld [vmem:[#allocation4 + $0x100] sm:$0xff]
    %v424 = vld [vmem:[#allocation4 + $0x108] sm:$0xff]
    %v425 = vld [vmem:[#allocation4 + $0x110] sm:$0xff]
    %v426 = vld [vmem:[#allocation4 + $0x118] sm:$0xff]
    %v427 = vld [vmem:[#allocation4 + $0x120] sm:$0xff]
    %v428 = vld [vmem:[#allocation4 + $0x128] sm:$0xff]
    %v429 = vld [vmem:[#allocation4 + $0x130] sm:$0xff]
    %v430 = vld [vmem:[#allocation4 + $0x138] sm:$0xff]
    %v431 = vld [vmem:[#allocation4 + $0x140] sm:$0xff]
    %v432 = vld [vmem:[#allocation4 + $0x148] sm:$0xff]
    %v433 = vld [vmem:[#allocation4 + $0x150] sm:$0xff]
    %v434 = vld [vmem:[#allocation4 + $0x158] sm:$0xff]
    %v435 = vld [vmem:[#allocation4 + $0x160] sm:$0xff]
    %v436 = vld [vmem:[#allocation4 + $0x168] sm:$0xff]
    %v437 = vld [vmem:[#allocation4 + $0x170] sm:$0xff]
    %v438 = vld [vmem:[#allocation4 + $0x178] sm:$0xff]
    %v439 = vld [vmem:[#allocation4 + $0x180] sm:$0xff]
    %v440 = vld [vmem:[#allocation4 + $0x188] sm:$0xff]
    %v441 = vld [vmem:[#allocation4 + $0x190] sm:$0xff]
    %v442 = vld [vmem:[#allocation4 + $0x198] sm:$0xff]
    %v443 = vld [vmem:[#allocation4 + $0x1a0] sm:$0xff]
    %v444 = vld [vmem:[#allocation4 + $0x1a8] sm:$0xff]
    %v445 = vld [vmem:[#allocation4 + $0x1b0] sm:$0xff]
    %v446 = vld [vmem:[#allocation4 + $0x1b8] sm:$0xff]
    %v447 = vld [vmem:[#allocation4 + $0x1c0] sm:$0xff]
    %v448 = vld [vmem:[#allocation4 + $0x1c8] sm:$0xff]
    %v449 = vld [vmem:[#allocation4 + $0x1d0] sm:$0xff]
    %v450 = vld [vmem:[#allocation4 + $0x1d8] sm:$0xff]
    %v451 = vld [vmem:[#allocation4 + $0x1e0] sm:$0xff]
    %v452 = vld [vmem:[#allocation4 + $0x1e8] sm:$0xff]
    %v453 = vld [vmem:[#allocation4 + $0x1f0] sm:$0xff]
    %v454 = vld [vmem:[#allocation4 + $0x1f8] sm:$0xff]
    %455 = vmatpush.msra.mxu0 %v451
    %456 = vmatpush.msra.mxu0 %v447
    %457 = vmatpush.msra.mxu0 %v443
    %458 = vmatpush.msra.mxu0 %v439
    %459 = vmatpush.msra.mxu0 %v435
    %460 = vmatpush.msra.mxu0 %v431
    %461 = vmatpush.msra.mxu0 %v427
    %462 = vmatpush.msra.mxu0 %v423
    %463 = vmatpush.msra.mxu0 %v419
    %464 = vmatpush.msra.mxu0 %v415
    %465 = vmatpush.msra.mxu0 %v411
    %466 = vmatpush.msra.mxu0 %v407
    %467 = vmatpush.msra.mxu0 %v403
    %468 = vmatpush.msra.mxu0 %v399
    %469 = vmatpush.msra.mxu0 %v395
    %470 = vmatpush.msra.mxu0 %v391
    %471 = vmatmul.f32.gmra.mxu0 %v381
    %v472 = vpop.f32.mrf.mxu0
    %v473 = vadd.f32 0.0, %v472
    %474 = vdwg.mxu0
    %475 = vmatpush.msra.mxu0 %v452
    %476 = vmatpush.msra.mxu0 %v448
    %477 = vmatpush.msra.mxu0 %v444
    %478 = vmatpush.msra.mxu0 %v440
    %479 = vmatpush.msra.mxu0 %v436
    %480 = vmatpush.msra.mxu0 %v432
    %481 = vmatpush.msra.mxu0 %v428
    %482 = vmatpush.msra.mxu0 %v424
    %483 = vmatpush.msra.mxu0 %v420
    %484 = vmatpush.msra.mxu0 %v416
    %485 = vmatpush.msra.mxu0 %v412
    %486 = vmatpush.msra.mxu0 %v408
    %487 = vmatpush.msra.mxu0 %v404
    %488 = vmatpush.msra.mxu0 %v400
    %489 = vmatpush.msra.mxu0 %v396
    %490 = vmatpush.msra.mxu0 %v392
    %491 = vmatmul.f32.gmra.mxu0 %v381
    %v492 = vpop.f32.mrf.mxu0
    %v493 = vadd.f32 0.0, %v492
    %494 = vdwg.mxu0
    %495 = vmatpush.msra.mxu0 %v453
    %496 = vmatpush.msra.mxu0 %v449
    %497 = vmatpush.msra.mxu0 %v445
    %498 = vmatpush.msra.mxu0 %v441
    %499 = vmatpush.msra.mxu0 %v437
    %500 = vmatpush.msra.mxu0 %v433
    %501 = vmatpush.msra.mxu0 %v429
    %502 = vmatpush.msra.mxu0 %v425
    %503 = vmatpush.msra.mxu0 %v421
    %504 = vmatpush.msra.mxu0 %v417
    %505 = vmatpush.msra.mxu0 %v413
    %506 = vmatpush.msra.mxu0 %v409
    %507 = vmatpush.msra.mxu0 %v405
    %508 = vmatpush.msra.mxu0 %v401
    %509 = vmatpush.msra.mxu0 %v397
    %510 = vmatpush.msra.mxu0 %v393
    %511 = vmatmul.f32.gmra.mxu0 %v381
    %v512 = vpop.f32.mrf.mxu0
    %v513 = vadd.f32 0.0, %v512
    %514 = vdwg.mxu0
    %515 = vmatpush.msra.mxu0 %v454
    %516 = vmatpush.msra.mxu0 %v450
    %517 = vmatpush.msra.mxu0 %v446
    %518 = vmatpush.msra.mxu0 %v442
    %519 = vmatpush.msra.mxu0 %v438
    %520 = vmatpush.msra.mxu0 %v434
    %521 = vmatpush.msra.mxu0 %v430
    %522 = vmatpush.msra.mxu0 %v426
    %523 = vmatpush.msra.mxu0 %v422
    %524 = vmatpush.msra.mxu0 %v418
    %525 = vmatpush.msra.mxu0 %v414
    %526 = vmatpush.msra.mxu0 %v410
    %527 = vmatpush.msra.mxu0 %v406
    %528 = vmatpush.msra.mxu0 %v402
    %529 = vmatpush.msra.mxu0 %v398
    %530 = vmatpush.msra.mxu0 %v394
    %531 = vmatmul.f32.gmra.mxu0 %v381
    %v532 = vpop.f32.mrf.mxu0
    %v533 = vadd.f32 0.0, %v532
    %534 = vdwg.mxu0
    %v535 = vadd.f32 %v387, %v473
    %v536 = vadd.f32 %v388, %v493
    %v537 = vadd.f32 %v389, %v513
    %v538 = vadd.f32 %v390, %v533
    %v539 = vmul.f32 %v535, 0.5
    %v540 = vmul.f32 %v536, 0.5
    %v541 = vtanh.pop %v539
    %v542 = vtanh.pop %v540
    %v543 = vmul.f32 %v541, 0.5
    %v544 = vmul.f32 %v542, 0.5
    %v545 = vadd.f32 %v543, 0.5
    %v546 = vadd.f32 %v544, 0.5
    %v547 = vtanh.pop %v537
    %v548 = vmul.f32 %v538, 0.5
    %v549 = vtanh.pop %v548
    %v550 = vmul.f32 %v549, 0.5
    %v551 = vadd.f32 %v550, 0.5
    %v552 = vmul.f32 %v546, %v379
    %v553 = vmul.f32 %v545, %v547
    %v554 = vadd.f32 %v552, %v553
    %v555 = vtanh.pop %v554
    %v556 = vmul.f32 %v551, %v555
    %s557 = scalar_lea.vmem %s2, 16
    %558 = vst [vmem:[%s557] sm:$0xff] %v556
    %s559 = smul.u32 3, 4
    %s560 = smul.addr %s559, 8
    %s561 = scalar_lea.vmem %s0, %s560
    %v562 = vld [vmem:[%s561] sm:$0xff]
    %v563 = vld [vmem:[%s561 + $0x8] sm:$0xff]
    %v564 = vld [vmem:[%s561 + $0x10] sm:$0xff]
    %v565 = vld [vmem:[%s561 + $0x18] sm:$0xff]
    %v566 = vld [vmem:[#allocation4] sm:$0xff]
    %v567 = vld [vmem:[#allocation4 + $0x8] sm:$0xff]
    %v568 = vld [vmem:[#allocation4 + $0x10] sm:$0xff]
    %v569 = vld [vmem:[#allocation4 + $0x18] sm:$0xff]
    %v570 = vld [vmem:[#allocation4 + $0x20] sm:$0xff]
    %v571 = vld [vmem:[#allocation4 + $0x28] sm:$0xff]
    %v572 = vld [vmem:[#allocation4 + $0x30] sm:$0xff]
    %v573 = vld [vmem:[#allocation4 + $0x38] sm:$0xff]
    %v574 = vld [vmem:[#allocation4 + $0x40] sm:$0xff]
    %v575 = vld [vmem:[#allocation4 + $0x48] sm:$0xff]
    %v576 = vld [vmem:[#allocation4 + $0x50] sm:$0xff]
    %v577 = vld [vmem:[#allocation4 + $0x58] sm:$0xff]
    %v578 = vld [vmem:[#allocation4 + $0x60] sm:$0xff]
    %v579 = vld [vmem:[#allocation4 + $0x68] sm:$0xff]
    %v580 = vld [vmem:[#allocation4 + $0x70] sm:$0xff]
    %v581 = vld [vmem:[#allocation4 + $0x78] sm:$0xff]
    %v582 = vld [vmem:[#allocation4 + $0x80] sm:$0xff]
    %v583 = vld [vmem:[#allocation4 + $0x88] sm:$0xff]
    %v584 = vld [vmem:[#allocation4 + $0x90] sm:$0xff]
    %v585 = vld [vmem:[#allocation4 + $0x98] sm:$0xff]
    %v586 = vld [vmem:[#allocation4 + $0xa0] sm:$0xff]
    %v587 = vld [vmem:[#allocation4 + $0xa8] sm:$0xff]
    %v588 = vld [vmem:[#allocation4 + $0xb0] sm:$0xff]
    %v589 = vld [vmem:[#allocation4 + $0xb8] sm:$0xff]
    %v590 = vld [vmem:[#allocation4 + $0xc0] sm:$0xff]
    %v591 = vld [vmem:[#allocation4 + $0xc8] sm:$0xff]
    %v592 = vld [vmem:[#allocation4 + $0xd0] sm:$0xff]
    %v593 = vld [vmem:[#allocation4 + $0xd8] sm:$0xff]
    %v594 = vld [vmem:[#allocation4 + $0xe0] sm:$0xff]
    %v595 = vld [vmem:[#allocation4 + $0xe8] sm:$0xff]
    %v596 = vld [vmem:[#allocation4 + $0xf0] sm:$0xff]
    %v597 = vld [vmem:[#allocation4 + $0xf8] sm:$0xff]
    %v598 = vld [vmem:[#allocation4 + $0x100] sm:$0xff]
    %v599 = vld [vmem:[#allocation4 + $0x108] sm:$0xff]
    %v600 = vld [vmem:[#allocation4 + $0x110] sm:$0xff]
    %v601 = vld [vmem:[#allocation4 + $0x118] sm:$0xff]
    %v602 = vld [vmem:[#allocation4 + $0x120] sm:$0xff]
    %v603 = vld [vmem:[#allocation4 + $0x128] sm:$0xff]
    %v604 = vld [vmem:[#allocation4 + $0x130] sm:$0xff]
    %v605 = vld [vmem:[#allocation4 + $0x138] sm:$0xff]
    %v606 = vld [vmem:[#allocation4 + $0x140] sm:$0xff]
    %v607 = vld [vmem:[#allocation4 + $0x148] sm:$0xff]
    %v608 = vld [vmem:[#allocation4 + $0x150] sm:$0xff]
    %v609 = vld [vmem:[#allocation4 + $0x158] sm:$0xff]
    %v610 = vld [vmem:[#allocation4 + $0x160] sm:$0xff]
    %v611 = vld [vmem:[#allocation4 + $0x168] sm:$0xff]
    %v612 = vld [vmem:[#allocation4 + $0x170] sm:$0xff]
    %v613 = vld [vmem:[#allocation4 + $0x178] sm:$0xff]
    %v614 = vld [vmem:[#allocation4 + $0x180] sm:$0xff]
    %v615 = vld [vmem:[#allocation4 + $0x188] sm:$0xff]
    %v616 = vld [vmem:[#allocation4 + $0x190] sm:$0xff]
    %v617 = vld [vmem:[#allocation4 + $0x198] sm:$0xff]
    %v618 = vld [vmem:[#allocation4 + $0x1a0] sm:$0xff]
    %v619 = vld [vmem:[#allocation4 + $0x1a8] sm:$0xff]
    %v620 = vld [vmem:[#allocation4 + $0x1b0] sm:$0xff]
    %v621 = vld [vmem:[#allocation4 + $0x1b8] sm:$0xff]
    %v622 = vld [vmem:[#allocation4 + $0x1c0] sm:$0xff]
    %v623 = vld [vmem:[#allocation4 + $0x1c8] sm:$0xff]
    %v624 = vld [vmem:[#allocation4 + $0x1d0] sm:$0xff]
    %v625 = vld [vmem:[#allocation4 + $0x1d8] sm:$0xff]
    %v626 = vld [vmem:[#allocation4 + $0x1e0] sm:$0xff]
    %v627 = vld [vmem:[#allocation4 + $0x1e8] sm:$0xff]
    %v628 = vld [vmem:[#allocation4 + $0x1f0] sm:$0xff]
    %v629 = vld [vmem:[#allocation4 + $0x1f8] sm:$0xff]
    %630 = vmatpush.msra.mxu0 %v626
    %631 = vmatpush.msra.mxu0 %v622
    %632 = vmatpush.msra.mxu0 %v618
    %633 = vmatpush.msra.mxu0 %v614
    %634 = vmatpush.msra.mxu0 %v610
    %635 = vmatpush.msra.mxu0 %v606
    %636 = vmatpush.msra.mxu0 %v602
    %637 = vmatpush.msra.mxu0 %v598
    %638 = vmatpush.msra.mxu0 %v594
    %639 = vmatpush.msra.mxu0 %v590
    %640 = vmatpush.msra.mxu0 %v586
    %641 = vmatpush.msra.mxu0 %v582
    %642 = vmatpush.msra.mxu0 %v578
    %643 = vmatpush.msra.mxu0 %v574
    %644 = vmatpush.msra.mxu0 %v570
    %645 = vmatpush.msra.mxu0 %v566
    %646 = vmatmul.f32.gmra.mxu0 %v556
    %v647 = vpop.f32.mrf.mxu0
    %v648 = vadd.f32 0.0, %v647
    %649 = vdwg.mxu0
    %650 = vmatpush.msra.mxu0 %v627
    %651 = vmatpush.msra.mxu0 %v623
    %652 = vmatpush.msra.mxu0 %v619
    %653 = vmatpush.msra.mxu0 %v615
    %654 = vmatpush.msra.mxu0 %v611
    %655 = vmatpush.msra.mxu0 %v607
    %656 = vmatpush.msra.mxu0 %v603
    %657 = vmatpush.msra.mxu0 %v599
    %658 = vmatpush.msra.mxu0 %v595
    %659 = vmatpush.msra.mxu0 %v591
    %660 = vmatpush.msra.mxu0 %v587
    %661 = vmatpush.msra.mxu0 %v583
    %662 = vmatpush.msra.mxu0 %v579
    %663 = vmatpush.msra.mxu0 %v575
    %664 = vmatpush.msra.mxu0 %v571
    %665 = vmatpush.msra.mxu0 %v567
    %666 = vmatmul.f32.gmra.mxu0 %v556
    %v667 = vpop.f32.mrf.mxu0
    %v668 = vadd.f32 0.0, %v667
    %669 = vdwg.mxu0
    %670 = vmatpush.msra.mxu0 %v628
    %671 = vmatpush.msra.mxu0 %v624
    %672 = vmatpush.msra.mxu0 %v620
    %673 = vmatpush.msra.mxu0 %v616
    %674 = vmatpush.msra.mxu0 %v612
    %675 = vmatpush.msra.mxu0 %v608
    %676 = vmatpush.msra.mxu0 %v604
    %677 = vmatpush.msra.mxu0 %v600
    %678 = vmatpush.msra.mxu0 %v596
    %679 = vmatpush.msra.mxu0 %v592
    %680 = vmatpush.msra.mxu0 %v588
    %681 = vmatpush.msra.mxu0 %v584
    %682 = vmatpush.msra.mxu0 %v580
    %683 = vmatpush.msra.mxu0 %v576
    %684 = vmatpush.msra.mxu0 %v572
    %685 = vmatpush.msra.mxu0 %v568
    %686 = vmatmul.f32.gmra.mxu0 %v556
    %v687 = vpop.f32.mrf.mxu0
    %v688 = vadd.f32 0.0, %v687
    %689 = vdwg.mxu0
    %690 = vmatpush.msra.mxu0 %v629
    %691 = vmatpush.msra.mxu0 %v625
    %692 = vmatpush.msra.mxu0 %v621
    %693 = vmatpush.msra.mxu0 %v617
    %694 = vmatpush.msra.mxu0 %v613
    %695 = vmatpush.msra.mxu0 %v609
    %696 = vmatpush.msra.mxu0 %v605
    %697 = vmatpush.msra.mxu0 %v601
    %698 = vmatpush.msra.mxu0 %v597
    %699 = vmatpush.msra.mxu0 %v593
    %700 = vmatpush.msra.mxu0 %v589
    %701 = vmatpush.msra.mxu0 %v585
    %702 = vmatpush.msra.mxu0 %v581
    %703 = vmatpush.msra.mxu0 %v577
    %704 = vmatpush.msra.mxu0 %v573
    %705 = vmatpush.msra.mxu0 %v569
    %706 = vmatmul.f32.gmra.mxu0 %v556
    %v707 = vpop.f32.mrf.mxu0
    %v708 = vadd.f32 0.0, %v707
    %709 = vdwg.mxu0
    %v710 = vadd.f32 %v562, %v648
    %v711 = vadd.f32 %v563, %v668
    %v712 = vadd.f32 %v564, %v688
    %v713 = vadd.f32 %v565, %v708
    %v714 = vmul.f32 %v710, 0.5
    %v715 = vmul.f32 %v711, 0.5
    %v716 = vtanh.pop %v714
    %v717 = vtanh.pop %v715
    %v718 = vmul.f32 %v716, 0.5
    %v719 = vmul.f32 %v717, 0.5
    %v720 = vadd.f32 %v718, 0.5
    %v721 = vadd.f32 %v719, 0.5
    %v722 = vtanh.pop %v712
    %v723 = vmul.f32 %v713, 0.5
    %v724 = vtanh.pop %v723
    %v725 = vmul.f32 %v724, 0.5
    %v726 = vadd.f32 %v725, 0.5
    %v727 = vmul.f32 %v721, %v554
    %v728 = vmul.f32 %v720, %v722
    %v729 = vadd.f32 %v727, %v728
    %v730 = vtanh.pop %v729
    %v731 = vmul.f32 %v726, %v730
    %s732 = scalar_lea.vmem %s2, 24
    %733 = vst [vmem:[%s732] sm:$0xff] %v731
    %s734 = smul.u32 4, 4
    %s735 = smul.addr %s734, 8
    %s736 = scalar_lea.vmem %s0, %s735
    %v737 = vld [vmem:[%s736] sm:$0xff]
    %v738 = vld [vmem:[%s736 + $0x8] sm:$0xff]
    %v739 = vld [vmem:[%s736 + $0x10] sm:$0xff]
    %v740 = vld [vmem:[%s736 + $0x18] sm:$0xff]
    %v741 = vld [vmem:[#allocation4] sm:$0xff]
    %v742 = vld [vmem:[#allocation4 + $0x8] sm:$0xff]
    %v743 = vld [vmem:[#allocation4 + $0x10] sm:$0xff]
    %v744 = vld [vmem:[#allocation4 + $0x18] sm:$0xff]
    %v745 = vld [vmem:[#allocation4 + $0x20] sm:$0xff]
    %v746 = vld [vmem:[#allocation4 + $0x28] sm:$0xff]
    %v747 = vld [vmem:[#allocation4 + $0x30] sm:$0xff]
    %v748 = vld [vmem:[#allocation4 + $0x38] sm:$0xff]
    %v749 = vld [vmem:[#allocation4 + $0x40] sm:$0xff]
    %v750 = vld [vmem:[#allocation4 + $0x48] sm:$0xff]
    %v751 = vld [vmem:[#allocation4 + $0x50] sm:$0xff]
    %v752 = vld [vmem:[#allocation4 + $0x58] sm:$0xff]
    %v753 = vld [vmem:[#allocation4 + $0x60] sm:$0xff]
    %v754 = vld [vmem:[#allocation4 + $0x68] sm:$0xff]
    %v755 = vld [vmem:[#allocation4 + $0x70] sm:$0xff]
    %v756 = vld [vmem:[#allocation4 + $0x78] sm:$0xff]
    %v757 = vld [vmem:[#allocation4 + $0x80] sm:$0xff]
    %v758 = vld [vmem:[#allocation4 + $0x88] sm:$0xff]
    %v759 = vld [vmem:[#allocation4 + $0x90] sm:$0xff]
    %v760 = vld [vmem:[#allocation4 + $0x98] sm:$0xff]
    %v761 = vld [vmem:[#allocation4 + $0xa0] sm:$0xff]
    %v762 = vld [vmem:[#allocation4 + $0xa8] sm:$0xff]
    %v763 = vld [vmem:[#allocation4 + $0xb0] sm:$0xff]
    %v764 = vld [vmem:[#allocation4 + $0xb8] sm:$0xff]
    %v765 = vld [vmem:[#allocation4 + $0xc0] sm:$0xff]
    %v766 = vld [vmem:[#allocation4 + $0xc8] sm:$0xff]
    %v767 = vld [vmem:[#allocation4 + $0xd0] sm:$0xff]
    %v768 = vld [vmem:[#allocation4 + $0xd8] sm:$0xff]
    %v769 = vld [vmem:[#allocation4 + $0xe0] sm:$0xff]
    %v770 = vld [vmem:[#allocation4 + $0xe8] sm:$0xff]
    %v771 = vld [vmem:[#allocation4 + $0xf0] sm:$0xff]
    %v772 = vld [vmem:[#allocation4 + $0xf8] sm:$0xff]
    %v773 = vld [vmem:[#allocation4 + $0x100] sm:$0xff]
    %v774 = vld [vmem:[#allocation4 + $0x108] sm:$0xff]
    %v775 = vld [vmem:[#allocation4 + $0x110] sm:$0xff]
    %v776 = vld [vmem:[#allocation4 + $0x118] sm:$0xff]
    %v777 = vld [vmem:[#allocation4 + $0x120] sm:$0xff]
    %v778 = vld [vmem:[#allocation4 + $0x128] sm:$0xff]
    %v779 = vld [vmem:[#allocation4 + $0x130] sm:$0xff]
    %v780 = vld [vmem:[#allocation4 + $0x138] sm:$0xff]
    %v781 = vld [vmem:[#allocation4 + $0x140] sm:$0xff]
    %v782 = vld [vmem:[#allocation4 + $0x148] sm:$0xff]
    %v783 = vld [vmem:[#allocation4 + $0x150] sm:$0xff]
    %v784 = vld [vmem:[#allocation4 + $0x158] sm:$0xff]
    %v785 = vld [vmem:[#allocation4 + $0x160] sm:$0xff]
    %v786 = vld [vmem:[#allocation4 + $0x168] sm:$0xff]
    %v787 = vld [vmem:[#allocation4 + $0x170] sm:$0xff]
    %v788 = vld [vmem:[#allocation4 + $0x178] sm:$0xff]
    %v789 = vld [vmem:[#allocation4 + $0x180] sm:$0xff]
    %v790 = vld [vmem:[#allocation4 + $0x188] sm:$0xff]
    %v791 = vld [vmem:[#allocation4 + $0x190] sm:$0xff]
    %v792 = vld [vmem:[#allocation4 + $0x198] sm:$0xff]
    %v793 = vld [vmem:[#allocation4 + $0x1a0] sm:$0xff]
    %v794 = vld [vmem:[#allocation4 + $0x1a8] sm:$0xff]
    %v795 = vld [vmem:[#allocation4 + $0x1b0] sm:$0xff]
    %v796 = vld [vmem:[#allocation4 + $0x1b8] sm:$0xff]
    %v797 = vld [vmem:[#allocation4 + $0x1c0] sm:$0xff]
    %v798 = vld [vmem:[#allocation4 + $0x1c8] sm:$0xff]
    %v799 = vld [vmem:[#allocation4 + $0x1d0] sm:$0xff]
    %v800 = vld [vmem:[#allocation4 + $0x1d8] sm:$0xff]
    %v801 = vld [vmem:[#allocation4 + $0x1e0] sm:$0xff]
    %v802 = vld [vmem:[#allocation4 + $0x1e8] sm:$0xff]
    %v803 = vld [vmem:[#allocation4 + $0x1f0] sm:$0xff]
    %v804 = vld [vmem:[#allocation4 + $0x1f8] sm:$0xff]
    %805 = vmatpush.msra.mxu0 %v801
    %806 = vmatpush.msra.mxu0 %v797
    %807 = vmatpush.msra.mxu0 %v793
    %808 = vmatpush.msra.mxu0 %v789
    %809 = vmatpush.msra.mxu0 %v785
    %810 = vmatpush.msra.mxu0 %v781
    %811 = vmatpush.msra.mxu0 %v777
    %812 = vmatpush.msra.mxu0 %v773
    %813 = vmatpush.msra.mxu0 %v769
    %814 = vmatpush.msra.mxu0 %v765
    %815 = vmatpush.msra.mxu0 %v761
    %816 = vmatpush.msra.mxu0 %v757
    %817 = vmatpush.msra.mxu0 %v753
    %818 = vmatpush.msra.mxu0 %v749
    %819 = vmatpush.msra.mxu0 %v745
    %820 = vmatpush.msra.mxu0 %v741
    %821 = vmatmul.f32.gmra.mxu0 %v731
    %v822 = vpop.f32.mrf.mxu0
    %v823 = vadd.f32 0.0, %v822
    %824 = vdwg.mxu0
    %825 = vmatpush.msra.mxu0 %v802
    %826 = vmatpush.msra.mxu0 %v798
    %827 = vmatpush.msra.mxu0 %v794
    %828 = vmatpush.msra.mxu0 %v790
    %829 = vmatpush.msra.mxu0 %v786
    %830 = vmatpush.msra.mxu0 %v782
    %831 = vmatpush.msra.mxu0 %v778
    %832 = vmatpush.msra.mxu0 %v774
    %833 = vmatpush.msra.mxu0 %v770
    %834 = vmatpush.msra.mxu0 %v766
    %835 = vmatpush.msra.mxu0 %v762
    %836 = vmatpush.msra.mxu0 %v758
    %837 = vmatpush.msra.mxu0 %v754
    %838 = vmatpush.msra.mxu0 %v750
    %839 = vmatpush.msra.mxu0 %v746
    %840 = vmatpush.msra.mxu0 %v742
    %841 = vmatmul.f32.gmra.mxu0 %v731
    %v842 = vpop.f32.mrf.mxu0
    %v843 = vadd.f32 0.0, %v842
    %844 = vdwg.mxu0
    %845 = vmatpush.msra.mxu0 %v803
    %846 = vmatpush.msra.mxu0 %v799
    %847 = vmatpush.msra.mxu0 %v795
    %848 = vmatpush.msra.mxu0 %v791
    %849 = vmatpush.msra.mxu0 %v787
    %850 = vmatpush.msra.mxu0 %v783
    %851 = vmatpush.msra.mxu0 %v779
    %852 = vmatpush.msra.mxu0 %v775
    %853 = vmatpush.msra.mxu0 %v771
    %854 = vmatpush.msra.mxu0 %v767
    %855 = vmatpush.msra.mxu0 %v763
    %856 = vmatpush.msra.mxu0 %v759
    %857 = vmatpush.msra.mxu0 %v755
    %858 = vmatpush.msra.mxu0 %v751
    %859 = vmatpush.msra.mxu0 %v747
    %860 = vmatpush.msra.mxu0 %v743
    %861 = vmatmul.f32.gmra.mxu0 %v731
    %v862 = vpop.f32.mrf.mxu0
    %v863 = vadd.f32 0.0, %v862
    %864 = vdwg.mxu0
    %865 = vmatpush.msra.mxu0 %v804
    %866 = vmatpush.msra.mxu0 %v800
    %867 = vmatpush.msra.mxu0 %v796
    %868 = vmatpush.msra.mxu0 %v792
    %869 = vmatpush.msra.mxu0 %v788
    %870 = vmatpush.msra.mxu0 %v784
    %871 = vmatpush.msra.mxu0 %v780
    %872 = vmatpush.msra.mxu0 %v776
    %873 = vmatpush.msra.mxu0 %v772
    %874 = vmatpush.msra.mxu0 %v768
    %875 = vmatpush.msra.mxu0 %v764
    %876 = vmatpush.msra.mxu0 %v760
    %877 = vmatpush.msra.mxu0 %v756
    %878 = vmatpush.msra.mxu0 %v752
    %879 = vmatpush.msra.mxu0 %v748
    %880 = vmatpush.msra.mxu0 %v744
    %881 = vmatmul.f32.gmra.mxu0 %v731
    %v882 = vpop.f32.mrf.mxu0
    %v883 = vadd.f32 0.0, %v882
    %884 = vdwg.mxu0
    %v885 = vadd.f32 %v737, %v823
    %v886 = vadd.f32 %v738, %v843
    %v887 = vadd.f32 %v739, %v863
    %v888 = vadd.f32 %v740, %v883
    %v889 = vmul.f32 %v885, 0.5
    %v890 = vmul.f32 %v886, 0.5
    %v891 = vtanh.pop %v889
    %v892 = vtanh.pop %v890
    %v893 = vmul.f32 %v891, 0.5
    %v894 = vmul.f32 %v892, 0.5
    %v895 = vadd.f32 %v893, 0.5
    %v896 = vadd.f32 %v894, 0.5
    %v897 = vtanh.pop %v887
    %v898 = vmul.f32 %v888, 0.5
    %v899 = vtanh.pop %v898
    %v900 = vmul.f32 %v899, 0.5
    %v901 = vadd.f32 %v900, 0.5
    %v902 = vmul.f32 %v896, %v729
    %v903 = vmul.f32 %v895, %v897
    %v904 = vadd.f32 %v902, %v903
    %v905 = vtanh.pop %v904
    %v906 = vmul.f32 %v901, %v905
    %s907 = scalar_lea.vmem %s2, 32
    %908 = vst [vmem:[%s907] sm:$0xff] %v906
    %s909 = smul.u32 5, 4
    %s910 = smul.addr %s909, 8
    %s911 = scalar_lea.vmem %s0, %s910
    %v912 = vld [vmem:[%s911] sm:$0xff]
    %v913 = vld [vmem:[%s911 + $0x8] sm:$0xff]
    %v914 = vld [vmem:[%s911 + $0x10] sm:$0xff]
    %v915 = vld [vmem:[%s911 + $0x18] sm:$0xff]
    %v916 = vld [vmem:[#allocation4] sm:$0xff]
    %v917 = vld [vmem:[#allocation4 + $0x8] sm:$0xff]
    %v918 = vld [vmem:[#allocation4 + $0x10] sm:$0xff]
    %v919 = vld [vmem:[#allocation4 + $0x18] sm:$0xff]
    %v920 = vld [vmem:[#allocation4 + $0x20] sm:$0xff]
    %v921 = vld [vmem:[#allocation4 + $0x28] sm:$0xff]
    %v922 = vld [vmem:[#allocation4 + $0x30] sm:$0xff]
    %v923 = vld [vmem:[#allocation4 + $0x38] sm:$0xff]
    %v924 = vld [vmem:[#allocation4 + $0x40] sm:$0xff]
    %v925 = vld [vmem:[#allocation4 + $0x48] sm:$0xff]
    %v926 = vld [vmem:[#allocation4 + $0x50] sm:$0xff]
    %v927 = vld [vmem:[#allocation4 + $0x58] sm:$0xff]
    %v928 = vld [vmem:[#allocation4 + $0x60] sm:$0xff]
    %v929 = vld [vmem:[#allocation4 + $0x68] sm:$0xff]
    %v930 = vld [vmem:[#allocation4 + $0x70] sm:$0xff]
    %v931 = vld [vmem:[#allocation4 + $0x78] sm:$0xff]
    %v932 = vld [vmem:[#allocation4 + $0x80] sm:$0xff]
    %v933 = vld [vmem:[#allocation4 + $0x88] sm:$0xff]
    %v934 = vld [vmem:[#allocation4 + $0x90] sm:$0xff]
    %v935 = vld [vmem:[#allocation4 + $0x98] sm:$0xff]
    %v936 = vld [vmem:[#allocation4 + $0xa0] sm:$0xff]
    %v937 = vld [vmem:[#allocation4 + $0xa8] sm:$0xff]
    %v938 = vld [vmem:[#allocation4 + $0xb0] sm:$0xff]
    %v939 = vld [vmem:[#allocation4 + $0xb8] sm:$0xff]
    %v940 = vld [vmem:[#allocation4 + $0xc0] sm:$0xff]
    %v941 = vld [vmem:[#allocation4 + $0xc8] sm:$0xff]
    %v942 = vld [vmem:[#allocation4 + $0xd0] sm:$0xff]
    %v943 = vld [vmem:[#allocation4 + $0xd8] sm:$0xff]
    %v944 = vld [vmem:[#allocation4 + $0xe0] sm:$0xff]
    %v945 = vld [vmem:[#allocation4 + $0xe8] sm:$0xff]
    %v946 = vld [vmem:[#allocation4 + $0xf0] sm:$0xff]
    %v947 = vld [vmem:[#allocation4 + $0xf8] sm:$0xff]
    %v948 = vld [vmem:[#allocation4 + $0x100] sm:$0xff]
    %v949 = vld [vmem:[#allocation4 + $0x108] sm:$0xff]
    %v950 = vld [vmem:[#allocation4 + $0x110] sm:$0xff]
    %v951 = vld [vmem:[#allocation4 + $0x118] sm:$0xff]
    %v952 = vld [vmem:[#allocation4 + $0x120] sm:$0xff]
    %v953 = vld [vmem:[#allocation4 + $0x128] sm:$0xff]
    %v954 = vld [vmem:[#allocation4 + $0x130] sm:$0xff]
    %v955 = vld [vmem:[#allocation4 + $0x138] sm:$0xff]
    %v956 = vld [vmem:[#allocation4 + $0x140] sm:$0xff]
    %v957 = vld [vmem:[#allocation4 + $0x148] sm:$0xff]
    %v958 = vld [vmem:[#allocation4 + $0x150] sm:$0xff]
    %v959 = vld [vmem:[#allocation4 + $0x158] sm:$0xff]
    %v960 = vld [vmem:[#allocation4 + $0x160] sm:$0xff]
    %v961 = vld [vmem:[#allocation4 + $0x168] sm:$0xff]
    %v962 = vld [vmem:[#allocation4 + $0x170] sm:$0xff]
    %v963 = vld [vmem:[#allocation4 + $0x178] sm:$0xff]
    %v964 = vld [vmem:[#allocation4 + $0x180] sm:$0xff]
    %v965 = vld [vmem:[#allocation4 + $0x188] sm:$0xff]
    %v966 = vld [vmem:[#allocation4 + $0x190] sm:$0xff]
    %v967 = vld [vmem:[#allocation4 + $0x198] sm:$0xff]
    %v968 = vld [vmem:[#allocation4 + $0x1a0] sm:$0xff]
    %v969 = vld [vmem:[#allocation4 + $0x1a8] sm:$0xff]
    %v970 = vld [vmem:[#allocation4 + $0x1b0] sm:$0xff]
    %v971 = vld [vmem:[#allocation4 + $0x1b8] sm:$0xff]
    %v972 = vld [vmem:[#allocation4 + $0x1c0] sm:$0xff]
    %v973 = vld [vmem:[#allocation4 + $0x1c8] sm:$0xff]
    %v974 = vld [vmem:[#allocation4 + $0x1d0] sm:$0xff]
    %v975 = vld [vmem:[#allocation4 + $0x1d8] sm:$0xff]
    %v976 = vld [vmem:[#allocation4 + $0x1e0] sm:$0xff]
    %v977 = vld [vmem:[#allocation4 + $0x1e8] sm:$0xff]
    %v978 = vld [vmem:[#allocation4 + $0x1f0] sm:$0xff]
    %v979 = vld [vmem:[#allocation4 + $0x1f8] sm:$0xff]
    %980 = vmatpush.msra.mxu0 %v976
    %981 = vmatpush.msra.mxu0 %v972
    %982 = vmatpush.msra.mxu0 %v968
    %983 = vmatpush.msra.mxu0 %v964
    %984 = vmatpush.msra.mxu0 %v960
    %985 = vmatpush.msra.mxu0 %v956
    %986 = vmatpush.msra.mxu0 %v952
    %987 = vmatpush.msra.mxu0 %v948
    %988 = vmatpush.msra.mxu0 %v944
    %989 = vmatpush.msra.mxu0 %v940
    %990 = vmatpush.msra.mxu0 %v936
    %991 = vmatpush.msra.mxu0 %v932
    %992 = vmatpush.msra.mxu0 %v928
    %993 = vmatpush.msra.mxu0 %v924
    %994 = vmatpush.msra.mxu0 %v920
    %995 = vmatpush.msra.mxu0 %v916
    %996 = vmatmul.f32.gmra.mxu0 %v906
    %v997 = vpop.f32.mrf.mxu0
    %v998 = vadd.f32 0.0, %v997
    %999 = vdwg.mxu0
    %1000 = vmatpush.msra.mxu0 %v977
    %1001 = vmatpush.msra.mxu0 %v973
    %1002 = vmatpush.msra.mxu0 %v969
    %1003 = vmatpush.msra.mxu0 %v965
    %1004 = vmatpush.msra.mxu0 %v961
    %1005 = vmatpush.msra.mxu0 %v957
    %1006 = vmatpush.msra.mxu0 %v953
    %1007 = vmatpush.msra.mxu0 %v949
    %1008 = vmatpush.msra.mxu0 %v945
    %1009 = vmatpush.msra.mxu0 %v941
    %1010 = vmatpush.msra.mxu0 %v937
    %1011 = vmatpush.msra.mxu0 %v933
    %1012 = vmatpush.msra.mxu0 %v929
    %1013 = vmatpush.msra.mxu0 %v925
    %1014 = vmatpush.msra.mxu0 %v921
    %1015 = vmatpush.msra.mxu0 %v917
    %1016 = vmatmul.f32.gmra.mxu0 %v906
    %v1017 = vpop.f32.mrf.mxu0
    %v1018 = vadd.f32 0.0, %v1017
    %1019 = vdwg.mxu0
    %1020 = vmatpush.msra.mxu0 %v978
    %1021 = vmatpush.msra.mxu0 %v974
    %1022 = vmatpush.msra.mxu0 %v970
    %1023 = vmatpush.msra.mxu0 %v966
    %1024 = vmatpush.msra.mxu0 %v962
    %1025 = vmatpush.msra.mxu0 %v958
    %1026 = vmatpush.msra.mxu0 %v954
    %1027 = vmatpush.msra.mxu0 %v950
    %1028 = vmatpush.msra.mxu0 %v946
    %1029 = vmatpush.msra.mxu0 %v942
    %1030 = vmatpush.msra.mxu0 %v938
    %1031 = vmatpush.msra.mxu0 %v934
    %1032 = vmatpush.msra.mxu0 %v930
    %1033 = vmatpush.msra.mxu0 %v926
    %1034 = vmatpush.msra.mxu0 %v922
    %1035 = vmatpush.msra.mxu0 %v918
    %1036 = vmatmul.f32.gmra.mxu0 %v906
    %v1037 = vpop.f32.mrf.mxu0
    %v1038 = vadd.f32 0.0, %v1037
    %1039 = vdwg.mxu0
    %1040 = vmatpush.msra.mxu0 %v979
    %1041 = vmatpush.msra.mxu0 %v975
    %1042 = vmatpush.msra.mxu0 %v971
    %1043 = vmatpush.msra.mxu0 %v967
    %1044 = vmatpush.msra.mxu0 %v963
    %1045 = vmatpush.msra.mxu0 %v959
    %1046 = vmatpush.msra.mxu0 %v955
    %1047 = vmatpush.msra.mxu0 %v951
    %1048 = vmatpush.msra.mxu0 %v947
    %1049 = vmatpush.msra.mxu0 %v943
    %1050 = vmatpush.msra.mxu0 %v939
    %1051 = vmatpush.msra.mxu0 %v935
    %1052 = vmatpush.msra.mxu0 %v931
    %1053 = vmatpush.msra.mxu0 %v927
    %1054 = vmatpush.msra.mxu0 %v923
    %1055 = vmatpush.msra.mxu0 %v919
    %1056 = vmatmul.f32.gmra.mxu0 %v906
    %v1057 = vpop.f32.mrf.mxu0
    %v1058 = vadd.f32 0.0, %v1057
    %1059 = vdwg.mxu0
    %v1060 = vadd.f32 %v912, %v998
    %v1061 = vadd.f32 %v913, %v1018
    %v1062 = vadd.f32 %v914, %v1038
    %v1063 = vadd.f32 %v915, %v1058
    %v1064 = vmul.f32 %v1060, 0.5
    %v1065 = vmul.f32 %v1061, 0.5
    %v1066 = vtanh.pop %v1064
    %v1067 = vtanh.pop %v1065
    %v1068 = vmul.f32 %v1066, 0.5
    %v1069 = vmul.f32 %v1067, 0.5
    %v1070 = vadd.f32 %v1068, 0.5
    %v1071 = vadd.f32 %v1069, 0.5
    %v1072 = vtanh.pop %v1062
    %v1073 = vmul.f32 %v1063, 0.5
    %v1074 = vtanh.pop %v1073
    %v1075 = vmul.f32 %v1074, 0.5
    %v1076 = vadd.f32 %v1075, 0.5
    %v1077 = vmul.f32 %v1071, %v904
    %v1078 = vmul.f32 %v1070, %v1072
    %v1079 = vadd.f32 %v1077, %v1078
    %v1080 = vtanh.pop %v1079
    %v1081 = vmul.f32 %v1076, %v1080
    %s1082 = scalar_lea.vmem %s2, 40
    %1083 = vst [vmem:[%s1082] sm:$0xff] %v1081
    %s1084 = smul.u32 6, 4
    %s1085 = smul.addr %s1084, 8
    %s1086 = scalar_lea.vmem %s0, %s1085
    %v1087 = vld [vmem:[%s1086] sm:$0xff]
    %v1088 = vld [vmem:[%s1086 + $0x8] sm:$0xff]
    %v1089 = vld [vmem:[%s1086 + $0x10] sm:$0xff]
    %v1090 = vld [vmem:[%s1086 + $0x18] sm:$0xff]
    %v1091 = vld [vmem:[#allocation4] sm:$0xff]
    %v1092 = vld [vmem:[#allocation4 + $0x8] sm:$0xff]
    %v1093 = vld [vmem:[#allocation4 + $0x10] sm:$0xff]
    %v1094 = vld [vmem:[#allocation4 + $0x18] sm:$0xff]
    %v1095 = vld [vmem:[#allocation4 + $0x20] sm:$0xff]
    %v1096 = vld [vmem:[#allocation4 + $0x28] sm:$0xff]
    %v1097 = vld [vmem:[#allocation4 + $0x30] sm:$0xff]
    %v1098 = vld [vmem:[#allocation4 + $0x38] sm:$0xff]
    %v1099 = vld [vmem:[#allocation4 + $0x40] sm:$0xff]
    %v1100 = vld [vmem:[#allocation4 + $0x48] sm:$0xff]
    %v1101 = vld [vmem:[#allocation4 + $0x50] sm:$0xff]
    %v1102 = vld [vmem:[#allocation4 + $0x58] sm:$0xff]
    %v1103 = vld [vmem:[#allocation4 + $0x60] sm:$0xff]
    %v1104 = vld [vmem:[#allocation4 + $0x68] sm:$0xff]
    %v1105 = vld [vmem:[#allocation4 + $0x70] sm:$0xff]
    %v1106 = vld [vmem:[#allocation4 + $0x78] sm:$0xff]
    %v1107 = vld [vmem:[#allocation4 + $0x80] sm:$0xff]
    %v1108 = vld [vmem:[#allocation4 + $0x88] sm:$0xff]
    %v1109 = vld [vmem:[#allocation4 + $0x90] sm:$0xff]
    %v1110 = vld [vmem:[#allocation4 + $0x98] sm:$0xff]
    %v1111 = vld [vmem:[#allocation4 + $0xa0] sm:$0xff]
    %v1112 = vld [vmem:[#allocation4 + $0xa8] sm:$0xff]
    %v1113 = vld [vmem:[#allocation4 + $0xb0] sm:$0xff]
    %v1114 = vld [vmem:[#allocation4 + $0xb8] sm:$0xff]
    %v1115 = vld [vmem:[#allocation4 + $0xc0] sm:$0xff]
    %v1116 = vld [vmem:[#allocation4 + $0xc8] sm:$0xff]
    %v1117 = vld [vmem:[#allocation4 + $0xd0] sm:$0xff]
    %v1118 = vld [vmem:[#allocation4 + $0xd8] sm:$0xff]
    %v1119 = vld [vmem:[#allocation4 + $0xe0] sm:$0xff]
    %v1120 = vld [vmem:[#allocation4 + $0xe8] sm:$0xff]
    %v1121 = vld [vmem:[#allocation4 + $0xf0] sm:$0xff]
    %v1122 = vld [vmem:[#allocation4 + $0xf8] sm:$0xff]
    %v1123 = vld [vmem:[#allocation4 + $0x100] sm:$0xff]
    %v1124 = vld [vmem:[#allocation4 + $0x108] sm:$0xff]
    %v1125 = vld [vmem:[#allocation4 + $0x110] sm:$0xff]
    %v1126 = vld [vmem:[#allocation4 + $0x118] sm:$0xff]
    %v1127 = vld [vmem:[#allocation4 + $0x120] sm:$0xff]
    %v1128 = vld [vmem:[#allocation4 + $0x128] sm:$0xff]
    %v1129 = vld [vmem:[#allocation4 + $0x130] sm:$0xff]
    %v1130 = vld [vmem:[#allocation4 + $0x138] sm:$0xff]
    %v1131 = vld [vmem:[#allocation4 + $0x140] sm:$0xff]
    %v1132 = vld [vmem:[#allocation4 + $0x148] sm:$0xff]
    %v1133 = vld [vmem:[#allocation4 + $0x150] sm:$0xff]
    %v1134 = vld [vmem:[#allocation4 + $0x158] sm:$0xff]
    %v1135 = vld [vmem:[#allocation4 + $0x160] sm:$0xff]
    %v1136 = vld [vmem:[#allocation4 + $0x168] sm:$0xff]
    %v1137 = vld [vmem:[#allocation4 + $0x170] sm:$0xff]
    %v1138 = vld [vmem:[#allocation4 + $0x178] sm:$0xff]
    %v1139 = vld [vmem:[#allocation4 + $0x180] sm:$0xff]
    %v1140 = vld [vmem:[#allocation4 + $0x188] sm:$0xff]
    %v1141 = vld [vmem:[#allocation4 + $0x190] sm:$0xff]
    %v1142 = vld [vmem:[#allocation4 + $0x198] sm:$0xff]
    %v1143 = vld [vmem:[#allocation4 + $0x1a0] sm:$0xff]
    %v1144 = vld [vmem:[#allocation4 + $0x1a8] sm:$0xff]
    %v1145 = vld [vmem:[#allocation4 + $0x1b0] sm:$0xff]
    %v1146 = vld [vmem:[#allocation4 + $0x1b8] sm:$0xff]
    %v1147 = vld [vmem:[#allocation4 + $0x1c0] sm:$0xff]
    %v1148 = vld [vmem:[#allocation4 + $0x1c8] sm:$0xff]
    %v1149 = vld [vmem:[#allocation4 + $0x1d0] sm:$0xff]
    %v1150 = vld [vmem:[#allocation4 + $0x1d8] sm:$0xff]
    %v1151 = vld [vmem:[#allocation4 + $0x1e0] sm:$0xff]
    %v1152 = vld [vmem:[#allocation4 + $0x1e8] sm:$0xff]
    %v1153 = vld [vmem:[#allocation4 + $0x1f0] sm:$0xff]
    %v1154 = vld [vmem:[#allocation4 + $0x1f8] sm:$0xff]
    %1155 = vmatpush.msra.mxu0 %v1151
    %1156 = vmatpush.msra.mxu0 %v1147
    %1157 = vmatpush.msra.mxu0 %v1143
    %1158 = vmatpush.msra.mxu0 %v1139
    %1159 = vmatpush.msra.mxu0 %v1135
    %1160 = vmatpush.msra.mxu0 %v1131
    %1161 = vmatpush.msra.mxu0 %v1127
    %1162 = vmatpush.msra.mxu0 %v1123
    %1163 = vmatpush.msra.mxu0 %v1119
    %1164 = vmatpush.msra.mxu0 %v1115
    %1165 = vmatpush.msra.mxu0 %v1111
    %1166 = vmatpush.msra.mxu0 %v1107
    %1167 = vmatpush.msra.mxu0 %v1103
    %1168 = vmatpush.msra.mxu0 %v1099
    %1169 = vmatpush.msra.mxu0 %v1095
    %1170 = vmatpush.msra.mxu0 %v1091
    %1171 = vmatmul.f32.gmra.mxu0 %v1081
    %v1172 = vpop.f32.mrf.mxu0
    %v1173 = vadd.f32 0.0, %v1172
    %1174 = vdwg.mxu0
    %1175 = vmatpush.msra.mxu0 %v1152
    %1176 = vmatpush.msra.mxu0 %v1148
    %1177 = vmatpush.msra.mxu0 %v1144
    %1178 = vmatpush.msra.mxu0 %v1140
    %1179 = vmatpush.msra.mxu0 %v1136
    %1180 = vmatpush.msra.mxu0 %v1132
    %1181 = vmatpush.msra.mxu0 %v1128
    %1182 = vmatpush.msra.mxu0 %v1124
    %1183 = vmatpush.msra.mxu0 %v1120
    %1184 = vmatpush.msra.mxu0 %v1116
    %1185 = vmatpush.msra.mxu0 %v1112
    %1186 = vmatpush.msra.mxu0 %v1108
    %1187 = vmatpush.msra.mxu0 %v1104
    %1188 = vmatpush.msra.mxu0 %v1100
    %1189 = vmatpush.msra.mxu0 %v1096
    %1190 = vmatpush.msra.mxu0 %v1092
    %1191 = vmatmul.f32.gmra.mxu0 %v1081
    %v1192 = vpop.f32.mrf.mxu0
    %v1193 = vadd.f32 0.0, %v1192
    %1194 = vdwg.mxu0
    %1195 = vmatpush.msra.mxu0 %v1153
    %1196 = vmatpush.msra.mxu0 %v1149
    %1197 = vmatpush.msra.mxu0 %v1145
    %1198 = vmatpush.msra.mxu0 %v1141
    %1199 = vmatpush.msra.mxu0 %v1137
    %1200 = vmatpush.msra.mxu0 %v1133
    %1201 = vmatpush.msra.mxu0 %v1129
    %1202 = vmatpush.msra.mxu0 %v1125
    %1203 = vmatpush.msra.mxu0 %v1121
    %1204 = vmatpush.msra.mxu0 %v1117
    %1205 = vmatpush.msra.mxu0 %v1113
    %1206 = vmatpush.msra.mxu0 %v1109
    %1207 = vmatpush.msra.mxu0 %v1105
    %1208 = vmatpush.msra.mxu0 %v1101
    %1209 = vmatpush.msra.mxu0 %v1097
    %1210 = vmatpush.msra.mxu0 %v1093
    %1211 = vmatmul.f32.gmra.mxu0 %v1081
    %v1212 = vpop.f32.mrf.mxu0
    %v1213 = vadd.f32 0.0, %v1212
    %1214 = vdwg.mxu0
    %1215 = vmatpush.msra.mxu0 %v1154
    %1216 = vmatpush.msra.mxu0 %v1150
    %1217 = vmatpush.msra.mxu0 %v1146
    %1218 = vmatpush.msra.mxu0 %v1142
    %1219 = vmatpush.msra.mxu0 %v1138
    %1220 = vmatpush.msra.mxu0 %v1134
    %1221 = vmatpush.msra.mxu0 %v1130
    %1222 = vmatpush.msra.mxu0 %v1126
    %1223 = vmatpush.msra.mxu0 %v1122
    %1224 = vmatpush.msra.mxu0 %v1118
    %1225 = vmatpush.msra.mxu0 %v1114
    %1226 = vmatpush.msra.mxu0 %v1110
    %1227 = vmatpush.msra.mxu0 %v1106
    %1228 = vmatpush.msra.mxu0 %v1102
    %1229 = vmatpush.msra.mxu0 %v1098
    %1230 = vmatpush.msra.mxu0 %v1094
    %1231 = vmatmul.f32.gmra.mxu0 %v1081
    %v1232 = vpop.f32.mrf.mxu0
    %v1233 = vadd.f32 0.0, %v1232
    %1234 = vdwg.mxu0
    %v1235 = vadd.f32 %v1087, %v1173
    %v1236 = vadd.f32 %v1088, %v1193
    %v1237 = vadd.f32 %v1089, %v1213
    %v1238 = vadd.f32 %v1090, %v1233
    %v1239 = vmul.f32 %v1235, 0.5
    %v1240 = vmul.f32 %v1236, 0.5
    %v1241 = vtanh.pop %v1239
    %v1242 = vtanh.pop %v1240
    %v1243 = vmul.f32 %v1241, 0.5
    %v1244 = vmul.f32 %v1242, 0.5
    %v1245 = vadd.f32 %v1243, 0.5
    %v1246 = vadd.f32 %v1244, 0.5
    %v1247 = vtanh.pop %v1237
    %v1248 = vmul.f32 %v1238, 0.5
    %v1249 = vtanh.pop %v1248
    %v1250 = vmul.f32 %v1249, 0.5
    %v1251 = vadd.f32 %v1250, 0.5
    %v1252 = vmul.f32 %v1246, %v1079
    %v1253 = vmul.f32 %v1245, %v1247
    %v1254 = vadd.f32 %v1252, %v1253
    %v1255 = vtanh.pop %v1254
    %v1256 = vmul.f32 %v1251, %v1255
    %s1257 = scalar_lea.vmem %s2, 48
    %1258 = vst [vmem:[%s1257] sm:$0xff] %v1256
    %s1259 = smul.u32 7, 4
    %s1260 = smul.addr %s1259, 8
    %s1261 = scalar_lea.vmem %s0, %s1260
    %v1262 = vld [vmem:[%s1261] sm:$0xff]
    %v1263 = vld [vmem:[%s1261 + $0x8] sm:$0xff]
    %v1264 = vld [vmem:[%s1261 + $0x10] sm:$0xff]
    %v1265 = vld [vmem:[%s1261 + $0x18] sm:$0xff]
    %v1266 = vld [vmem:[#allocation4] sm:$0xff]
    %v1267 = vld [vmem:[#allocation4 + $0x8] sm:$0xff]
    %v1268 = vld [vmem:[#allocation4 + $0x10] sm:$0xff]
    %v1269 = vld [vmem:[#allocation4 + $0x18] sm:$0xff]
    %v1270 = vld [vmem:[#allocation4 + $0x20] sm:$0xff]
    %v1271 = vld [vmem:[#allocation4 + $0x28] sm:$0xff]
    %v1272 = vld [vmem:[#allocation4 + $0x30] sm:$0xff]
    %v1273 = vld [vmem:[#allocation4 + $0x38] sm:$0xff]
    %v1274 = vld [vmem:[#allocation4 + $0x40] sm:$0xff]
    %v1275 = vld [vmem:[#allocation4 + $0x48] sm:$0xff]
    %v1276 = vld [vmem:[#allocation4 + $0x50] sm:$0xff]
    %v1277 = vld [vmem:[#allocation4 + $0x58] sm:$0xff]
    %v1278 = vld [vmem:[#allocation4 + $0x60] sm:$0xff]
    %v1279 = vld [vmem:[#allocation4 + $0x68] sm:$0xff]
    %v1280 = vld [vmem:[#allocation4 + $0x70] sm:$0xff]
    %v1281 = vld [vmem:[#allocation4 + $0x78] sm:$0xff]
    %v1282 = vld [vmem:[#allocation4 + $0x80] sm:$0xff]
    %v1283 = vld [vmem:[#allocation4 + $0x88] sm:$0xff]
    %v1284 = vld [vmem:[#allocation4 + $0x90] sm:$0xff]
    %v1285 = vld [vmem:[#allocation4 + $0x98] sm:$0xff]
    %v1286 = vld [vmem:[#allocation4 + $0xa0] sm:$0xff]
    %v1287 = vld [vmem:[#allocation4 + $0xa8] sm:$0xff]
    %v1288 = vld [vmem:[#allocation4 + $0xb0] sm:$0xff]
    %v1289 = vld [vmem:[#allocation4 + $0xb8] sm:$0xff]
    %v1290 = vld [vmem:[#allocation4 + $0xc0] sm:$0xff]
    %v1291 = vld [vmem:[#allocation4 + $0xc8] sm:$0xff]
    %v1292 = vld [vmem:[#allocation4 + $0xd0] sm:$0xff]
    %v1293 = vld [vmem:[#allocation4 + $0xd8] sm:$0xff]
    %v1294 = vld [vmem:[#allocation4 + $0xe0] sm:$0xff]
    %v1295 = vld [vmem:[#allocation4 + $0xe8] sm:$0xff]
    %v1296 = vld [vmem:[#allocation4 + $0xf0] sm:$0xff]
    %v1297 = vld [vmem:[#allocation4 + $0xf8] sm:$0xff]
    %v1298 = vld [vmem:[#allocation4 + $0x100] sm:$0xff]
    %v1299 = vld [vmem:[#allocation4 + $0x108] sm:$0xff]
    %v1300 = vld [vmem:[#allocation4 + $0x110] sm:$0xff]
    %v1301 = vld [vmem:[#allocation4 + $0x118] sm:$0xff]
    %v1302 = vld [vmem:[#allocation4 + $0x120] sm:$0xff]
    %v1303 = vld [vmem:[#allocation4 + $0x128] sm:$0xff]
    %v1304 = vld [vmem:[#allocation4 + $0x130] sm:$0xff]
    %v1305 = vld [vmem:[#allocation4 + $0x138] sm:$0xff]
    %v1306 = vld [vmem:[#allocation4 + $0x140] sm:$0xff]
    %v1307 = vld [vmem:[#allocation4 + $0x148] sm:$0xff]
    %v1308 = vld [vmem:[#allocation4 + $0x150] sm:$0xff]
    %v1309 = vld [vmem:[#allocation4 + $0x158] sm:$0xff]
    %v1310 = vld [vmem:[#allocation4 + $0x160] sm:$0xff]
    %v1311 = vld [vmem:[#allocation4 + $0x168] sm:$0xff]
    %v1312 = vld [vmem:[#allocation4 + $0x170] sm:$0xff]
    %v1313 = vld [vmem:[#allocation4 + $0x178] sm:$0xff]
    %v1314 = vld [vmem:[#allocation4 + $0x180] sm:$0xff]
    %v1315 = vld [vmem:[#allocation4 + $0x188] sm:$0xff]
    %v1316 = vld [vmem:[#allocation4 + $0x190] sm:$0xff]
    %v1317 = vld [vmem:[#allocation4 + $0x198] sm:$0xff]
    %v1318 = vld [vmem:[#allocation4 + $0x1a0] sm:$0xff]
    %v1319 = vld [vmem:[#allocation4 + $0x1a8] sm:$0xff]
    %v1320 = vld [vmem:[#allocation4 + $0x1b0] sm:$0xff]
    %v1321 = vld [vmem:[#allocation4 + $0x1b8] sm:$0xff]
    %v1322 = vld [vmem:[#allocation4 + $0x1c0] sm:$0xff]
    %v1323 = vld [vmem:[#allocation4 + $0x1c8] sm:$0xff]
    %v1324 = vld [vmem:[#allocation4 + $0x1d0] sm:$0xff]
    %v1325 = vld [vmem:[#allocation4 + $0x1d8] sm:$0xff]
    %v1326 = vld [vmem:[#allocation4 + $0x1e0] sm:$0xff]
    %v1327 = vld [vmem:[#allocation4 + $0x1e8] sm:$0xff]
    %v1328 = vld [vmem:[#allocation4 + $0x1f0] sm:$0xff]
    %v1329 = vld [vmem:[#allocation4 + $0x1f8] sm:$0xff]
    %1330 = vmatpush.msra.mxu0 %v1326
    %1331 = vmatpush.msra.mxu0 %v1322
    %1332 = vmatpush.msra.mxu0 %v1318
    %1333 = vmatpush.msra.mxu0 %v1314
    %1334 = vmatpush.msra.mxu0 %v1310
    %1335 = vmatpush.msra.mxu0 %v1306
    %1336 = vmatpush.msra.mxu0 %v1302
    %1337 = vmatpush.msra.mxu0 %v1298
    %1338 = vmatpush.msra.mxu0 %v1294
    %1339 = vmatpush.msra.mxu0 %v1290
    %1340 = vmatpush.msra.mxu0 %v1286
    %1341 = vmatpush.msra.mxu0 %v1282
    %1342 = vmatpush.msra.mxu0 %v1278
    %1343 = vmatpush.msra.mxu0 %v1274
    %1344 = vmatpush.msra.mxu0 %v1270
    %1345 = vmatpush.msra.mxu0 %v1266
    %1346 = vmatmul.f32.gmra.mxu0 %v1256
    %v1347 = vpop.f32.mrf.mxu0
    %v1348 = vadd.f32 0.0, %v1347
    %1349 = vdwg.mxu0
    %1350 = vmatpush.msra.mxu0 %v1327
    %1351 = vmatpush.msra.mxu0 %v1323
    %1352 = vmatpush.msra.mxu0 %v1319
    %1353 = vmatpush.msra.mxu0 %v1315
    %1354 = vmatpush.msra.mxu0 %v1311
    %1355 = vmatpush.msra.mxu0 %v1307
    %1356 = vmatpush.msra.mxu0 %v1303
    %1357 = vmatpush.msra.mxu0 %v1299
    %1358 = vmatpush.msra.mxu0 %v1295
    %1359 = vmatpush.msra.mxu0 %v1291
    %1360 = vmatpush.msra.mxu0 %v1287
    %1361 = vmatpush.msra.mxu0 %v1283
    %1362 = vmatpush.msra.mxu0 %v1279
    %1363 = vmatpush.msra.mxu0 %v1275
    %1364 = vmatpush.msra.mxu0 %v1271
    %1365 = vmatpush.msra.mxu0 %v1267
    %1366 = vmatmul.f32.gmra.mxu0 %v1256
    %v1367 = vpop.f32.mrf.mxu0
    %v1368 = vadd.f32 0.0, %v1367
    %1369 = vdwg.mxu0
    %1370 = vmatpush.msra.mxu0 %v1328
    %1371 = vmatpush.msra.mxu0 %v1324
    %1372 = vmatpush.msra.mxu0 %v1320
    %1373 = vmatpush.msra.mxu0 %v1316
    %1374 = vmatpush.msra.mxu0 %v1312
    %1375 = vmatpush.msra.mxu0 %v1308
    %1376 = vmatpush.msra.mxu0 %v1304
    %1377 = vmatpush.msra.mxu0 %v1300
    %1378 = vmatpush.msra.mxu0 %v1296
    %1379 = vmatpush.msra.mxu0 %v1292
    %1380 = vmatpush.msra.mxu0 %v1288
    %1381 = vmatpush.msra.mxu0 %v1284
    %1382 = vmatpush.msra.mxu0 %v1280
    %1383 = vmatpush.msra.mxu0 %v1276
    %1384 = vmatpush.msra.mxu0 %v1272
    %1385 = vmatpush.msra.mxu0 %v1268
    %1386 = vmatmul.f32.gmra.mxu0 %v1256
    %v1387 = vpop.f32.mrf.mxu0
    %v1388 = vadd.f32 0.0, %v1387
    %1389 = vdwg.mxu0
    %1390 = vmatpush.msra.mxu0 %v1329
    %1391 = vmatpush.msra.mxu0 %v1325
    %1392 = vmatpush.msra.mxu0 %v1321
    %1393 = vmatpush.msra.mxu0 %v1317
    %1394 = vmatpush.msra.mxu0 %v1313
    %1395 = vmatpush.msra.mxu0 %v1309
    %1396 = vmatpush.msra.mxu0 %v1305
    %1397 = vmatpush.msra.mxu0 %v1301
    %1398 = vmatpush.msra.mxu0 %v1297
    %1399 = vmatpush.msra.mxu0 %v1293
    %1400 = vmatpush.msra.mxu0 %v1289
    %1401 = vmatpush.msra.mxu0 %v1285
    %1402 = vmatpush.msra.mxu0 %v1281
    %1403 = vmatpush.msra.mxu0 %v1277
    %1404 = vmatpush.msra.mxu0 %v1273
    %1405 = vmatpush.msra.mxu0 %v1269
    %1406 = vmatmul.f32.gmra.mxu0 %v1256
    %v1407 = vpop.f32.mrf.mxu0
    %v1408 = vadd.f32 0.0, %v1407
    %1409 = vdwg.mxu0
    %v1410 = vadd.f32 %v1262, %v1348
    %v1411 = vadd.f32 %v1263, %v1368
    %v1412 = vadd.f32 %v1264, %v1388
    %v1413 = vadd.f32 %v1265, %v1408
    %v1414 = vmul.f32 %v1410, 0.5
    %v1415 = vmul.f32 %v1411, 0.5
    %v1416 = vtanh.pop %v1414
    %v1417 = vtanh.pop %v1415
    %v1418 = vmul.f32 %v1416, 0.5
    %v1419 = vmul.f32 %v1417, 0.5
    %v1420 = vadd.f32 %v1418, 0.5
    %v1421 = vadd.f32 %v1419, 0.5
    %v1422 = vtanh.pop %v1412
    %v1423 = vmul.f32 %v1413, 0.5
    %v1424 = vtanh.pop %v1423
    %v1425 = vmul.f32 %v1424, 0.5
    %v1426 = vadd.f32 %v1425, 0.5
    %v1427 = vmul.f32 %v1421, %v1254
    %v1428 = vmul.f32 %v1420, %v1422
    %v1429 = vadd.f32 %v1427, %v1428
    %v1430 = vtanh.pop %v1429
    %v1431 = vmul.f32 %v1426, %v1430
    %s1432 = scalar_lea.vmem %s2, 56
    %1433 = vst [vmem:[%s1432] sm:$0xff] %v1431
    %1434 = vst [vmem:[#allocation2] sm:$0xff] %v1431
    %1435 = vst [vmem:[#allocation3] sm:$0xff] %v1429
    // Predicated region
    $region18: #{pc_lstm_forward.2} parent=1 // pred_check
      _
    $region19: #{pc_lstm_forward.2} parent=1 // pred_check_branch
      %1437 = sbr.rel (0) target = $region21
    $region20: #{pc_lstm_forward.2} parent=1 // pred_region
      _
    $region21: #{pc_lstm_forward.2} parent=1 // pred_fallthru
      _
    // Predicated region
    $region22: #{pc_lstm_forward.2} parent=1 // pred_check
      _
    $region23: #{pc_lstm_forward.2} parent=1 // pred_check_branch
      %1439 = sbr.rel (0) target = $region25
    $region24: #{pc_lstm_forward.2} parent=1 // pred_region
      _
    $region25: #{pc_lstm_forward.2} parent=1 // pred_fallthru
      _
    %1440 = vsyncpa [#allocation5], 1

// kernel: pc_lstm_forward.3
$region0: #{pc_lstm_forward.3}
  #allocation0 [shape = 'u32[]', space=smem, size = 0x4, offset = 0x4, fixed_abs, tag = 'smem constant byte address 0x4 - core index']
  #allocation1 [shape = 'u32[72,128]{1,0:T(1,128)}', space=vmem, size = 0x9000, scoped, tag = 'internal scratch']
  #allocation2 [shape = 'f32[8,128]{1,0:T(8,128)}', space=vmem, size = 0x1000, scoped, tag = 'scratch operand']
  #allocation3 [shape = 'f32[8,128]{1,0:T(8,128)}', space=vmem, size = 0x1000, scoped, tag = 'scratch operand']
  %s0 = inlined_call_operand.vmem [shape: f32[1,1,64,512], index: 0, kind: input, shape index: {}]
  %s1 = inlined_call_operand.vmem [shape: f32[128,512], index: 1, kind: input, shape index: {}]
  %s2 = inlined_call_operand.vmem [shape: f32[1,1,64,128], index: 2, kind: output, shape index: {}]
  %s3 = sld [smem:[#allocation0]]
  $region22: #{pc_lstm_forward.3} parent=0
    _
  %s5 = ssub.s32 1, %s3
  %s6 = scalar_select 0, %s5, %s3
  // Predicated region
  $region2: #{pc_lstm_forward.3} parent=0 // pred_check
    _
  $region3: #{pc_lstm_forward.3} parent=0 // pred_check_branch
    %8 = sbr.rel (0) target = $region5
  $region4: #{pc_lstm_forward.3} parent=0 // pred_region
    _
  $region5: #{pc_lstm_forward.3} parent=0 // pred_fallthru
    _
  // Predicated region
  $region6: #{pc_lstm_forward.3} parent=0 // pred_check
    _
  $region7: #{pc_lstm_forward.3} parent=0 // pred_check_branch
    %10 = sbr.rel (0) target = $region9
  $region8: #{pc_lstm_forward.3} parent=0 // pred_region
    _
  $region9: #{pc_lstm_forward.3} parent=0 // pred_fallthru
    _
  %p11 = scmp.eq.s32.totalorder 0, 0
  // Predicated region
  $region10: #{pc_lstm_forward.3} parent=0 // pred_check
    %p12 = pneg %p11
  $region11: #{pc_lstm_forward.3} parent=0 // pred_check_branch
    %14 = sbr.rel (%p12) target = $region13
  $region12: #{pc_lstm_forward.3} parent=0 // pred_region
    %15 = vst [vmem:[#allocation2] sm:$0xff] 0.0
    %16 = vst [vmem:[#allocation3] sm:$0xff] 0.0
  $region13: #{pc_lstm_forward.3} parent=0 // pred_fallthru
    _
  %v17 = vld [vmem:[#allocation2] sm:$0xff]
  %v18 = vld [vmem:[#allocation3] sm:$0xff]
  %s19 = smul.u32 0, 4
  %s20 = smul.addr %s19, 8
  %s21 = scalar_lea.vmem %s0, %s20
  %v22 = vld [vmem:[%s21] sm:$0xff]
  %v23 = vld [vmem:[%s21 + $0x8] sm:$0xff]
  %v24 = vld [vmem:[%s21 + $0x10] sm:$0xff]
  %v25 = vld [vmem:[%s21 + $0x18] sm:$0xff]
  %v26 = vld [vmem:[%s1] sm:$0xff]
  %v27 = vld [vmem:[%s1 + $0x8] sm:$0xff]
  %v28 = vld [vmem:[%s1 + $0x10] sm:$0xff]
  %v29 = vld [vmem:[%s1 + $0x18] sm:$0xff]
  %v30 = vld [vmem:[%s1 + $0x20] sm:$0xff]
  %v31 = vld [vmem:[%s1 + $0x28] sm:$0xff]
  %v32 = vld [vmem:[%s1 + $0x30] sm:$0xff]
  %v33 = vld [vmem:[%s1 + $0x38] sm:$0xff]
  %v34 = vld [vmem:[%s1 + $0x40] sm:$0xff]
  %v35 = vld [vmem:[%s1 + $0x48] sm:$0xff]
  %v36 = vld [vmem:[%s1 + $0x50] sm:$0xff]
  %v37 = vld [vmem:[%s1 + $0x58] sm:$0xff]
  %v38 = vld [vmem:[%s1 + $0x60] sm:$0xff]
  %v39 = vld [vmem:[%s1 + $0x68] sm:$0xff]
  %v40 = vld [vmem:[%s1 + $0x70] sm:$0xff]
  %v41 = vld [vmem:[%s1 + $0x78] sm:$0xff]
  %v42 = vld [vmem:[%s1 + $0x80] sm:$0xff]
  %v43 = vld [vmem:[%s1 + $0x88] sm:$0xff]
  %v44 = vld [vmem:[%s1 + $0x90] sm:$0xff]
  %v45 = vld [vmem:[%s1 + $0x98] sm:$0xff]
  %v46 = vld [vmem:[%s1 + $0xa0] sm:$0xff]
  %v47 = vld [vmem:[%s1 + $0xa8] sm:$0xff]
  %v48 = vld [vmem:[%s1 + $0xb0] sm:$0xff]
  %v49 = vld [vmem:[%s1 + $0xb8] sm:$0xff]
  %v50 = vld [vmem:[%s1 + $0xc0] sm:$0xff]
  %v51 = vld [vmem:[%s1 + $0xc8] sm:$0xff]
  %v52 = vld [vmem:[%s1 + $0xd0] sm:$0xff]
  %v53 = vld [vmem:[%s1 + $0xd8] sm:$0xff]
  %v54 = vld [vmem:[%s1 + $0xe0] sm:$0xff]
  %v55 = vld [vmem:[%s1 + $0xe8] sm:$0xff]
  %v56 = vld [vmem:[%s1 + $0xf0] sm:$0xff]
  %v57 = vld [vmem:[%s1 + $0xf8] sm:$0xff]
  %v58 = vld [vmem:[%s1 + $0x100] sm:$0xff]
  %v59 = vld [vmem:[%s1 + $0x108] sm:$0xff]
  %v60 = vld [vmem:[%s1 + $0x110] sm:$0xff]
  %v61 = vld [vmem:[%s1 + $0x118] sm:$0xff]
  %v62 = vld [vmem:[%s1 + $0x120] sm:$0xff]
  %v63 = vld [vmem:[%s1 + $0x128] sm:$0xff]
  %v64 = vld [vmem:[%s1 + $0x130] sm:$0xff]
  %v65 = vld [vmem:[%s1 + $0x138] sm:$0xff]
  %v66 = vld [vmem:[%s1 + $0x140] sm:$0xff]
  %v67 = vld [vmem:[%s1 + $0x148] sm:$0xff]
  %v68 = vld [vmem:[%s1 + $0x150] sm:$0xff]
  %v69 = vld [vmem:[%s1 + $0x158] sm:$0xff]
  %v70 = vld [vmem:[%s1 + $0x160] sm:$0xff]
  %v71 = vld [vmem:[%s1 + $0x168] sm:$0xff]
  %v72 = vld [vmem:[%s1 + $0x170] sm:$0xff]
  %v73 = vld [vmem:[%s1 + $0x178] sm:$0xff]
  %v74 = vld [vmem:[%s1 + $0x180] sm:$0xff]
  %v75 = vld [vmem:[%s1 + $0x188] sm:$0xff]
  %v76 = vld [vmem:[%s1 + $0x190] sm:$0xff]
  %v77 = vld [vmem:[%s1 + $0x198] sm:$0xff]
  %v78 = vld [vmem:[%s1 + $0x1a0] sm:$0xff]
  %v79 = vld [vmem:[%s1 + $0x1a8] sm:$0xff]
  %v80 = vld [vmem:[%s1 + $0x1b0] sm:$0xff]
  %v81 = vld [vmem:[%s1 + $0x1b8] sm:$0xff]
  %v82 = vld [vmem:[%s1 + $0x1c0] sm:$0xff]
  %v83 = vld [vmem:[%s1 + $0x1c8] sm:$0xff]
  %v84 = vld [vmem:[%s1 + $0x1d0] sm:$0xff]
  %v85 = vld [vmem:[%s1 + $0x1d8] sm:$0xff]
  %v86 = vld [vmem:[%s1 + $0x1e0] sm:$0xff]
  %v87 = vld [vmem:[%s1 + $0x1e8] sm:$0xff]
  %v88 = vld [vmem:[%s1 + $0x1f0] sm:$0xff]
  %v89 = vld [vmem:[%s1 + $0x1f8] sm:$0xff]
  %90 = vmatpush.msra.mxu0 %v86
  %91 = vmatpush.msra.mxu0 %v82
  %92 = vmatpush.msra.mxu0 %v78
  %93 = vmatpush.msra.mxu0 %v74
  %94 = vmatpush.msra.mxu0 %v70
  %95 = vmatpush.msra.mxu0 %v66
  %96 = vmatpush.msra.mxu0 %v62
  %97 = vmatpush.msra.mxu0 %v58
  %98 = vmatpush.msra.mxu0 %v54
  %99 = vmatpush.msra.mxu0 %v50
  %100 = vmatpush.msra.mxu0 %v46
  %101 = vmatpush.msra.mxu0 %v42
  %102 = vmatpush.msra.mxu0 %v38
  %103 = vmatpush.msra.mxu0 %v34
  %104 = vmatpush.msra.mxu0 %v30
  %105 = vmatpush.msra.mxu0 %v26
  %106 = vmatmul.f32.gmra.mxu0 %v17
  %v107 = vpop.f32.mrf.mxu0
  %v108 = vadd.f32 0.0, %v107
  %109 = vdwg.mxu0
  %110 = vmatpush.msra.mxu0 %v87
  %111 = vmatpush.msra.mxu0 %v83
  %112 = vmatpush.msra.mxu0 %v79
  %113 = vmatpush.msra.mxu0 %v75
  %114 = vmatpush.msra.mxu0 %v71
  %115 = vmatpush.msra.mxu0 %v67
  %116 = vmatpush.msra.mxu0 %v63
  %117 = vmatpush.msra.mxu0 %v59
  %118 = vmatpush.msra.mxu0 %v55
  %119 = vmatpush.msra.mxu0 %v51
  %120 = vmatpush.msra.mxu0 %v47
  %121 = vmatpush.msra.mxu0 %v43
  %122 = vmatpush.msra.mxu0 %v39
  %123 = vmatpush.msra.mxu0 %v35
  %124 = vmatpush.msra.mxu0 %v31
  %125 = vmatpush.msra.mxu0 %v27
  %126 = vmatmul.f32.gmra.mxu0 %v17
  %v127 = vpop.f32.mrf.mxu0
  %v128 = vadd.f32 0.0, %v127
  %129 = vdwg.mxu0
  %130 = vmatpush.msra.mxu0 %v88
  %131 = vmatpush.msra.mxu0 %v84
  %132 = vmatpush.msra.mxu0 %v80
  %133 = vmatpush.msra.mxu0 %v76
  %134 = vmatpush.msra.mxu0 %v72
  %135 = vmatpush.msra.mxu0 %v68
  %136 = vmatpush.msra.mxu0 %v64
  %137 = vmatpush.msra.mxu0 %v60
  %138 = vmatpush.msra.mxu0 %v56
  %139 = vmatpush.msra.mxu0 %v52
  %140 = vmatpush.msra.mxu0 %v48
  %141 = vmatpush.msra.mxu0 %v44
  %142 = vmatpush.msra.mxu0 %v40
  %143 = vmatpush.msra.mxu0 %v36
  %144 = vmatpush.msra.mxu0 %v32
  %145 = vmatpush.msra.mxu0 %v28
  %146 = vmatmul.f32.gmra.mxu0 %v17
  %v147 = vpop.f32.mrf.mxu0
  %v148 = vadd.f32 0.0, %v147
  %149 = vdwg.mxu0
  %150 = vmatpush.msra.mxu0 %v89
  %151 = vmatpush.msra.mxu0 %v85
  %152 = vmatpush.msra.mxu0 %v81
  %153 = vmatpush.msra.mxu0 %v77
  %154 = vmatpush.msra.mxu0 %v73
  %155 = vmatpush.msra.mxu0 %v69
  %156 = vmatpush.msra.mxu0 %v65
  %157 = vmatpush.msra.mxu0 %v61
  %158 = vmatpush.msra.mxu0 %v57
  %159 = vmatpush.msra.mxu0 %v53
  %160 = vmatpush.msra.mxu0 %v49
  %161 = vmatpush.msra.mxu0 %v45
  %162 = vmatpush.msra.mxu0 %v41
  %163 = vmatpush.msra.mxu0 %v37
  %164 = vmatpush.msra.mxu0 %v33
  %165 = vmatpush.msra.mxu0 %v29
  %166 = vmatmul.f32.gmra.mxu0 %v17
  %v167 = vpop.f32.mrf.mxu0
  %v168 = vadd.f32 0.0, %v167
  %169 = vdwg.mxu0
  %v170 = vadd.f32 %v22, %v108
  %v171 = vadd.f32 %v23, %v128
  %v172 = vadd.f32 %v24, %v148
  %v173 = vadd.f32 %v25, %v168
  %v174 = vmul.f32 %v170, 0.5
  %v175 = vmul.f32 %v171, 0.5
  %v176 = vtanh.pop %v174
  %v177 = vtanh.pop %v175
  %v178 = vmul.f32 %v176, 0.5
  %v179 = vmul.f32 %v177, 0.5
  %v180 = vadd.f32 %v178, 0.5
  %v181 = vadd.f32 %v179, 0.5
  %v182 = vtanh.pop %v172
  %v183 = vmul.f32 %v173, 0.5
  %v184 = vtanh.pop %v183
  %v185 = vmul.f32 %v184, 0.5
  %v186 = vadd.f32 %v185, 0.5
  %v187 = vmul.f32 %v181, %v18
  %v188 = vmul.f32 %v180, %v182
  %v189 = vadd.f32 %v187, %v188
  %v190 = vtanh.pop %v189
  %v191 = vmul.f32 %v186, %v190
  %192 = vst [vmem:[%s2] sm:$0xff] %v191
  %s193 = smul.u32 1, 4
  %s194 = smul.addr %s193, 8
  %s195 = scalar_lea.vmem %s0, %s194
  %v196 = vld [vmem:[%s195] sm:$0xff]
  %v197 = vld [vmem:[%s195 + $0x8] sm:$0xff]
  %v198 = vld [vmem:[%s195 + $0x10] sm:$0xff]
  %v199 = vld [vmem:[%s195 + $0x18] sm:$0xff]
  %v200 = vld [vmem:[%s1] sm:$0xff]
  %v201 = vld [vmem:[%s1 + $0x8] sm:$0xff]
  %v202 = vld [vmem:[%s1 + $0x10] sm:$0xff]
  %v203 = vld [vmem:[%s1 + $0x18] sm:$0xff]
  %v204 = vld [vmem:[%s1 + $0x20] sm:$0xff]
  %v205 = vld [vmem:[%s1 + $0x28] sm:$0xff]
  %v206 = vld [vmem:[%s1 + $0x30] sm:$0xff]
  %v207 = vld [vmem:[%s1 + $0x38] sm:$0xff]
  %v208 = vld [vmem:[%s1 + $0x40] sm:$0xff]
  %v209 = vld [vmem:[%s1 + $0x48] sm:$0xff]
  %v210 = vld [vmem:[%s1 + $0x50] sm:$0xff]
  %v211 = vld [vmem:[%s1 + $0x58] sm:$0xff]
  %v212 = vld [vmem:[%s1 + $0x60] sm:$0xff]
  %v213 = vld [vmem:[%s1 + $0x68] sm:$0xff]
  %v214 = vld [vmem:[%s1 + $0x70] sm:$0xff]
  %v215 = vld [vmem:[%s1 + $0x78] sm:$0xff]
  %v216 = vld [vmem:[%s1 + $0x80] sm:$0xff]
  %v217 = vld [vmem:[%s1 + $0x88] sm:$0xff]
  %v218 = vld [vmem:[%s1 + $0x90] sm:$0xff]
  %v219 = vld [vmem:[%s1 + $0x98] sm:$0xff]
  %v220 = vld [vmem:[%s1 + $0xa0] sm:$0xff]
  %v221 = vld [vmem:[%s1 + $0xa8] sm:$0xff]
  %v222 = vld [vmem:[%s1 + $0xb0] sm:$0xff]
  %v223 = vld [vmem:[%s1 + $0xb8] sm:$0xff]
  %v224 = vld [vmem:[%s1 + $0xc0] sm:$0xff]
  %v225 = vld [vmem:[%s1 + $0xc8] sm:$0xff]
  %v226 = vld [vmem:[%s1 + $0xd0] sm:$0xff]
  %v227 = vld [vmem:[%s1 + $0xd8] sm:$0xff]
  %v228 = vld [vmem:[%s1 + $0xe0] sm:$0xff]
  %v229 = vld [vmem:[%s1 + $0xe8] sm:$0xff]
  %v230 = vld [vmem:[%s1 + $0xf0] sm:$0xff]
  %v231 = vld [vmem:[%s1 + $0xf8] sm:$0xff]
  %v232 = vld [vmem:[%s1 + $0x100] sm:$0xff]
  %v233 = vld [vmem:[%s1 + $0x108] sm:$0xff]
  %v234 = vld [vmem:[%s1 + $0x110] sm:$0xff]
  %v235 = vld [vmem:[%s1 + $0x118] sm:$0xff]
  %v236 = vld [vmem:[%s1 + $0x120] sm:$0xff]
  %v237 = vld [vmem:[%s1 + $0x128] sm:$0xff]
  %v238 = vld [vmem:[%s1 + $0x130] sm:$0xff]
  %v239 = vld [vmem:[%s1 + $0x138] sm:$0xff]
  %v240 = vld [vmem:[%s1 + $0x140] sm:$0xff]
  %v241 = vld [vmem:[%s1 + $0x148] sm:$0xff]
  %v242 = vld [vmem:[%s1 + $0x150] sm:$0xff]
  %v243 = vld [vmem:[%s1 + $0x158] sm:$0xff]
  %v244 = vld [vmem:[%s1 + $0x160] sm:$0xff]
  %v245 = vld [vmem:[%s1 + $0x168] sm:$0xff]
  %v246 = vld [vmem:[%s1 + $0x170] sm:$0xff]
  %v247 = vld [vmem:[%s1 + $0x178] sm:$0xff]
  %v248 = vld [vmem:[%s1 + $0x180] sm:$0xff]
  %v249 = vld [vmem:[%s1 + $0x188] sm:$0xff]
  %v250 = vld [vmem:[%s1 + $0x190] sm:$0xff]
  %v251 = vld [vmem:[%s1 + $0x198] sm:$0xff]
  %v252 = vld [vmem:[%s1 + $0x1a0] sm:$0xff]
  %v253 = vld [vmem:[%s1 + $0x1a8] sm:$0xff]
  %v254 = vld [vmem:[%s1 + $0x1b0] sm:$0xff]
  %v255 = vld [vmem:[%s1 + $0x1b8] sm:$0xff]
  %v256 = vld [vmem:[%s1 + $0x1c0] sm:$0xff]
  %v257 = vld [vmem:[%s1 + $0x1c8] sm:$0xff]
  %v258 = vld [vmem:[%s1 + $0x1d0] sm:$0xff]
  %v259 = vld [vmem:[%s1 + $0x1d8] sm:$0xff]
  %v260 = vld [vmem:[%s1 + $0x1e0] sm:$0xff]
  %v261 = vld [vmem:[%s1 + $0x1e8] sm:$0xff]
  %v262 = vld [vmem:[%s1 + $0x1f0] sm:$0xff]
  %v263 = vld [vmem:[%s1 + $0x1f8] sm:$0xff]
  %264 = vmatpush.msra.mxu0 %v260
  %265 = vmatpush.msra.mxu0 %v256
  %266 = vmatpush.msra.mxu0 %v252
  %267 = vmatpush.msra.mxu0 %v248
  %268 = vmatpush.msra.mxu0 %v244
  %269 = vmatpush.msra.mxu0 %v240
  %270 = vmatpush.msra.mxu0 %v236
  %271 = vmatpush.msra.mxu0 %v232
  %272 = vmatpush.msra.mxu0 %v228
  %273 = vmatpush.msra.mxu0 %v224
  %274 = vmatpush.msra.mxu0 %v220
  %275 = vmatpush.msra.mxu0 %v216
  %276 = vmatpush.msra.mxu0 %v212
  %277 = vmatpush.msra.mxu0 %v208
  %278 = vmatpush.msra.mxu0 %v204
  %279 = vmatpush.msra.mxu0 %v200
  %280 = vmatmul.f32.gmra.mxu0 %v191
  %v281 = vpop.f32.mrf.mxu0
  %v282 = vadd.f32 0.0, %v281
  %283 = vdwg.mxu0
  %284 = vmatpush.msra.mxu0 %v261
  %285 = vmatpush.msra.mxu0 %v257
  %286 = vmatpush.msra.mxu0 %v253
  %287 = vmatpush.msra.mxu0 %v249
  %288 = vmatpush.msra.mxu0 %v245
  %289 = vmatpush.msra.mxu0 %v241
  %290 = vmatpush.msra.mxu0 %v237
  %291 = vmatpush.msra.mxu0 %v233
  %292 = vmatpush.msra.mxu0 %v229
  %293 = vmatpush.msra.mxu0 %v225
  %294 = vmatpush.msra.mxu0 %v221
  %295 = vmatpush.msra.mxu0 %v217
  %296 = vmatpush.msra.mxu0 %v213
  %297 = vmatpush.msra.mxu0 %v209
  %298 = vmatpush.msra.mxu0 %v205
  %299 = vmatpush.msra.mxu0 %v201
  %300 = vmatmul.f32.gmra.mxu0 %v191
  %v301 = vpop.f32.mrf.mxu0
  %v302 = vadd.f32 0.0, %v301
  %303 = vdwg.mxu0
  %304 = vmatpush.msra.mxu0 %v262
  %305 = vmatpush.msra.mxu0 %v258
  %306 = vmatpush.msra.mxu0 %v254
  %307 = vmatpush.msra.mxu0 %v250
  %308 = vmatpush.msra.mxu0 %v246
  %309 = vmatpush.msra.mxu0 %v242
  %310 = vmatpush.msra.mxu0 %v238
  %311 = vmatpush.msra.mxu0 %v234
  %312 = vmatpush.msra.mxu0 %v230
  %313 = vmatpush.msra.mxu0 %v226
  %314 = vmatpush.msra.mxu0 %v222
  %315 = vmatpush.msra.mxu0 %v218
  %316 = vmatpush.msra.mxu0 %v214
  %317 = vmatpush.msra.mxu0 %v210
  %318 = vmatpush.msra.mxu0 %v206
  %319 = vmatpush.msra.mxu0 %v202
  %320 = vmatmul.f32.gmra.mxu0 %v191
  %v321 = vpop.f32.mrf.mxu0
  %v322 = vadd.f32 0.0, %v321
  %323 = vdwg.mxu0
  %324 = vmatpush.msra.mxu0 %v263
  %325 = vmatpush.msra.mxu0 %v259
  %326 = vmatpush.msra.mxu0 %v255
  %327 = vmatpush.msra.mxu0 %v251
  %328 = vmatpush.msra.mxu0 %v247
  %329 = vmatpush.msra.mxu0 %v243
  %330 = vmatpush.msra.mxu0 %v239
  %331 = vmatpush.msra.mxu0 %v235
  %332 = vmatpush.msra.mxu0 %v231
  %333 = vmatpush.msra.mxu0 %v227
  %334 = vmatpush.msra.mxu0 %v223
  %335 = vmatpush.msra.mxu0 %v219
  %336 = vmatpush.msra.mxu0 %v215
  %337 = vmatpush.msra.mxu0 %v211
  %338 = vmatpush.msra.mxu0 %v207
  %339 = vmatpush.msra.mxu0 %v203
  %340 = vmatmul.f32.gmra.mxu0 %v191
  %v341 = vpop.f32.mrf.mxu0
  %v342 = vadd.f32 0.0, %v341
  %343 = vdwg.mxu0
  %v344 = vadd.f32 %v196, %v282
  %v345 = vadd.f32 %v197, %v302
  %v346 = vadd.f32 %v198, %v322
  %v347 = vadd.f32 %v199, %v342
  %v348 = vmul.f32 %v344, 0.5
  %v349 = vmul.f32 %v345, 0.5
  %v350 = vtanh.pop %v348
  %v351 = vtanh.pop %v349
  %v352 = vmul.f32 %v350, 0.5
  %v353 = vmul.f32 %v351, 0.5
  %v354 = vadd.f32 %v352, 0.5
  %v355 = vadd.f32 %v353, 0.5
  %v356 = vtanh.pop %v346
  %v357 = vmul.f32 %v347, 0.5
  %v358 = vtanh.pop %v357
  %v359 = vmul.f32 %v358, 0.5
  %v360 = vadd.f32 %v359, 0.5
  %v361 = vmul.f32 %v355, %v189
  %v362 = vmul.f32 %v354, %v356
  %v363 = vadd.f32 %v361, %v362
  %v364 = vtanh.pop %v363
  %v365 = vmul.f32 %v360, %v364
  %s366 = scalar_lea.vmem %s2, 8
  %367 = vst [vmem:[%s366] sm:$0xff] %v365
  %s368 = smul.u32 2, 4
  %s369 = smul.addr %s368, 8
  %s370 = scalar_lea.vmem %s0, %s369
  %v371 = vld [vmem:[%s370] sm:$0xff]
  %v372 = vld [vmem:[%s370 + $0x8] sm:$0xff]
  %v373 = vld [vmem:[%s370 + $0x10] sm:$0xff]
  %v374 = vld [vmem:[%s370 + $0x18] sm:$0xff]
  %v375 = vld [vmem:[%s1] sm:$0xff]
  %v376 = vld [vmem:[%s1 + $0x8] sm:$0xff]
  %v377 = vld [vmem:[%s1 + $0x10] sm:$0xff]
  %v378 = vld [vmem:[%s1 + $0x18] sm:$0xff]
  %v379 = vld [vmem:[%s1 + $0x20] sm:$0xff]
  %v380 = vld [vmem:[%s1 + $0x28] sm:$0xff]
  %v381 = vld [vmem:[%s1 + $0x30] sm:$0xff]
  %v382 = vld [vmem:[%s1 + $0x38] sm:$0xff]
  %v383 = vld [vmem:[%s1 + $0x40] sm:$0xff]
  %v384 = vld [vmem:[%s1 + $0x48] sm:$0xff]
  %v385 = vld [vmem:[%s1 + $0x50] sm:$0xff]
  %v386 = vld [vmem:[%s1 + $0x58] sm:$0xff]
  %v387 = vld [vmem:[%s1 + $0x60] sm:$0xff]
  %v388 = vld [vmem:[%s1 + $0x68] sm:$0xff]
  %v389 = vld [vmem:[%s1 + $0x70] sm:$0xff]
  %v390 = vld [vmem:[%s1 + $0x78] sm:$0xff]
  %v391 = vld [vmem:[%s1 + $0x80] sm:$0xff]
  %v392 = vld [vmem:[%s1 + $0x88] sm:$0xff]
  %v393 = vld [vmem:[%s1 + $0x90] sm:$0xff]
  %v394 = vld [vmem:[%s1 + $0x98] sm:$0xff]
  %v395 = vld [vmem:[%s1 + $0xa0] sm:$0xff]
  %v396 = vld [vmem:[%s1 + $0xa8] sm:$0xff]
  %v397 = vld [vmem:[%s1 + $0xb0] sm:$0xff]
  %v398 = vld [vmem:[%s1 + $0xb8] sm:$0xff]
  %v399 = vld [vmem:[%s1 + $0xc0] sm:$0xff]
  %v400 = vld [vmem:[%s1 + $0xc8] sm:$0xff]
  %v401 = vld [vmem:[%s1 + $0xd0] sm:$0xff]
  %v402 = vld [vmem:[%s1 + $0xd8] sm:$0xff]
  %v403 = vld [vmem:[%s1 + $0xe0] sm:$0xff]
  %v404 = vld [vmem:[%s1 + $0xe8] sm:$0xff]
  %v405 = vld [vmem:[%s1 + $0xf0] sm:$0xff]
  %v406 = vld [vmem:[%s1 + $0xf8] sm:$0xff]
  %v407 = vld [vmem:[%s1 + $0x100] sm:$0xff]
  %v408 = vld [vmem:[%s1 + $0x108] sm:$0xff]
  %v409 = vld [vmem:[%s1 + $0x110] sm:$0xff]
  %v410 = vld [vmem:[%s1 + $0x118] sm:$0xff]
  %v411 = vld [vmem:[%s1 + $0x120] sm:$0xff]
  %v412 = vld [vmem:[%s1 + $0x128] sm:$0xff]
  %v413 = vld [vmem:[%s1 + $0x130] sm:$0xff]
  %v414 = vld [vmem:[%s1 + $0x138] sm:$0xff]
  %v415 = vld [vmem:[%s1 + $0x140] sm:$0xff]
  %v416 = vld [vmem:[%s1 + $0x148] sm:$0xff]
  %v417 = vld [vmem:[%s1 + $0x150] sm:$0xff]
  %v418 = vld [vmem:[%s1 + $0x158] sm:$0xff]
  %v419 = vld [vmem:[%s1 + $0x160] sm:$0xff]
  %v420 = vld [vmem:[%s1 + $0x168] sm:$0xff]
  %v421 = vld [vmem:[%s1 + $0x170] sm:$0xff]
  %v422 = vld [vmem:[%s1 + $0x178] sm:$0xff]
  %v423 = vld [vmem:[%s1 + $0x180] sm:$0xff]
  %v424 = vld [vmem:[%s1 + $0x188] sm:$0xff]
  %v425 = vld [vmem:[%s1 + $0x190] sm:$0xff]
  %v426 = vld [vmem:[%s1 + $0x198] sm:$0xff]
  %v427 = vld [vmem:[%s1 + $0x1a0] sm:$0xff]
  %v428 = vld [vmem:[%s1 + $0x1a8] sm:$0xff]
  %v429 = vld [vmem:[%s1 + $0x1b0] sm:$0xff]
  %v430 = vld [vmem:[%s1 + $0x1b8] sm:$0xff]
  %v431 = vld [vmem:[%s1 + $0x1c0] sm:$0xff]
  %v432 = vld [vmem:[%s1 + $0x1c8] sm:$0xff]
  %v433 = vld [vmem:[%s1 + $0x1d0] sm:$0xff]
  %v434 = vld [vmem:[%s1 + $0x1d8] sm:$0xff]
  %v435 = vld [vmem:[%s1 + $0x1e0] sm:$0xff]
  %v436 = vld [vmem:[%s1 + $0x1e8] sm:$0xff]
  %v437 = vld [vmem:[%s1 + $0x1f0] sm:$0xff]
  %v438 = vld [vmem:[%s1 + $0x1f8] sm:$0xff]
  %439 = vmatpush.msra.mxu0 %v435
  %440 = vmatpush.msra.mxu0 %v431
  %441 = vmatpush.msra.mxu0 %v427
  %442 = vmatpush.msra.mxu0 %v423
  %443 = vmatpush.msra.mxu0 %v419
  %444 = vmatpush.msra.mxu0 %v415
  %445 = vmatpush.msra.mxu0 %v411
  %446 = vmatpush.msra.mxu0 %v407
  %447 = vmatpush.msra.mxu0 %v403
  %448 = vmatpush.msra.mxu0 %v399
  %449 = vmatpush.msra.mxu0 %v395
  %450 = vmatpush.msra.mxu0 %v391
  %451 = vmatpush.msra.mxu0 %v387
  %452 = vmatpush.msra.mxu0 %v383
  %453 = vmatpush.msra.mxu0 %v379
  %454 = vmatpush.msra.mxu0 %v375
  %455 = vmatmul.f32.gmra.mxu0 %v365
  %v456 = vpop.f32.mrf.mxu0
  %v457 = vadd.f32 0.0, %v456
  %458 = vdwg.mxu0
  %459 = vmatpush.msra.mxu0 %v436
  %460 = vmatpush.msra.mxu0 %v432
  %461 = vmatpush.msra.mxu0 %v428
  %462 = vmatpush.msra.mxu0 %v424
  %463 = vmatpush.msra.mxu0 %v420
  %464 = vmatpush.msra.mxu0 %v416
  %465 = vmatpush.msra.mxu0 %v412
  %466 = vmatpush.msra.mxu0 %v408
  %467 = vmatpush.msra.mxu0 %v404
  %468 = vmatpush.msra.mxu0 %v400
  %469 = vmatpush.msra.mxu0 %v396
  %470 = vmatpush.msra.mxu0 %v392
  %471 = vmatpush.msra.mxu0 %v388
  %472 = vmatpush.msra.mxu0 %v384
  %473 = vmatpush.msra.mxu0 %v380
  %474 = vmatpush.msra.mxu0 %v376
  %475 = vmatmul.f32.gmra.mxu0 %v365
  %v476 = vpop.f32.mrf.mxu0
  %v477 = vadd.f32 0.0, %v476
  %478 = vdwg.mxu0
  %479 = vmatpush.msra.mxu0 %v437
  %480 = vmatpush.msra.mxu0 %v433
  %481 = vmatpush.msra.mxu0 %v429
  %482 = vmatpush.msra.mxu0 %v425
  %483 = vmatpush.msra.mxu0 %v421
  %484 = vmatpush.msra.mxu0 %v417
  %485 = vmatpush.msra.mxu0 %v413
  %486 = vmatpush.msra.mxu0 %v409
  %487 = vmatpush.msra.mxu0 %v405
  %488 = vmatpush.msra.mxu0 %v401
  %489 = vmatpush.msra.mxu0 %v397
  %490 = vmatpush.msra.mxu0 %v393
  %491 = vmatpush.msra.mxu0 %v389
  %492 = vmatpush.msra.mxu0 %v385
  %493 = vmatpush.msra.mxu0 %v381
  %494 = vmatpush.msra.mxu0 %v377
  %495 = vmatmul.f32.gmra.mxu0 %v365
  %v496 = vpop.f32.mrf.mxu0
  %v497 = vadd.f32 0.0, %v496
  %498 = vdwg.mxu0
  %499 = vmatpush.msra.mxu0 %v438
  %500 = vmatpush.msra.mxu0 %v434
  %501 = vmatpush.msra.mxu0 %v430
  %502 = vmatpush.msra.mxu0 %v426
  %503 = vmatpush.msra.mxu0 %v422
  %504 = vmatpush.msra.mxu0 %v418
  %505 = vmatpush.msra.mxu0 %v414
  %506 = vmatpush.msra.mxu0 %v410
  %507 = vmatpush.msra.mxu0 %v406
  %508 = vmatpush.msra.mxu0 %v402
  %509 = vmatpush.msra.mxu0 %v398
  %510 = vmatpush.msra.mxu0 %v394
  %511 = vmatpush.msra.mxu0 %v390
  %512 = vmatpush.msra.mxu0 %v386
  %513 = vmatpush.msra.mxu0 %v382
  %514 = vmatpush.msra.mxu0 %v378
  %515 = vmatmul.f32.gmra.mxu0 %v365
  %v516 = vpop.f32.mrf.mxu0
  %v517 = vadd.f32 0.0, %v516
  %518 = vdwg.mxu0
  %v519 = vadd.f32 %v371, %v457
  %v520 = vadd.f32 %v372, %v477
  %v521 = vadd.f32 %v373, %v497
  %v522 = vadd.f32 %v374, %v517
  %v523 = vmul.f32 %v519, 0.5
  %v524 = vmul.f32 %v520, 0.5
  %v525 = vtanh.pop %v523
  %v526 = vtanh.pop %v524
  %v527 = vmul.f32 %v525, 0.5
  %v528 = vmul.f32 %v526, 0.5
  %v529 = vadd.f32 %v527, 0.5
  %v530 = vadd.f32 %v528, 0.5
  %v531 = vtanh.pop %v521
  %v532 = vmul.f32 %v522, 0.5
  %v533 = vtanh.pop %v532
  %v534 = vmul.f32 %v533, 0.5
  %v535 = vadd.f32 %v534, 0.5
  %v536 = vmul.f32 %v530, %v363
  %v537 = vmul.f32 %v529, %v531
  %v538 = vadd.f32 %v536, %v537
  %v539 = vtanh.pop %v538
  %v540 = vmul.f32 %v535, %v539
  %s541 = scalar_lea.vmem %s2, 16
  %542 = vst [vmem:[%s541] sm:$0xff] %v540
  %s543 = smul.u32 3, 4
  %s544 = smul.addr %s543, 8
  %s545 = scalar_lea.vmem %s0, %s544
  %v546 = vld [vmem:[%s545] sm:$0xff]
  %v547 = vld [vmem:[%s545 + $0x8] sm:$0xff]
  %v548 = vld [vmem:[%s545 + $0x10] sm:$0xff]
  %v549 = vld [vmem:[%s545 + $0x18] sm:$0xff]
  %v550 = vld [vmem:[%s1] sm:$0xff]
  %v551 = vld [vmem:[%s1 + $0x8] sm:$0xff]
  %v552 = vld [vmem:[%s1 + $0x10] sm:$0xff]
  %v553 = vld [vmem:[%s1 + $0x18] sm:$0xff]
  %v554 = vld [vmem:[%s1 + $0x20] sm:$0xff]
  %v555 = vld [vmem:[%s1 + $0x28] sm:$0xff]
  %v556 = vld [vmem:[%s1 + $0x30] sm:$0xff]
  %v557 = vld [vmem:[%s1 + $0x38] sm:$0xff]
  %v558 = vld [vmem:[%s1 + $0x40] sm:$0xff]
  %v559 = vld [vmem:[%s1 + $0x48] sm:$0xff]
  %v560 = vld [vmem:[%s1 + $0x50] sm:$0xff]
  %v561 = vld [vmem:[%s1 + $0x58] sm:$0xff]
  %v562 = vld [vmem:[%s1 + $0x60] sm:$0xff]
  %v563 = vld [vmem:[%s1 + $0x68] sm:$0xff]
  %v564 = vld [vmem:[%s1 + $0x70] sm:$0xff]
  %v565 = vld [vmem:[%s1 + $0x78] sm:$0xff]
  %v566 = vld [vmem:[%s1 + $0x80] sm:$0xff]
  %v567 = vld [vmem:[%s1 + $0x88] sm:$0xff]
  %v568 = vld [vmem:[%s1 + $0x90] sm:$0xff]
  %v569 = vld [vmem:[%s1 + $0x98] sm:$0xff]
  %v570 = vld [vmem:[%s1 + $0xa0] sm:$0xff]
  %v571 = vld [vmem:[%s1 + $0xa8] sm:$0xff]
  %v572 = vld [vmem:[%s1 + $0xb0] sm:$0xff]
  %v573 = vld [vmem:[%s1 + $0xb8] sm:$0xff]
  %v574 = vld [vmem:[%s1 + $0xc0] sm:$0xff]
  %v575 = vld [vmem:[%s1 + $0xc8] sm:$0xff]
  %v576 = vld [vmem:[%s1 + $0xd0] sm:$0xff]
  %v577 = vld [vmem:[%s1 + $0xd8] sm:$0xff]
  %v578 = vld [vmem:[%s1 + $0xe0] sm:$0xff]
  %v579 = vld [vmem:[%s1 + $0xe8] sm:$0xff]
  %v580 = vld [vmem:[%s1 + $0xf0] sm:$0xff]
  %v581 = vld [vmem:[%s1 + $0xf8] sm:$0xff]
  %v582 = vld [vmem:[%s1 + $0x100] sm:$0xff]
  %v583 = vld [vmem:[%s1 + $0x108] sm:$0xff]
  %v584 = vld [vmem:[%s1 + $0x110] sm:$0xff]
  %v585 = vld [vmem:[%s1 + $0x118] sm:$0xff]
  %v586 = vld [vmem:[%s1 + $0x120] sm:$0xff]
  %v587 = vld [vmem:[%s1 + $0x128] sm:$0xff]
  %v588 = vld [vmem:[%s1 + $0x130] sm:$0xff]
  %v589 = vld [vmem:[%s1 + $0x138] sm:$0xff]
  %v590 = vld [vmem:[%s1 + $0x140] sm:$0xff]
  %v591 = vld [vmem:[%s1 + $0x148] sm:$0xff]
  %v592 = vld [vmem:[%s1 + $0x150] sm:$0xff]
  %v593 = vld [vmem:[%s1 + $0x158] sm:$0xff]
  %v594 = vld [vmem:[%s1 + $0x160] sm:$0xff]
  %v595 = vld [vmem:[%s1 + $0x168] sm:$0xff]
  %v596 = vld [vmem:[%s1 + $0x170] sm:$0xff]
  %v597 = vld [vmem:[%s1 + $0x178] sm:$0xff]
  %v598 = vld [vmem:[%s1 + $0x180] sm:$0xff]
  %v599 = vld [vmem:[%s1 + $0x188] sm:$0xff]
  %v600 = vld [vmem:[%s1 + $0x190] sm:$0xff]
  %v601 = vld [vmem:[%s1 + $0x198] sm:$0xff]
  %v602 = vld [vmem:[%s1 + $0x1a0] sm:$0xff]
  %v603 = vld [vmem:[%s1 + $0x1a8] sm:$0xff]
  %v604 = vld [vmem:[%s1 + $0x1b0] sm:$0xff]
  %v605 = vld [vmem:[%s1 + $0x1b8] sm:$0xff]
  %v606 = vld [vmem:[%s1 + $0x1c0] sm:$0xff]
  %v607 = vld [vmem:[%s1 + $0x1c8] sm:$0xff]
  %v608 = vld [vmem:[%s1 + $0x1d0] sm:$0xff]
  %v609 = vld [vmem:[%s1 + $0x1d8] sm:$0xff]
  %v610 = vld [vmem:[%s1 + $0x1e0] sm:$0xff]
  %v611 = vld [vmem:[%s1 + $0x1e8] sm:$0xff]
  %v612 = vld [vmem:[%s1 + $0x1f0] sm:$0xff]
  %v613 = vld [vmem:[%s1 + $0x1f8] sm:$0xff]
  %614 = vmatpush.msra.mxu0 %v610
  %615 = vmatpush.msra.mxu0 %v606
  %616 = vmatpush.msra.mxu0 %v602
  %617 = vmatpush.msra.mxu0 %v598
  %618 = vmatpush.msra.mxu0 %v594
  %619 = vmatpush.msra.mxu0 %v590
  %620 = vmatpush.msra.mxu0 %v586
  %621 = vmatpush.msra.mxu0 %v582
  %622 = vmatpush.msra.mxu0 %v578
  %623 = vmatpush.msra.mxu0 %v574
  %624 = vmatpush.msra.mxu0 %v570
  %625 = vmatpush.msra.mxu0 %v566
  %626 = vmatpush.msra.mxu0 %v562
  %627 = vmatpush.msra.mxu0 %v558
  %628 = vmatpush.msra.mxu0 %v554
  %629 = vmatpush.msra.mxu0 %v550
  %630 = vmatmul.f32.gmra.mxu0 %v540
  %v631 = vpop.f32.mrf.mxu0
  %v632 = vadd.f32 0.0, %v631
  %633 = vdwg.mxu0
  %634 = vmatpush.msra.mxu0 %v611
  %635 = vmatpush.msra.mxu0 %v607
  %636 = vmatpush.msra.mxu0 %v603
  %637 = vmatpush.msra.mxu0 %v599
  %638 = vmatpush.msra.mxu0 %v595
  %639 = vmatpush.msra.mxu0 %v591
  %640 = vmatpush.msra.mxu0 %v587
  %641 = vmatpush.msra.mxu0 %v583
  %642 = vmatpush.msra.mxu0 %v579
  %643 = vmatpush.msra.mxu0 %v575
  %644 = vmatpush.msra.mxu0 %v571
  %645 = vmatpush.msra.mxu0 %v567
  %646 = vmatpush.msra.mxu0 %v563
  %647 = vmatpush.msra.mxu0 %v559
  %648 = vmatpush.msra.mxu0 %v555
  %649 = vmatpush.msra.mxu0 %v551
  %650 = vmatmul.f32.gmra.mxu0 %v540
  %v651 = vpop.f32.mrf.mxu0
  %v652 = vadd.f32 0.0, %v651
  %653 = vdwg.mxu0
  %654 = vmatpush.msra.mxu0 %v612
  %655 = vmatpush.msra.mxu0 %v608
  %656 = vmatpush.msra.mxu0 %v604
  %657 = vmatpush.msra.mxu0 %v600
  %658 = vmatpush.msra.mxu0 %v596
  %659 = vmatpush.msra.mxu0 %v592
  %660 = vmatpush.msra.mxu0 %v588
  %661 = vmatpush.msra.mxu0 %v584
  %662 = vmatpush.msra.mxu0 %v580
  %663 = vmatpush.msra.mxu0 %v576
  %664 = vmatpush.msra.mxu0 %v572
  %665 = vmatpush.msra.mxu0 %v568
  %666 = vmatpush.msra.mxu0 %v564
  %667 = vmatpush.msra.mxu0 %v560
  %668 = vmatpush.msra.mxu0 %v556
  %669 = vmatpush.msra.mxu0 %v552
  %670 = vmatmul.f32.gmra.mxu0 %v540
  %v671 = vpop.f32.mrf.mxu0
  %v672 = vadd.f32 0.0, %v671
  %673 = vdwg.mxu0
  %674 = vmatpush.msra.mxu0 %v613
  %675 = vmatpush.msra.mxu0 %v609
  %676 = vmatpush.msra.mxu0 %v605
  %677 = vmatpush.msra.mxu0 %v601
  %678 = vmatpush.msra.mxu0 %v597
  %679 = vmatpush.msra.mxu0 %v593
  %680 = vmatpush.msra.mxu0 %v589
  %681 = vmatpush.msra.mxu0 %v585
  %682 = vmatpush.msra.mxu0 %v581
  %683 = vmatpush.msra.mxu0 %v577
  %684 = vmatpush.msra.mxu0 %v573
  %685 = vmatpush.msra.mxu0 %v569
  %686 = vmatpush.msra.mxu0 %v565
  %687 = vmatpush.msra.mxu0 %v561
  %688 = vmatpush.msra.mxu0 %v557
  %689 = vmatpush.msra.mxu0 %v553
  %690 = vmatmul.f32.gmra.mxu0 %v540
  %v691 = vpop.f32.mrf.mxu0
  %v692 = vadd.f32 0.0, %v691
  %693 = vdwg.mxu0
  %v694 = vadd.f32 %v546, %v632
  %v695 = vadd.f32 %v547, %v652
  %v696 = vadd.f32 %v548, %v672
  %v697 = vadd.f32 %v549, %v692
  %v698 = vmul.f32 %v694, 0.5
  %v699 = vmul.f32 %v695, 0.5
  %v700 = vtanh.pop %v698
  %v701 = vtanh.pop %v699
  %v702 = vmul.f32 %v700, 0.5
  %v703 = vmul.f32 %v701, 0.5
  %v704 = vadd.f32 %v702, 0.5
  %v705 = vadd.f32 %v703, 0.5
  %v706 = vtanh.pop %v696
  %v707 = vmul.f32 %v697, 0.5
  %v708 = vtanh.pop %v707
  %v709 = vmul.f32 %v708, 0.5
  %v710 = vadd.f32 %v709, 0.5
  %v711 = vmul.f32 %v705, %v538
  %v712 = vmul.f32 %v704, %v706
  %v713 = vadd.f32 %v711, %v712
  %v714 = vtanh.pop %v713
  %v715 = vmul.f32 %v710, %v714
  %s716 = scalar_lea.vmem %s2, 24
  %717 = vst [vmem:[%s716] sm:$0xff] %v715
  %s718 = smul.u32 4, 4
  %s719 = smul.addr %s718, 8
  %s720 = scalar_lea.vmem %s0, %s719
  %v721 = vld [vmem:[%s720] sm:$0xff]
  %v722 = vld [vmem:[%s720 + $0x8] sm:$0xff]
  %v723 = vld [vmem:[%s720 + $0x10] sm:$0xff]
  %v724 = vld [vmem:[%s720 + $0x18] sm:$0xff]
  %v725 = vld [vmem:[%s1] sm:$0xff]
  %v726 = vld [vmem:[%s1 + $0x8] sm:$0xff]
  %v727 = vld [vmem:[%s1 + $0x10] sm:$0xff]
  %v728 = vld [vmem:[%s1 + $0x18] sm:$0xff]
  %v729 = vld [vmem:[%s1 + $0x20] sm:$0xff]
  %v730 = vld [vmem:[%s1 + $0x28] sm:$0xff]
  %v731 = vld [vmem:[%s1 + $0x30] sm:$0xff]
  %v732 = vld [vmem:[%s1 + $0x38] sm:$0xff]
  %v733 = vld [vmem:[%s1 + $0x40] sm:$0xff]
  %v734 = vld [vmem:[%s1 + $0x48] sm:$0xff]
  %v735 = vld [vmem:[%s1 + $0x50] sm:$0xff]
  %v736 = vld [vmem:[%s1 + $0x58] sm:$0xff]
  %v737 = vld [vmem:[%s1 + $0x60] sm:$0xff]
  %v738 = vld [vmem:[%s1 + $0x68] sm:$0xff]
  %v739 = vld [vmem:[%s1 + $0x70] sm:$0xff]
  %v740 = vld [vmem:[%s1 + $0x78] sm:$0xff]
  %v741 = vld [vmem:[%s1 + $0x80] sm:$0xff]
  %v742 = vld [vmem:[%s1 + $0x88] sm:$0xff]
  %v743 = vld [vmem:[%s1 + $0x90] sm:$0xff]
  %v744 = vld [vmem:[%s1 + $0x98] sm:$0xff]
  %v745 = vld [vmem:[%s1 + $0xa0] sm:$0xff]
  %v746 = vld [vmem:[%s1 + $0xa8] sm:$0xff]
  %v747 = vld [vmem:[%s1 + $0xb0] sm:$0xff]
  %v748 = vld [vmem:[%s1 + $0xb8] sm:$0xff]
  %v749 = vld [vmem:[%s1 + $0xc0] sm:$0xff]
  %v750 = vld [vmem:[%s1 + $0xc8] sm:$0xff]
  %v751 = vld [vmem:[%s1 + $0xd0] sm:$0xff]
  %v752 = vld [vmem:[%s1 + $0xd8] sm:$0xff]
  %v753 = vld [vmem:[%s1 + $0xe0] sm:$0xff]
  %v754 = vld [vmem:[%s1 + $0xe8] sm:$0xff]
  %v755 = vld [vmem:[%s1 + $0xf0] sm:$0xff]
  %v756 = vld [vmem:[%s1 + $0xf8] sm:$0xff]
  %v757 = vld [vmem:[%s1 + $0x100] sm:$0xff]
  %v758 = vld [vmem:[%s1 + $0x108] sm:$0xff]
  %v759 = vld [vmem:[%s1 + $0x110] sm:$0xff]
  %v760 = vld [vmem:[%s1 + $0x118] sm:$0xff]
  %v761 = vld [vmem:[%s1 + $0x120] sm:$0xff]
  %v762 = vld [vmem:[%s1 + $0x128] sm:$0xff]
  %v763 = vld [vmem:[%s1 + $0x130] sm:$0xff]
  %v764 = vld [vmem:[%s1 + $0x138] sm:$0xff]
  %v765 = vld [vmem:[%s1 + $0x140] sm:$0xff]
  %v766 = vld [vmem:[%s1 + $0x148] sm:$0xff]
  %v767 = vld [vmem:[%s1 + $0x150] sm:$0xff]
  %v768 = vld [vmem:[%s1 + $0x158] sm:$0xff]
  %v769 = vld [vmem:[%s1 + $0x160] sm:$0xff]
  %v770 = vld [vmem:[%s1 + $0x168] sm:$0xff]
  %v771 = vld [vmem:[%s1 + $0x170] sm:$0xff]
  %v772 = vld [vmem:[%s1 + $0x178] sm:$0xff]
  %v773 = vld [vmem:[%s1 + $0x180] sm:$0xff]
  %v774 = vld [vmem:[%s1 + $0x188] sm:$0xff]
  %v775 = vld [vmem:[%s1 + $0x190] sm:$0xff]
  %v776 = vld [vmem:[%s1 + $0x198] sm:$0xff]
  %v777 = vld [vmem:[%s1 + $0x1a0] sm:$0xff]
  %v778 = vld [vmem:[%s1 + $0x1a8] sm:$0xff]
  %v779 = vld [vmem:[%s1 + $0x1b0] sm:$0xff]
  %v780 = vld [vmem:[%s1 + $0x1b8] sm:$0xff]
  %v781 = vld [vmem:[%s1 + $0x1c0] sm:$0xff]
  %v782 = vld [vmem:[%s1 + $0x1c8] sm:$0xff]
  %v783 = vld [vmem:[%s1 + $0x1d0] sm:$0xff]
  %v784 = vld [vmem:[%s1 + $0x1d8] sm:$0xff]
  %v785 = vld [vmem:[%s1 + $0x1e0] sm:$0xff]
  %v786 = vld [vmem:[%s1 + $0x1e8] sm:$0xff]
  %v787 = vld [vmem:[%s1 + $0x1f0] sm:$0xff]
  %v788 = vld [vmem:[%s1 + $0x1f8] sm:$0xff]
  %789 = vmatpush.msra.mxu0 %v785
  %790 = vmatpush.msra.mxu0 %v781
  %791 = vmatpush.msra.mxu0 %v777
  %792 = vmatpush.msra.mxu0 %v773
  %793 = vmatpush.msra.mxu0 %v769
  %794 = vmatpush.msra.mxu0 %v765
  %795 = vmatpush.msra.mxu0 %v761
  %796 = vmatpush.msra.mxu0 %v757
  %797 = vmatpush.msra.mxu0 %v753
  %798 = vmatpush.msra.mxu0 %v749
  %799 = vmatpush.msra.mxu0 %v745
  %800 = vmatpush.msra.mxu0 %v741
  %801 = vmatpush.msra.mxu0 %v737
  %802 = vmatpush.msra.mxu0 %v733
  %803 = vmatpush.msra.mxu0 %v729
  %804 = vmatpush.msra.mxu0 %v725
  %805 = vmatmul.f32.gmra.mxu0 %v715
  %v806 = vpop.f32.mrf.mxu0
  %v807 = vadd.f32 0.0, %v806
  %808 = vdwg.mxu0
  %809 = vmatpush.msra.mxu0 %v786
  %810 = vmatpush.msra.mxu0 %v782
  %811 = vmatpush.msra.mxu0 %v778
  %812 = vmatpush.msra.mxu0 %v774
  %813 = vmatpush.msra.mxu0 %v770
  %814 = vmatpush.msra.mxu0 %v766
  %815 = vmatpush.msra.mxu0 %v762
  %816 = vmatpush.msra.mxu0 %v758
  %817 = vmatpush.msra.mxu0 %v754
  %818 = vmatpush.msra.mxu0 %v750
  %819 = vmatpush.msra.mxu0 %v746
  %820 = vmatpush.msra.mxu0 %v742
  %821 = vmatpush.msra.mxu0 %v738
  %822 = vmatpush.msra.mxu0 %v734
  %823 = vmatpush.msra.mxu0 %v730
  %824 = vmatpush.msra.mxu0 %v726
  %825 = vmatmul.f32.gmra.mxu0 %v715
  %v826 = vpop.f32.mrf.mxu0
  %v827 = vadd.f32 0.0, %v826
  %828 = vdwg.mxu0
  %829 = vmatpush.msra.mxu0 %v787
  %830 = vmatpush.msra.mxu0 %v783
  %831 = vmatpush.msra.mxu0 %v779
  %832 = vmatpush.msra.mxu0 %v775
  %833 = vmatpush.msra.mxu0 %v771
  %834 = vmatpush.msra.mxu0 %v767
  %835 = vmatpush.msra.mxu0 %v763
  %836 = vmatpush.msra.mxu0 %v759
  %837 = vmatpush.msra.mxu0 %v755
  %838 = vmatpush.msra.mxu0 %v751
  %839 = vmatpush.msra.mxu0 %v747
  %840 = vmatpush.msra.mxu0 %v743
  %841 = vmatpush.msra.mxu0 %v739
  %842 = vmatpush.msra.mxu0 %v735
  %843 = vmatpush.msra.mxu0 %v731
  %844 = vmatpush.msra.mxu0 %v727
  %845 = vmatmul.f32.gmra.mxu0 %v715
  %v846 = vpop.f32.mrf.mxu0
  %v847 = vadd.f32 0.0, %v846
  %848 = vdwg.mxu0
  %849 = vmatpush.msra.mxu0 %v788
  %850 = vmatpush.msra.mxu0 %v784
  %851 = vmatpush.msra.mxu0 %v780
  %852 = vmatpush.msra.mxu0 %v776
  %853 = vmatpush.msra.mxu0 %v772
  %854 = vmatpush.msra.mxu0 %v768
  %855 = vmatpush.msra.mxu0 %v764
  %856 = vmatpush.msra.mxu0 %v760
  %857 = vmatpush.msra.mxu0 %v756
  %858 = vmatpush.msra.mxu0 %v752
  %859 = vmatpush.msra.mxu0 %v748
  %860 = vmatpush.msra.mxu0 %v744
  %861 = vmatpush.msra.mxu0 %v740
  %862 = vmatpush.msra.mxu0 %v736
  %863 = vmatpush.msra.mxu0 %v732
  %864 = vmatpush.msra.mxu0 %v728
  %865 = vmatmul.f32.gmra.mxu0 %v715
  %v866 = vpop.f32.mrf.mxu0
  %v867 = vadd.f32 0.0, %v866
  %868 = vdwg.mxu0
  %v869 = vadd.f32 %v721, %v807
  %v870 = vadd.f32 %v722, %v827
  %v871 = vadd.f32 %v723, %v847
  %v872 = vadd.f32 %v724, %v867
  %v873 = vmul.f32 %v869, 0.5
  %v874 = vmul.f32 %v870, 0.5
  %v875 = vtanh.pop %v873
  %v876 = vtanh.pop %v874
  %v877 = vmul.f32 %v875, 0.5
  %v878 = vmul.f32 %v876, 0.5
  %v879 = vadd.f32 %v877, 0.5
  %v880 = vadd.f32 %v878, 0.5
  %v881 = vtanh.pop %v871
  %v882 = vmul.f32 %v872, 0.5
  %v883 = vtanh.pop %v882
  %v884 = vmul.f32 %v883, 0.5
  %v885 = vadd.f32 %v884, 0.5
  %v886 = vmul.f32 %v880, %v713
  %v887 = vmul.f32 %v879, %v881
  %v888 = vadd.f32 %v886, %v887
  %v889 = vtanh.pop %v888
  %v890 = vmul.f32 %v885, %v889
  %s891 = scalar_lea.vmem %s2, 32
  %892 = vst [vmem:[%s891] sm:$0xff] %v890
  %s893 = smul.u32 5, 4
  %s894 = smul.addr %s893, 8
  %s895 = scalar_lea.vmem %s0, %s894
  %v896 = vld [vmem:[%s895] sm:$0xff]
  %v897 = vld [vmem:[%s895 + $0x8] sm:$0xff]
  %v898 = vld [vmem:[%s895 + $0x10] sm:$0xff]
  %v899 = vld [vmem:[%s895 + $0x18] sm:$0xff]
  %v900 = vld [vmem:[%s1] sm:$0xff]
  %v901 = vld [vmem:[%s1 + $0x8] sm:$0xff]
  %v902 = vld [vmem:[%s1 + $0x10] sm:$0xff]
  %v903 = vld [vmem:[%s1 + $0x18] sm:$0xff]
  %v904 = vld [vmem:[%s1 + $0x20] sm:$0xff]
  %v905 = vld [vmem:[%s1 + $0x28] sm:$0xff]
  %v906 = vld [vmem:[%s1 + $0x30] sm:$0xff]
  %v907 = vld [vmem:[%s1 + $0x38] sm:$0xff]
  %v908 = vld [vmem:[%s1 + $0x40] sm:$0xff]
  %v909 = vld [vmem:[%s1 + $0x48] sm:$0xff]
  %v910 = vld [vmem:[%s1 + $0x50] sm:$0xff]
  %v911 = vld [vmem:[%s1 + $0x58] sm:$0xff]
  %v912 = vld [vmem:[%s1 + $0x60] sm:$0xff]
  %v913 = vld [vmem:[%s1 + $0x68] sm:$0xff]
  %v914 = vld [vmem:[%s1 + $0x70] sm:$0xff]
  %v915 = vld [vmem:[%s1 + $0x78] sm:$0xff]
  %v916 = vld [vmem:[%s1 + $0x80] sm:$0xff]
  %v917 = vld [vmem:[%s1 + $0x88] sm:$0xff]
  %v918 = vld [vmem:[%s1 + $0x90] sm:$0xff]
  %v919 = vld [vmem:[%s1 + $0x98] sm:$0xff]
  %v920 = vld [vmem:[%s1 + $0xa0] sm:$0xff]
  %v921 = vld [vmem:[%s1 + $0xa8] sm:$0xff]
  %v922 = vld [vmem:[%s1 + $0xb0] sm:$0xff]
  %v923 = vld [vmem:[%s1 + $0xb8] sm:$0xff]
  %v924 = vld [vmem:[%s1 + $0xc0] sm:$0xff]
  %v925 = vld [vmem:[%s1 + $0xc8] sm:$0xff]
  %v926 = vld [vmem:[%s1 + $0xd0] sm:$0xff]
  %v927 = vld [vmem:[%s1 + $0xd8] sm:$0xff]
  %v928 = vld [vmem:[%s1 + $0xe0] sm:$0xff]
  %v929 = vld [vmem:[%s1 + $0xe8] sm:$0xff]
  %v930 = vld [vmem:[%s1 + $0xf0] sm:$0xff]
  %v931 = vld [vmem:[%s1 + $0xf8] sm:$0xff]
  %v932 = vld [vmem:[%s1 + $0x100] sm:$0xff]
  %v933 = vld [vmem:[%s1 + $0x108] sm:$0xff]
  %v934 = vld [vmem:[%s1 + $0x110] sm:$0xff]
  %v935 = vld [vmem:[%s1 + $0x118] sm:$0xff]
  %v936 = vld [vmem:[%s1 + $0x120] sm:$0xff]
  %v937 = vld [vmem:[%s1 + $0x128] sm:$0xff]
  %v938 = vld [vmem:[%s1 + $0x130] sm:$0xff]
  %v939 = vld [vmem:[%s1 + $0x138] sm:$0xff]
  %v940 = vld [vmem:[%s1 + $0x140] sm:$0xff]
  %v941 = vld [vmem:[%s1 + $0x148] sm:$0xff]
  %v942 = vld [vmem:[%s1 + $0x150] sm:$0xff]
  %v943 = vld [vmem:[%s1 + $0x158] sm:$0xff]
  %v944 = vld [vmem:[%s1 + $0x160] sm:$0xff]
  %v945 = vld [vmem:[%s1 + $0x168] sm:$0xff]
  %v946 = vld [vmem:[%s1 + $0x170] sm:$0xff]
  %v947 = vld [vmem:[%s1 + $0x178] sm:$0xff]
  %v948 = vld [vmem:[%s1 + $0x180] sm:$0xff]
  %v949 = vld [vmem:[%s1 + $0x188] sm:$0xff]
  %v950 = vld [vmem:[%s1 + $0x190] sm:$0xff]
  %v951 = vld [vmem:[%s1 + $0x198] sm:$0xff]
  %v952 = vld [vmem:[%s1 + $0x1a0] sm:$0xff]
  %v953 = vld [vmem:[%s1 + $0x1a8] sm:$0xff]
  %v954 = vld [vmem:[%s1 + $0x1b0] sm:$0xff]
  %v955 = vld [vmem:[%s1 + $0x1b8] sm:$0xff]
  %v956 = vld [vmem:[%s1 + $0x1c0] sm:$0xff]
  %v957 = vld [vmem:[%s1 + $0x1c8] sm:$0xff]
  %v958 = vld [vmem:[%s1 + $0x1d0] sm:$0xff]
  %v959 = vld [vmem:[%s1 + $0x1d8] sm:$0xff]
  %v960 = vld [vmem:[%s1 + $0x1e0] sm:$0xff]
  %v961 = vld [vmem:[%s1 + $0x1e8] sm:$0xff]
  %v962 = vld [vmem:[%s1 + $0x1f0] sm:$0xff]
  %v963 = vld [vmem:[%s1 + $0x1f8] sm:$0xff]
  %964 = vmatpush.msra.mxu0 %v960
  %965 = vmatpush.msra.mxu0 %v956
  %966 = vmatpush.msra.mxu0 %v952
  %967 = vmatpush.msra.mxu0 %v948
  %968 = vmatpush.msra.mxu0 %v944
  %969 = vmatpush.msra.mxu0 %v940
  %970 = vmatpush.msra.mxu0 %v936
  %971 = vmatpush.msra.mxu0 %v932
  %972 = vmatpush.msra.mxu0 %v928
  %973 = vmatpush.msra.mxu0 %v924
  %974 = vmatpush.msra.mxu0 %v920
  %975 = vmatpush.msra.mxu0 %v916
  %976 = vmatpush.msra.mxu0 %v912
  %977 = vmatpush.msra.mxu0 %v908
  %978 = vmatpush.msra.mxu0 %v904
  %979 = vmatpush.msra.mxu0 %v900
  %980 = vmatmul.f32.gmra.mxu0 %v890
  %v981 = vpop.f32.mrf.mxu0
  %v982 = vadd.f32 0.0, %v981
  %983 = vdwg.mxu0
  %984 = vmatpush.msra.mxu0 %v961
  %985 = vmatpush.msra.mxu0 %v957
  %986 = vmatpush.msra.mxu0 %v953
  %987 = vmatpush.msra.mxu0 %v949
  %988 = vmatpush.msra.mxu0 %v945
  %989 = vmatpush.msra.mxu0 %v941
  %990 = vmatpush.msra.mxu0 %v937
  %991 = vmatpush.msra.mxu0 %v933
  %992 = vmatpush.msra.mxu0 %v929
  %993 = vmatpush.msra.mxu0 %v925
  %994 = vmatpush.msra.mxu0 %v921
  %995 = vmatpush.msra.mxu0 %v917
  %996 = vmatpush.msra.mxu0 %v913
  %997 = vmatpush.msra.mxu0 %v909
  %998 = vmatpush.msra.mxu0 %v905
  %999 = vmatpush.msra.mxu0 %v901
  %1000 = vmatmul.f32.gmra.mxu0 %v890
  %v1001 = vpop.f32.mrf.mxu0
  %v1002 = vadd.f32 0.0, %v1001
  %1003 = vdwg.mxu0
  %1004 = vmatpush.msra.mxu0 %v962
  %1005 = vmatpush.msra.mxu0 %v958
  %1006 = vmatpush.msra.mxu0 %v954
  %1007 = vmatpush.msra.mxu0 %v950
  %1008 = vmatpush.msra.mxu0 %v946
  %1009 = vmatpush.msra.mxu0 %v942
  %1010 = vmatpush.msra.mxu0 %v938
  %1011 = vmatpush.msra.mxu0 %v934
  %1012 = vmatpush.msra.mxu0 %v930
  %1013 = vmatpush.msra.mxu0 %v926
  %1014 = vmatpush.msra.mxu0 %v922
  %1015 = vmatpush.msra.mxu0 %v918
  %1016 = vmatpush.msra.mxu0 %v914
  %1017 = vmatpush.msra.mxu0 %v910
  %1018 = vmatpush.msra.mxu0 %v906
  %1019 = vmatpush.msra.mxu0 %v902
  %1020 = vmatmul.f32.gmra.mxu0 %v890
  %v1021 = vpop.f32.mrf.mxu0
  %v1022 = vadd.f32 0.0, %v1021
  %1023 = vdwg.mxu0
  %1024 = vmatpush.msra.mxu0 %v963
  %1025 = vmatpush.msra.mxu0 %v959
  %1026 = vmatpush.msra.mxu0 %v955
  %1027 = vmatpush.msra.mxu0 %v951
  %1028 = vmatpush.msra.mxu0 %v947
  %1029 = vmatpush.msra.mxu0 %v943
  %1030 = vmatpush.msra.mxu0 %v939
  %1031 = vmatpush.msra.mxu0 %v935
  %1032 = vmatpush.msra.mxu0 %v931
  %1033 = vmatpush.msra.mxu0 %v927
  %1034 = vmatpush.msra.mxu0 %v923
  %1035 = vmatpush.msra.mxu0 %v919
  %1036 = vmatpush.msra.mxu0 %v915
  %1037 = vmatpush.msra.mxu0 %v911
  %1038 = vmatpush.msra.mxu0 %v907
  %1039 = vmatpush.msra.mxu0 %v903
  %1040 = vmatmul.f32.gmra.mxu0 %v890
  %v1041 = vpop.f32.mrf.mxu0
  %v1042 = vadd.f32 0.0, %v1041
  %1043 = vdwg.mxu0
  %v1044 = vadd.f32 %v896, %v982
  %v1045 = vadd.f32 %v897, %v1002
  %v1046 = vadd.f32 %v898, %v1022
  %v1047 = vadd.f32 %v899, %v1042
  %v1048 = vmul.f32 %v1044, 0.5
  %v1049 = vmul.f32 %v1045, 0.5
  %v1050 = vtanh.pop %v1048
  %v1051 = vtanh.pop %v1049
  %v1052 = vmul.f32 %v1050, 0.5
  %v1053 = vmul.f32 %v1051, 0.5
  %v1054 = vadd.f32 %v1052, 0.5
  %v1055 = vadd.f32 %v1053, 0.5
  %v1056 = vtanh.pop %v1046
  %v1057 = vmul.f32 %v1047, 0.5
  %v1058 = vtanh.pop %v1057
  %v1059 = vmul.f32 %v1058, 0.5
  %v1060 = vadd.f32 %v1059, 0.5
  %v1061 = vmul.f32 %v1055, %v888
  %v1062 = vmul.f32 %v1054, %v1056
  %v1063 = vadd.f32 %v1061, %v1062
  %v1064 = vtanh.pop %v1063
  %v1065 = vmul.f32 %v1060, %v1064
  %s1066 = scalar_lea.vmem %s2, 40
  %1067 = vst [vmem:[%s1066] sm:$0xff] %v1065
  %s1068 = smul.u32 6, 4
  %s1069 = smul.addr %s1068, 8
  %s1070 = scalar_lea.vmem %s0, %s1069
  %v1071 = vld [vmem:[%s1070] sm:$0xff]
  %v1072 = vld [vmem:[%s1070 + $0x8] sm:$0xff]
  %v1073 = vld [vmem:[%s1070 + $0x10] sm:$0xff]
  %v1074 = vld [vmem:[%s1070 + $0x18] sm:$0xff]
  %v1075 = vld [vmem:[%s1] sm:$0xff]
  %v1076 = vld [vmem:[%s1 + $0x8] sm:$0xff]
  %v1077 = vld [vmem:[%s1 + $0x10] sm:$0xff]
  %v1078 = vld [vmem:[%s1 + $0x18] sm:$0xff]
  %v1079 = vld [vmem:[%s1 + $0x20] sm:$0xff]
  %v1080 = vld [vmem:[%s1 + $0x28] sm:$0xff]
  %v1081 = vld [vmem:[%s1 + $0x30] sm:$0xff]
  %v1082 = vld [vmem:[%s1 + $0x38] sm:$0xff]
  %v1083 = vld [vmem:[%s1 + $0x40] sm:$0xff]
  %v1084 = vld [vmem:[%s1 + $0x48] sm:$0xff]
  %v1085 = vld [vmem:[%s1 + $0x50] sm:$0xff]
  %v1086 = vld [vmem:[%s1 + $0x58] sm:$0xff]
  %v1087 = vld [vmem:[%s1 + $0x60] sm:$0xff]
  %v1088 = vld [vmem:[%s1 + $0x68] sm:$0xff]
  %v1089 = vld [vmem:[%s1 + $0x70] sm:$0xff]
  %v1090 = vld [vmem:[%s1 + $0x78] sm:$0xff]
  %v1091 = vld [vmem:[%s1 + $0x80] sm:$0xff]
  %v1092 = vld [vmem:[%s1 + $0x88] sm:$0xff]
  %v1093 = vld [vmem:[%s1 + $0x90] sm:$0xff]
  %v1094 = vld [vmem:[%s1 + $0x98] sm:$0xff]
  %v1095 = vld [vmem:[%s1 + $0xa0] sm:$0xff]
  %v1096 = vld [vmem:[%s1 + $0xa8] sm:$0xff]
  %v1097 = vld [vmem:[%s1 + $0xb0] sm:$0xff]
  %v1098 = vld [vmem:[%s1 + $0xb8] sm:$0xff]
  %v1099 = vld [vmem:[%s1 + $0xc0] sm:$0xff]
  %v1100 = vld [vmem:[%s1 + $0xc8] sm:$0xff]
  %v1101 = vld [vmem:[%s1 + $0xd0] sm:$0xff]
  %v1102 = vld [vmem:[%s1 + $0xd8] sm:$0xff]
  %v1103 = vld [vmem:[%s1 + $0xe0] sm:$0xff]
  %v1104 = vld [vmem:[%s1 + $0xe8] sm:$0xff]
  %v1105 = vld [vmem:[%s1 + $0xf0] sm:$0xff]
  %v1106 = vld [vmem:[%s1 + $0xf8] sm:$0xff]
  %v1107 = vld [vmem:[%s1 + $0x100] sm:$0xff]
  %v1108 = vld [vmem:[%s1 + $0x108] sm:$0xff]
  %v1109 = vld [vmem:[%s1 + $0x110] sm:$0xff]
  %v1110 = vld [vmem:[%s1 + $0x118] sm:$0xff]
  %v1111 = vld [vmem:[%s1 + $0x120] sm:$0xff]
  %v1112 = vld [vmem:[%s1 + $0x128] sm:$0xff]
  %v1113 = vld [vmem:[%s1 + $0x130] sm:$0xff]
  %v1114 = vld [vmem:[%s1 + $0x138] sm:$0xff]
  %v1115 = vld [vmem:[%s1 + $0x140] sm:$0xff]
  %v1116 = vld [vmem:[%s1 + $0x148] sm:$0xff]
  %v1117 = vld [vmem:[%s1 + $0x150] sm:$0xff]
  %v1118 = vld [vmem:[%s1 + $0x158] sm:$0xff]
  %v1119 = vld [vmem:[%s1 + $0x160] sm:$0xff]
  %v1120 = vld [vmem:[%s1 + $0x168] sm:$0xff]
  %v1121 = vld [vmem:[%s1 + $0x170] sm:$0xff]
  %v1122 = vld [vmem:[%s1 + $0x178] sm:$0xff]
  %v1123 = vld [vmem:[%s1 + $0x180] sm:$0xff]
  %v1124 = vld [vmem:[%s1 + $0x188] sm:$0xff]
  %v1125 = vld [vmem:[%s1 + $0x190] sm:$0xff]
  %v1126 = vld [vmem:[%s1 + $0x198] sm:$0xff]
  %v1127 = vld [vmem:[%s1 + $0x1a0] sm:$0xff]
  %v1128 = vld [vmem:[%s1 + $0x1a8] sm:$0xff]
  %v1129 = vld [vmem:[%s1 + $0x1b0] sm:$0xff]
  %v1130 = vld [vmem:[%s1 + $0x1b8] sm:$0xff]
  %v1131 = vld [vmem:[%s1 + $0x1c0] sm:$0xff]
  %v1132 = vld [vmem:[%s1 + $0x1c8] sm:$0xff]
  %v1133 = vld [vmem:[%s1 + $0x1d0] sm:$0xff]
  %v1134 = vld [vmem:[%s1 + $0x1d8] sm:$0xff]
  %v1135 = vld [vmem:[%s1 + $0x1e0] sm:$0xff]
  %v1136 = vld [vmem:[%s1 + $0x1e8] sm:$0xff]
  %v1137 = vld [vmem:[%s1 + $0x1f0] sm:$0xff]
  %v1138 = vld [vmem:[%s1 + $0x1f8] sm:$0xff]
  %1139 = vmatpush.msra.mxu0 %v1135
  %1140 = vmatpush.msra.mxu0 %v1131
  %1141 = vmatpush.msra.mxu0 %v1127
  %1142 = vmatpush.msra.mxu0 %v1123
  %1143 = vmatpush.msra.mxu0 %v1119
  %1144 = vmatpush.msra.mxu0 %v1115
  %1145 = vmatpush.msra.mxu0 %v1111
  %1146 = vmatpush.msra.mxu0 %v1107
  %1147 = vmatpush.msra.mxu0 %v1103
  %1148 = vmatpush.msra.mxu0 %v1099
  %1149 = vmatpush.msra.mxu0 %v1095
  %1150 = vmatpush.msra.mxu0 %v1091
  %1151 = vmatpush.msra.mxu0 %v1087
  %1152 = vmatpush.msra.mxu0 %v1083
  %1153 = vmatpush.msra.mxu0 %v1079
  %1154 = vmatpush.msra.mxu0 %v1075
  %1155 = vmatmul.f32.gmra.mxu0 %v1065
  %v1156 = vpop.f32.mrf.mxu0
  %v1157 = vadd.f32 0.0, %v1156
  %1158 = vdwg.mxu0
  %1159 = vmatpush.msra.mxu0 %v1136
  %1160 = vmatpush.msra.mxu0 %v1132
  %1161 = vmatpush.msra.mxu0 %v1128
  %1162 = vmatpush.msra.mxu0 %v1124
  %1163 = vmatpush.msra.mxu0 %v1120
  %1164 = vmatpush.msra.mxu0 %v1116
  %1165 = vmatpush.msra.mxu0 %v1112
  %1166 = vmatpush.msra.mxu0 %v1108
  %1167 = vmatpush.msra.mxu0 %v1104
  %1168 = vmatpush.msra.mxu0 %v1100
  %1169 = vmatpush.msra.mxu0 %v1096
  %1170 = vmatpush.msra.mxu0 %v1092
  %1171 = vmatpush.msra.mxu0 %v1088
  %1172 = vmatpush.msra.mxu0 %v1084
  %1173 = vmatpush.msra.mxu0 %v1080
  %1174 = vmatpush.msra.mxu0 %v1076
  %1175 = vmatmul.f32.gmra.mxu0 %v1065
  %v1176 = vpop.f32.mrf.mxu0
  %v1177 = vadd.f32 0.0, %v1176
  %1178 = vdwg.mxu0
  %1179 = vmatpush.msra.mxu0 %v1137
  %1180 = vmatpush.msra.mxu0 %v1133
  %1181 = vmatpush.msra.mxu0 %v1129
  %1182 = vmatpush.msra.mxu0 %v1125
  %1183 = vmatpush.msra.mxu0 %v1121
  %1184 = vmatpush.msra.mxu0 %v1117
  %1185 = vmatpush.msra.mxu0 %v1113
  %1186 = vmatpush.msra.mxu0 %v1109
  %1187 = vmatpush.msra.mxu0 %v1105
  %1188 = vmatpush.msra.mxu0 %v1101
  %1189 = vmatpush.msra.mxu0 %v1097
  %1190 = vmatpush.msra.mxu0 %v1093
  %1191 = vmatpush.msra.mxu0 %v1089
  %1192 = vmatpush.msra.mxu0 %v1085
  %1193 = vmatpush.msra.mxu0 %v1081
  %1194 = vmatpush.msra.mxu0 %v1077
  %1195 = vmatmul.f32.gmra.mxu0 %v1065
  %v1196 = vpop.f32.mrf.mxu0
  %v1197 = vadd.f32 0.0, %v1196
  %1198 = vdwg.mxu0
  %1199 = vmatpush.msra.mxu0 %v1138
  %1200 = vmatpush.msra.mxu0 %v1134
  %1201 = vmatpush.msra.mxu0 %v1130
  %1202 = vmatpush.msra.mxu0 %v1126
  %1203 = vmatpush.msra.mxu0 %v1122
  %1204 = vmatpush.msra.mxu0 %v1118
  %1205 = vmatpush.msra.mxu0 %v1114
  %1206 = vmatpush.msra.mxu0 %v1110
  %1207 = vmatpush.msra.mxu0 %v1106
  %1208 = vmatpush.msra.mxu0 %v1102
  %1209 = vmatpush.msra.mxu0 %v1098
  %1210 = vmatpush.msra.mxu0 %v1094
  %1211 = vmatpush.msra.mxu0 %v1090
  %1212 = vmatpush.msra.mxu0 %v1086
  %1213 = vmatpush.msra.mxu0 %v1082
  %1214 = vmatpush.msra.mxu0 %v1078
  %1215 = vmatmul.f32.gmra.mxu0 %v1065
  %v1216 = vpop.f32.mrf.mxu0
  %v1217 = vadd.f32 0.0, %v1216
  %1218 = vdwg.mxu0
  %v1219 = vadd.f32 %v1071, %v1157
  %v1220 = vadd.f32 %v1072, %v1177
  %v1221 = vadd.f32 %v1073, %v1197
  %v1222 = vadd.f32 %v1074, %v1217
  %v1223 = vmul.f32 %v1219, 0.5
  %v1224 = vmul.f32 %v1220, 0.5
  %v1225 = vtanh.pop %v1223
  %v1226 = vtanh.pop %v1224
  %v1227 = vmul.f32 %v1225, 0.5
  %v1228 = vmul.f32 %v1226, 0.5
  %v1229 = vadd.f32 %v1227, 0.5
  %v1230 = vadd.f32 %v1228, 0.5
  %v1231 = vtanh.pop %v1221
  %v1232 = vmul.f32 %v1222, 0.5
  %v1233 = vtanh.pop %v1232
  %v1234 = vmul.f32 %v1233, 0.5
  %v1235 = vadd.f32 %v1234, 0.5
  %v1236 = vmul.f32 %v1230, %v1063
  %v1237 = vmul.f32 %v1229, %v1231
  %v1238 = vadd.f32 %v1236, %v1237
  %v1239 = vtanh.pop %v1238
  %v1240 = vmul.f32 %v1235, %v1239
  %s1241 = scalar_lea.vmem %s2, 48
  %1242 = vst [vmem:[%s1241] sm:$0xff] %v1240
  %s1243 = smul.u32 7, 4
  %s1244 = smul.addr %s1243, 8
  %s1245 = scalar_lea.vmem %s0, %s1244
  %v1246 = vld [vmem:[%s1245] sm:$0xff]
  %v1247 = vld [vmem:[%s1245 + $0x8] sm:$0xff]
  %v1248 = vld [vmem:[%s1245 + $0x10] sm:$0xff]
  %v1249 = vld [vmem:[%s1245 + $0x18] sm:$0xff]
  %v1250 = vld [vmem:[%s1] sm:$0xff]
  %v1251 = vld [vmem:[%s1 + $0x8] sm:$0xff]
  %v1252 = vld [vmem:[%s1 + $0x10] sm:$0xff]
  %v1253 = vld [vmem:[%s1 + $0x18] sm:$0xff]
  %v1254 = vld [vmem:[%s1 + $0x20] sm:$0xff]
  %v1255 = vld [vmem:[%s1 + $0x28] sm:$0xff]
  %v1256 = vld [vmem:[%s1 + $0x30] sm:$0xff]
  %v1257 = vld [vmem:[%s1 + $0x38] sm:$0xff]
  %v1258 = vld [vmem:[%s1 + $0x40] sm:$0xff]
  %v1259 = vld [vmem:[%s1 + $0x48] sm:$0xff]
  %v1260 = vld [vmem:[%s1 + $0x50] sm:$0xff]
  %v1261 = vld [vmem:[%s1 + $0x58] sm:$0xff]
  %v1262 = vld [vmem:[%s1 + $0x60] sm:$0xff]
  %v1263 = vld [vmem:[%s1 + $0x68] sm:$0xff]
  %v1264 = vld [vmem:[%s1 + $0x70] sm:$0xff]
  %v1265 = vld [vmem:[%s1 + $0x78] sm:$0xff]
  %v1266 = vld [vmem:[%s1 + $0x80] sm:$0xff]
  %v1267 = vld [vmem:[%s1 + $0x88] sm:$0xff]
  %v1268 = vld [vmem:[%s1 + $0x90] sm:$0xff]
  %v1269 = vld [vmem:[%s1 + $0x98] sm:$0xff]
  %v1270 = vld [vmem:[%s1 + $0xa0] sm:$0xff]
  %v1271 = vld [vmem:[%s1 + $0xa8] sm:$0xff]
  %v1272 = vld [vmem:[%s1 + $0xb0] sm:$0xff]
  %v1273 = vld [vmem:[%s1 + $0xb8] sm:$0xff]
  %v1274 = vld [vmem:[%s1 + $0xc0] sm:$0xff]
  %v1275 = vld [vmem:[%s1 + $0xc8] sm:$0xff]
  %v1276 = vld [vmem:[%s1 + $0xd0] sm:$0xff]
  %v1277 = vld [vmem:[%s1 + $0xd8] sm:$0xff]
  %v1278 = vld [vmem:[%s1 + $0xe0] sm:$0xff]
  %v1279 = vld [vmem:[%s1 + $0xe8] sm:$0xff]
  %v1280 = vld [vmem:[%s1 + $0xf0] sm:$0xff]
  %v1281 = vld [vmem:[%s1 + $0xf8] sm:$0xff]
  %v1282 = vld [vmem:[%s1 + $0x100] sm:$0xff]
  %v1283 = vld [vmem:[%s1 + $0x108] sm:$0xff]
  %v1284 = vld [vmem:[%s1 + $0x110] sm:$0xff]
  %v1285 = vld [vmem:[%s1 + $0x118] sm:$0xff]
  %v1286 = vld [vmem:[%s1 + $0x120] sm:$0xff]
  %v1287 = vld [vmem:[%s1 + $0x128] sm:$0xff]
  %v1288 = vld [vmem:[%s1 + $0x130] sm:$0xff]
  %v1289 = vld [vmem:[%s1 + $0x138] sm:$0xff]
  %v1290 = vld [vmem:[%s1 + $0x140] sm:$0xff]
  %v1291 = vld [vmem:[%s1 + $0x148] sm:$0xff]
  %v1292 = vld [vmem:[%s1 + $0x150] sm:$0xff]
  %v1293 = vld [vmem:[%s1 + $0x158] sm:$0xff]
  %v1294 = vld [vmem:[%s1 + $0x160] sm:$0xff]
  %v1295 = vld [vmem:[%s1 + $0x168] sm:$0xff]
  %v1296 = vld [vmem:[%s1 + $0x170] sm:$0xff]
  %v1297 = vld [vmem:[%s1 + $0x178] sm:$0xff]
  %v1298 = vld [vmem:[%s1 + $0x180] sm:$0xff]
  %v1299 = vld [vmem:[%s1 + $0x188] sm:$0xff]
  %v1300 = vld [vmem:[%s1 + $0x190] sm:$0xff]
  %v1301 = vld [vmem:[%s1 + $0x198] sm:$0xff]
  %v1302 = vld [vmem:[%s1 + $0x1a0] sm:$0xff]
  %v1303 = vld [vmem:[%s1 + $0x1a8] sm:$0xff]
  %v1304 = vld [vmem:[%s1 + $0x1b0] sm:$0xff]
  %v1305 = vld [vmem:[%s1 + $0x1b8] sm:$0xff]
  %v1306 = vld [vmem:[%s1 + $0x1c0] sm:$0xff]
  %v1307 = vld [vmem:[%s1 + $0x1c8] sm:$0xff]
  %v1308 = vld [vmem:[%s1 + $0x1d0] sm:$0xff]
  %v1309 = vld [vmem:[%s1 + $0x1d8] sm:$0xff]
  %v1310 = vld [vmem:[%s1 + $0x1e0] sm:$0xff]
  %v1311 = vld [vmem:[%s1 + $0x1e8] sm:$0xff]
  %v1312 = vld [vmem:[%s1 + $0x1f0] sm:$0xff]
  %v1313 = vld [vmem:[%s1 + $0x1f8] sm:$0xff]
  %1314 = vmatpush.msra.mxu0 %v1310
  %1315 = vmatpush.msra.mxu0 %v1306
  %1316 = vmatpush.msra.mxu0 %v1302
  %1317 = vmatpush.msra.mxu0 %v1298
  %1318 = vmatpush.msra.mxu0 %v1294
  %1319 = vmatpush.msra.mxu0 %v1290
  %1320 = vmatpush.msra.mxu0 %v1286
  %1321 = vmatpush.msra.mxu0 %v1282
  %1322 = vmatpush.msra.mxu0 %v1278
  %1323 = vmatpush.msra.mxu0 %v1274
  %1324 = vmatpush.msra.mxu0 %v1270
  %1325 = vmatpush.msra.mxu0 %v1266
  %1326 = vmatpush.msra.mxu0 %v1262
  %1327 = vmatpush.msra.mxu0 %v1258
  %1328 = vmatpush.msra.mxu0 %v1254
  %1329 = vmatpush.msra.mxu0 %v1250
  %1330 = vmatmul.f32.gmra.mxu0 %v1240
  %v1331 = vpop.f32.mrf.mxu0
  %v1332 = vadd.f32 0.0, %v1331
  %1333 = vdwg.mxu0
  %1334 = vmatpush.msra.mxu0 %v1311
  %1335 = vmatpush.msra.mxu0 %v1307
  %1336 = vmatpush.msra.mxu0 %v1303
  %1337 = vmatpush.msra.mxu0 %v1299
  %1338 = vmatpush.msra.mxu0 %v1295
  %1339 = vmatpush.msra.mxu0 %v1291
  %1340 = vmatpush.msra.mxu0 %v1287
  %1341 = vmatpush.msra.mxu0 %v1283
  %1342 = vmatpush.msra.mxu0 %v1279
  %1343 = vmatpush.msra.mxu0 %v1275
  %1344 = vmatpush.msra.mxu0 %v1271
  %1345 = vmatpush.msra.mxu0 %v1267
  %1346 = vmatpush.msra.mxu0 %v1263
  %1347 = vmatpush.msra.mxu0 %v1259
  %1348 = vmatpush.msra.mxu0 %v1255
  %1349 = vmatpush.msra.mxu0 %v1251
  %1350 = vmatmul.f32.gmra.mxu0 %v1240
  %v1351 = vpop.f32.mrf.mxu0
  %v1352 = vadd.f32 0.0, %v1351
  %1353 = vdwg.mxu0
  %1354 = vmatpush.msra.mxu0 %v1312
  %1355 = vmatpush.msra.mxu0 %v1308
  %1356 = vmatpush.msra.mxu0 %v1304
  %1357 = vmatpush.msra.mxu0 %v1300
  %1358 = vmatpush.msra.mxu0 %v1296
  %1359 = vmatpush.msra.mxu0 %v1292
  %1360 = vmatpush.msra.mxu0 %v1288
  %1361 = vmatpush.msra.mxu0 %v1284
  %1362 = vmatpush.msra.mxu0 %v1280
  %1363 = vmatpush.msra.mxu0 %v1276
  %1364 = vmatpush.msra.mxu0 %v1272
  %1365 = vmatpush.msra.mxu0 %v1268
  %1366 = vmatpush.msra.mxu0 %v1264
  %1367 = vmatpush.msra.mxu0 %v1260
  %1368 = vmatpush.msra.mxu0 %v1256
  %1369 = vmatpush.msra.mxu0 %v1252
  %1370 = vmatmul.f32.gmra.mxu0 %v1240
  %v1371 = vpop.f32.mrf.mxu0
  %v1372 = vadd.f32 0.0, %v1371
  %1373 = vdwg.mxu0
  %1374 = vmatpush.msra.mxu0 %v1313
  %1375 = vmatpush.msra.mxu0 %v1309
  %1376 = vmatpush.msra.mxu0 %v1305
  %1377 = vmatpush.msra.mxu0 %v1301
  %1378 = vmatpush.msra.mxu0 %v1297
  %1379 = vmatpush.msra.mxu0 %v1293
  %1380 = vmatpush.msra.mxu0 %v1289
  %1381 = vmatpush.msra.mxu0 %v1285
  %1382 = vmatpush.msra.mxu0 %v1281
  %1383 = vmatpush.msra.mxu0 %v1277
  %1384 = vmatpush.msra.mxu0 %v1273
  %1385 = vmatpush.msra.mxu0 %v1269
  %1386 = vmatpush.msra.mxu0 %v1265
  %1387 = vmatpush.msra.mxu0 %v1261
  %1388 = vmatpush.msra.mxu0 %v1257
  %1389 = vmatpush.msra.mxu0 %v1253
  %1390 = vmatmul.f32.gmra.mxu0 %v1240
  %v1391 = vpop.f32.mrf.mxu0
  %v1392 = vadd.f32 0.0, %v1391
  %1393 = vdwg.mxu0
  %v1394 = vadd.f32 %v1246, %v1332
  %v1395 = vadd.f32 %v1247, %v1352
  %v1396 = vadd.f32 %v1248, %v1372
  %v1397 = vadd.f32 %v1249, %v1392
  %v1398 = vmul.f32 %v1394, 0.5
  %v1399 = vmul.f32 %v1395, 0.5
  %v1400 = vtanh.pop %v1398
  %v1401 = vtanh.pop %v1399
  %v1402 = vmul.f32 %v1400, 0.5
  %v1403 = vmul.f32 %v1401, 0.5
  %v1404 = vadd.f32 %v1402, 0.5
  %v1405 = vadd.f32 %v1403, 0.5
  %v1406 = vtanh.pop %v1396
  %v1407 = vmul.f32 %v1397, 0.5
  %v1408 = vtanh.pop %v1407
  %v1409 = vmul.f32 %v1408, 0.5
  %v1410 = vadd.f32 %v1409, 0.5
  %v1411 = vmul.f32 %v1405, %v1238
  %v1412 = vmul.f32 %v1404, %v1406
  %v1413 = vadd.f32 %v1411, %v1412
  %v1414 = vtanh.pop %v1413
  %v1415 = vmul.f32 %v1410, %v1414
  %s1416 = scalar_lea.vmem %s2, 56
  %1417 = vst [vmem:[%s1416] sm:$0xff] %v1415
  %1418 = vst [vmem:[#allocation2] sm:$0xff] %v1415
  %1419 = vst [vmem:[#allocation3] sm:$0xff] %v1413
  // Predicated region
  $region14: #{pc_lstm_forward.3} parent=0 // pred_check
    _
  $region15: #{pc_lstm_forward.3} parent=0 // pred_check_branch
    %1421 = sbr.rel (0) target = $region17
  $region16: #{pc_lstm_forward.3} parent=0 // pred_region
    _
  $region17: #{pc_lstm_forward.3} parent=0 // pred_fallthru
    _
  // Predicated region
  $region18: #{pc_lstm_forward.3} parent=0 // pred_check
    _
  $region19: #{pc_lstm_forward.3} parent=0 // pred_check_branch
    %1423 = sbr.rel (0) target = $region21
  $region20: #{pc_lstm_forward.3} parent=0 // pred_region
    _
  $region21: #{pc_lstm_forward.3} parent=0 // pred_fallthru
    _

</llo_original>
